<compile_context>
chip_gen: v7x
topology: tpu7x:2x2x1
jax: 0.10.0
libtpu: 0.0.40
codegen_flags: <defaults>
</compile_context>

<pallas_src>
import math
import functools

import jax
import jax.numpy as jnp
from jax.experimental import pallas as pl
from jax.experimental.pallas import tpu as pltpu


def _layer_norm(x, w, b, eps=1e-5):
    mean = jnp.mean(x, axis=-1, keepdims=True)
    var = jnp.mean(jnp.square(x - mean), axis=-1, keepdims=True)
    return (x - mean) * jax.lax.rsqrt(var + eps) * w + b


def transformer_layer_kernel(num_heads, seq_len, need_weights,
                             x_ref, ln1w_ref, ln1b_ref,
                             wqkvT_ref, bqkv_ref,
                             woTh_ref, bo_ref,
                             ln2w_ref, ln2b_ref,
                             w1T_ref, b1_ref, w2T_ref, b2_ref,
                             *out_refs):
    out_ref = out_refs[0]
    R, E = x_ref.shape                       # R = TB * S rows of (batch, seq)
    S = seq_len
    TB = R // S
    H = num_heads
    Dh = E // H

    x2 = x_ref[...]                          # (R, E) f32, contiguous HBM block

    # ---- LayerNorm1 (f32) + fused QKV projection (bf16 MXU, f32 accumulate) ----
    xn = _layer_norm(x2, ln1w_ref[0], ln1b_ref[0]).astype(jnp.bfloat16)
    qkv = jnp.dot(xn, wqkvT_ref[...],
                  preferred_element_type=jnp.float32) + bqkv_ref[0]   # (R, 3E)

    q3 = qkv[:, 0 * E:1 * E].reshape(TB, S, E)     # scale already folded into Wq/bq
    k3 = qkv[:, 1 * E:2 * E].reshape(TB, S, E)
    v3 = qkv[:, 2 * E:3 * E].reshape(TB, S, E)

    # ---- attention: all heads in ONE batched einsum (leading-axis head stack) ----
    qs = jnp.concatenate([q3[:, :, h * Dh:(h + 1) * Dh] for h in range(H)],
                         axis=0).astype(jnp.bfloat16)                 # (H*TB, S, Dh)
    ks = jnp.concatenate([k3[:, :, h * Dh:(h + 1) * Dh] for h in range(H)],
                         axis=0).astype(jnp.bfloat16)
    vs = jnp.concatenate([v3[:, :, h * Dh:(h + 1) * Dh] for h in range(H)],
                         axis=0).astype(jnp.bfloat16)

    s = jnp.einsum('gqd,gkd->gqk', qs, ks,
                   preferred_element_type=jnp.float32)                # (H*TB, S, S)
    s = s - jnp.max(s, axis=-1, keepdims=True)
    e = jnp.exp(s)
    p = e * pl.reciprocal(jnp.sum(e, axis=-1, keepdims=True), approx=True)

    ctx = jnp.einsum('gqk,gkd->gqd', p.astype(jnp.bfloat16), vs,
                     preferred_element_type=jnp.float32)              # (H*TB, S, Dh)

    # ---- out-projection + residual:  attn_out = sum_h ctx_h @ Wo_h + bo ----
    attn_out = jnp.zeros((R, E), jnp.float32)
    for h in range(H):                        # tiny unrolled accumulation, no scratch
        ctx_h = ctx[h * TB:(h + 1) * TB].reshape(R, Dh).astype(jnp.bfloat16)
        attn_out = attn_out + jnp.dot(ctx_h, woTh_ref[h],
                                      preferred_element_type=jnp.float32)
    attn_out = attn_out + bo_ref[0]
    x1 = x2 + attn_out

    # ---- LayerNorm2 (f32) + feed-forward (bf16 MXU) + residual ----
    xn2 = _layer_norm(x1, ln2w_ref[0], ln2b_ref[0]).astype(jnp.bfloat16)
    h1 = jnp.maximum(
        jnp.dot(xn2, w1T_ref[...], preferred_element_type=jnp.float32) + b1_ref[0],
        0.0)
    ff = jnp.dot(h1.astype(jnp.bfloat16), w2T_ref[...],
                 preferred_element_type=jnp.float32) + b2_ref[0]

    out_ref[...] = x1 + ff                    # (R, E) direct 2-D store

    if need_weights:
        # head-averaged attention probabilities (nn.MultiheadAttention default)
        pw = p.reshape(H, TB, S, S)           # leading-axis split (g = h*TB + b)
        attn_w = pw[0]
        for h in range(1, H):
            attn_w = attn_w + pw[h]
        out_refs[1][...] = attn_w * (1.0 / H)


def _pick_batch_tile(batch, seq, embed, ff_dim, heads,
                     target_rows=512, act_budget_bytes=8 << 20):
    """Largest divisor of `batch` such that (a) at least 2 grid steps remain
    when batch >= 2 (v7x megacore sharding of the 'parallel' axis) and (b) the
    per-step activation footprint stays inside the VMEM budget, stopping once
    ~target_rows rows/step is reached (per-step overhead is amortized there)."""
    per_row = 4 * (8 * embed + 2 * ff_dim + 3 * heads * seq)   # rough f32 bytes/row
    max_rows = max(seq, act_budget_bytes // max(per_row, 1))
    limit = batch // 2 if batch >= 2 else batch
    best = 1
    for tb in range(1, limit + 1):
        if batch % tb:
            continue
        if tb * seq > max_rows:
            break
        best = tb
        if tb * seq >= target_rows:
            break
    return best


def simple_transformer_layer(x, params, num_heads, need_weights=True):
    B, S, E = x.shape
    F = params["w1"].shape[0]
    assert E % num_heads == 0
    Dh = E // num_heads
    scale = 1.0 / math.sqrt(Dh)

    # Host-side, one-time weight prep (free):
    #  - fuse Q/K/V into one (E, 3E) weight; fold 1/sqrt(Dh) into Wq / bq
    #  - pre-split Wo^T per head -> (H, Dh, E) so the kernel accumulates
    #    sum_h ctx_h @ Wo_h without any scratch / concatenate
    #  - all matmul weights in bf16 (MXU-native), biases / LN params in f32
    wqkvT = jnp.concatenate(
        [(params["wq"] * scale).T, params["wk"].T, params["wv"].T],
        axis=1).astype(jnp.bfloat16)                              # (E, 3E)
    bqkv = jnp.concatenate(
        [params["bq"] * scale, params["bk"], params["bv"]]
    ).reshape(1, 3 * E).astype(jnp.float32)
    woTh = params["wo"].T.reshape(num_heads, Dh, E).astype(jnp.bfloat16)
    w1T = params["w1"].T.astype(jnp.bfloat16)                    # (E, F)
    w2T = params["w2"].T.astype(jnp.bfloat16)                    # (F, E)

    def row(v):
        return v.reshape(1, -1).astype(jnp.float32)

    TB = _pick_batch_tile(B, S, E, F, num_heads)
    R = TB * S
    grid = (B // TB,)

    const_operands = (
        row(params["ln1_w"]), row(params["ln1_b"]),
        wqkvT, bqkv,
        woTh, row(params["bo"]),
        row(params["ln2_w"]), row(params["ln2_b"]),
        w1T, row(params["b1"]),
        w2T, row(params["b2"]),
    )
    const_specs = [
        pl.BlockSpec(op.shape,
                     (lambda i: (0, 0)) if op.ndim == 2 else (lambda i: (0, 0, 0)))
        for op in const_operands
    ]

    # Row-flattened I/O: each (R, E) block is one contiguous HBM range.
    x2d = x.reshape(B * S, E)

    in_specs = [pl.BlockSpec((R, E), lambda i: (i, 0))] + const_specs
    out_shapes = [jax.ShapeDtypeStruct((B * S, E), jnp.float32)]
    out_specs = [pl.BlockSpec((R, E), lambda i: (i, 0))]
    if need_weights:
        out_shapes.append(jax.ShapeDtypeStruct((B, S, S), jnp.float32))
        out_specs.append(pl.BlockSpec((TB, S, S), lambda i: (i, 0, 0)))

    # Explicit VMEM budget: resident weights (possibly double-buffered by the
    # pipeline) + double-buffered x/out blocks + generous headroom, clamped to
    # 48 MiB so there is slack on v7x's 64 MiB physical VMEM.
    const_bytes = sum(int(a.size) * a.dtype.itemsize for a in const_operands)
    io_bytes = 4 * R * E * 2 + (4 * TB * S * S if need_weights else 0)
    vmem_limit = int(min(48 << 20, max(32 << 20, 8 * (const_bytes + 2 * io_bytes))))

    grid_spec = pltpu.PrefetchScalarGridSpec(
        num_scalar_prefetch=0,
        grid=grid,
        in_specs=in_specs,
        out_specs=out_specs,
    )

    kernel = functools.partial(transformer_layer_kernel, num_heads, S, need_weights)
    outs = pl.pallas_call(
        kernel,
        out_shape=tuple(out_shapes),
        grid_spec=grid_spec,
        compiler_params=pltpu.CompilerParams(
            dimension_semantics=("parallel",),
            vmem_limit_bytes=vmem_limit,
        ),
    )(x2d, *const_operands)

    if need_weights:
        out2d, attn_w = outs
        return out2d.reshape(B, S, E), attn_w
    return outs[0].reshape(B, S, E), None


def reference_forward(x, params, num_heads):
    """Pure-JAX f32 reference mirroring nn.MultiheadAttention + the module forward."""
    B, S, E = x.shape
    Dh = E // num_heads
    scale = 1.0 / math.sqrt(Dh)

    def ln(v, w, b):
        m = jnp.mean(v, -1, keepdims=True)
        var = jnp.mean((v - m) ** 2, -1, keepdims=True)
        return (v - m) / jnp.sqrt(var + 1e-5) * w + b

    xn = ln(x, params["ln1_w"], params["ln1_b"])
    q = xn @ params["wq"].T + params["bq"]
    k = xn @ params["wk"].T + params["bk"]
    v = xn @ params["wv"].T + params["bv"]
    qh = q.reshape(B, S, num_heads, Dh).transpose(0, 2, 1, 3)
    kh = k.reshape(B, S, num_heads, Dh).transpose(0, 2, 1, 3)
    vh = v.reshape(B, S, num_heads, Dh).transpose(0, 2, 1, 3)
    s = jnp.einsum("bhqd,bhkd->bhqk", qh * scale, kh)
    p = jax.nn.softmax(s, axis=-1)
    ctx = jnp.einsum("bhqk,bhkd->bhqd", p, vh).transpose(0, 2, 1, 3).reshape(B, S, E)
    attn_out = ctx @ params["wo"].T + params["bo"]
    x1 = x + attn_out
    xn2 = ln(x1, params["ln2_w"], params["ln2_b"])
    ff = jnp.maximum(xn2 @ params["w1"].T + params["b1"], 0.0) @ params["w2"].T + params["b2"]
    return x1 + ff, jnp.mean(p, axis=1)


if __name__ == "__main__":
    B, S, E, H, F = 8, 8, 32, 4, 64

    key = jax.random.PRNGKey(0)
    keys = jax.random.split(key, 13)
    sd = 1.0 / math.sqrt(E)
    params = {
        "ln1_w": jnp.ones((E,), jnp.float32),
        "ln1_b": jnp.zeros((E,), jnp.float32),
        "wq": jax.random.normal(keys[0], (E, E), jnp.float32) * sd,
        "wk": jax.random.normal(keys[1], (E, E), jnp.float32) * sd,
        "wv": jax.random.normal(keys[2], (E, E), jnp.float32) * sd,
        "bq": jax.random.normal(keys[3], (E,), jnp.float32) * 0.01,
        "bk": jax.random.normal(keys[4], (E,), jnp.float32) * 0.01,
        "bv": jax.random.normal(keys[5], (E,), jnp.float32) * 0.01,
        "wo": jax.random.normal(keys[6], (E, E), jnp.float32) * sd,
        "bo": jax.random.normal(keys[7], (E,), jnp.float32) * 0.01,
        "ln2_w": jnp.ones((E,), jnp.float32),
        "ln2_b": jnp.zeros((E,), jnp.float32),
        "w1": jax.random.normal(keys[8], (F, E), jnp.float32) * sd,
        "b1": jax.random.normal(keys[9], (F,), jnp.float32) * 0.01,
        "w2": jax.random.normal(keys[10], (E, F), jnp.float32) * (1.0 / math.sqrt(F)),
        "b2": jax.random.normal(keys[11], (E,), jnp.float32) * 0.01,
    }
    x = jax.random.normal(keys[12], (B, S, E), jnp.float32)

    out, attn_w = simple_transformer_layer(x, params, H, need_weights=True)
    out = jax.block_until_ready(out)
    attn_w = jax.block_until_ready(attn_w)

    ref_out, ref_attn = reference_forward(x, params, H)
    assert out.shape == (B, S, E) and attn_w.shape == (B, S, S)
    # bf16 MXU operands + approx-reciprocal softmax -> relaxed (but still
    # structure-validating) tolerances vs. the f32 reference.
    assert jnp.allclose(out, ref_out, atol=2e-1, rtol=1e-1), "output mismatch"
    assert jnp.allclose(attn_w, ref_attn, atol=5e-2, rtol=5e-2), "attn weights mismatch"

    # optional-attention-weights path (review item: skip the (B,S,S) output)
    out_nw, none_w = simple_transformer_layer(x, params, H, need_weights=False)
    out_nw = jax.block_until_ready(out_nw)
    assert none_w is None
    assert jnp.allclose(out_nw, ref_out, atol=2e-1, rtol=1e-1), "no-weights output mismatch"

    print("KERNEL_OK")
</pallas_src>

<mosaic_0001>
module attributes {stable_mosaic.version = 11 : i64} {
  func.func @transformer_layer_kernel(%arg0: i32, %arg1: memref<32x32xf32, #tpu.memory_space<vmem>>, %arg2: memref<1x32xf32, #tpu.memory_space<vmem>>, %arg3: memref<1x32xf32, #tpu.memory_space<vmem>>, %arg4: memref<32x96xbf16, #tpu.memory_space<vmem>>, %arg5: memref<1x96xf32, #tpu.memory_space<vmem>>, %arg6: memref<4x8x32xbf16, #tpu.memory_space<vmem>>, %arg7: memref<1x32xf32, #tpu.memory_space<vmem>>, %arg8: memref<1x32xf32, #tpu.memory_space<vmem>>, %arg9: memref<1x32xf32, #tpu.memory_space<vmem>>, %arg10: memref<32x64xbf16, #tpu.memory_space<vmem>>, %arg11: memref<1x64xf32, #tpu.memory_space<vmem>>, %arg12: memref<64x32xbf16, #tpu.memory_space<vmem>>, %arg13: memref<1x32xf32, #tpu.memory_space<vmem>>, %arg14: memref<32x32xf32, #tpu.memory_space<vmem>>, %arg15: memref<4x8x8xf32, #tpu.memory_space<vmem>>) attributes {dimension_semantics = [#tpu.dimension_semantics<parallel>], iteration_bounds = array<i64: 2>, scalar_prefetch = 0 : i64, scratch_operands = 0 : i64, tpu.core_type = #tpu.core_type<tc>, window_params = [{transform_indices = @transform_0, window_bounds = array<i64: 32, 32>}, {pipeline_mode = #tpu.pipeline_mode<synchronous>, transform_indices = @transform_1, window_bounds = array<i64: 1, 32>}, {pipeline_mode = #tpu.pipeline_mode<synchronous>, transform_indices = @transform_2, window_bounds = array<i64: 1, 32>}, {pipeline_mode = #tpu.pipeline_mode<synchronous>, transform_indices = @transform_3, window_bounds = array<i64: 32, 96>}, {pipeline_mode = #tpu.pipeline_mode<synchronous>, transform_indices = @transform_4, window_bounds = array<i64: 1, 96>}, {pipeline_mode = #tpu.pipeline_mode<synchronous>, transform_indices = @transform_5, window_bounds = array<i64: 4, 8, 32>}, {pipeline_mode = #tpu.pipeline_mode<synchronous>, transform_indices = @transform_6, window_bounds = array<i64: 1, 32>}, {pipeline_mode = #tpu.pipeline_mode<synchronous>, transform_indices = @transform_7, window_bounds = array<i64: 1, 32>}, {pipeline_mode = #tpu.pipeline_mode<synchronous>, transform_indices = @transform_8, window_bounds = array<i64: 1, 32>}, {pipeline_mode = #tpu.pipeline_mode<synchronous>, transform_indices = @transform_9, window_bounds = array<i64: 32, 64>}, {pipeline_mode = #tpu.pipeline_mode<synchronous>, transform_indices = @transform_10, window_bounds = array<i64: 1, 64>}, {pipeline_mode = #tpu.pipeline_mode<synchronous>, transform_indices = @transform_11, window_bounds = array<i64: 64, 32>}, {pipeline_mode = #tpu.pipeline_mode<synchronous>, transform_indices = @transform_12, window_bounds = array<i64: 1, 32>}, {transform_indices = @transform_13, window_bounds = array<i64: 32, 32>}, {transform_indices = @transform_14, window_bounds = array<i64: 4, 8, 8>}]} {
    %c0 = arith.constant 0 : index
    %c0_0 = arith.constant 0 : index
    %0 = vector.load %arg1[%c0, %c0_0] : memref<32x32xf32, #tpu.memory_space<vmem>>, vector<32x32xf32>
    %c0_1 = arith.constant 0 : index
    %c0_2 = arith.constant 0 : index
    %1 = vector.load %arg2[%c0_1, %c0_2] : memref<1x32xf32, #tpu.memory_space<vmem>>, vector<1x32xf32>
    %2 = vector.shape_cast %1 : vector<1x32xf32> to vector<32xf32>
    %c0_3 = arith.constant 0 : index
    %c0_4 = arith.constant 0 : index
    %3 = vector.load %arg3[%c0_3, %c0_4] : memref<1x32xf32, #tpu.memory_space<vmem>>, vector<1x32xf32>
    %4 = vector.shape_cast %3 : vector<1x32xf32> to vector<32xf32>
    %cst = arith.constant dense<0.000000e+00> : vector<32xf32>
    %5 = vector.multi_reduction <add>, %0, %cst [1] : vector<32x32xf32> to vector<32xf32>
    %6 = vector.shape_cast %5 : vector<32xf32> to vector<32x1xf32>
    %cst_5 = arith.constant 3.200000e+01 : f32
    %7 = vector.broadcast %cst_5 : f32 to vector<32x1xf32>
    %8 = arith.divf %6, %7 : vector<32x1xf32>
    %9 = vector.broadcast %8 : vector<32x1xf32> to vector<32x32xf32>
    %10 = arith.subf %0, %9 : vector<32x32xf32>
    %11 = arith.mulf %10, %10 : vector<32x32xf32>
    %cst_6 = arith.constant dense<0.000000e+00> : vector<32xf32>
    %12 = vector.multi_reduction <add>, %11, %cst_6 [1] : vector<32x32xf32> to vector<32xf32>
    %13 = vector.shape_cast %12 : vector<32xf32> to vector<32x1xf32>
    %cst_7 = arith.constant 3.200000e+01 : f32
    %14 = vector.broadcast %cst_7 : f32 to vector<32x1xf32>
    %15 = arith.divf %13, %14 : vector<32x1xf32>
    %16 = vector.broadcast %8 : vector<32x1xf32> to vector<32x32xf32>
    %17 = arith.subf %0, %16 : vector<32x32xf32>
    %cst_8 = arith.constant 9.99999974E-6 : f32
    %18 = vector.broadcast %cst_8 : f32 to vector<32x1xf32>
    %19 = arith.addf %15, %18 : vector<32x1xf32>
    %20 = math.rsqrt %19 : vector<32x1xf32>
    %21 = vector.broadcast %20 : vector<32x1xf32> to vector<32x32xf32>
    %22 = arith.mulf %17, %21 : vector<32x32xf32>
    %23 = vector.shape_cast %2 : vector<32xf32> to vector<1x32xf32>
    %24 = vector.broadcast %23 : vector<1x32xf32> to vector<32x32xf32>
    %25 = arith.mulf %22, %24 : vector<32x32xf32>
    %26 = vector.shape_cast %4 : vector<32xf32> to vector<1x32xf32>
    %27 = vector.broadcast %26 : vector<1x32xf32> to vector<32x32xf32>
    %28 = arith.addf %25, %27 : vector<32x32xf32>
    %29 = arith.truncf %28 : vector<32x32xf32> to vector<32x32xbf16>
    %c0_9 = arith.constant 0 : index
    %c0_10 = arith.constant 0 : index
    %30 = vector.load %arg4[%c0_9, %c0_10] : memref<32x96xbf16, #tpu.memory_space<vmem>>, vector<32x96xbf16>
    %cst_11 = arith.constant dense<0.000000e+00> : vector<32x96xf32>
    %31 = tpu.matmul %29, %30, %cst_11 {dimension_numbers = #tpu.dot_dimension_numbers<[1], [0], [0], [1], [0, 0, 1, 1], [], []>} : vector<32x32xbf16>, vector<32x96xbf16>, vector<32x96xf32> -> vector<32x96xf32>
    %c0_12 = arith.constant 0 : index
    %c0_13 = arith.constant 0 : index
    %32 = vector.load %arg5[%c0_12, %c0_13] : memref<1x96xf32, #tpu.memory_space<vmem>>, vector<1x96xf32>
    %33 = vector.shape_cast %32 : vector<1x96xf32> to vector<96xf32>
    %34 = vector.shape_cast %33 : vector<96xf32> to vector<1x96xf32>
    %35 = vector.broadcast %34 : vector<1x96xf32> to vector<32x96xf32>
    %36 = arith.addf %31, %35 : vector<32x96xf32>
    %37 = vector.extract_strided_slice %36 {offsets = [0, 0], sizes = [32, 32], strides = [1, 1]} : vector<32x96xf32> to vector<32x32xf32>
    %38 = vector.shape_cast %37 : vector<32x32xf32> to vector<4x8x32xf32>
    %39 = vector.extract_strided_slice %36 {offsets = [0, 32], sizes = [32, 32], strides = [1, 1]} : vector<32x96xf32> to vector<32x32xf32>
    %40 = vector.shape_cast %39 : vector<32x32xf32> to vector<4x8x32xf32>
    %41 = vector.extract_strided_slice %36 {offsets = [0, 64], sizes = [32, 32], strides = [1, 1]} : vector<32x96xf32> to vector<32x32xf32>
    %42 = vector.shape_cast %41 : vector<32x32xf32> to vector<4x8x32xf32>
    %43 = vector.extract_strided_slice %38 {offsets = [0, 0, 0], sizes = [4, 8, 8], strides = [1, 1, 1]} : vector<4x8x32xf32> to vector<4x8x8xf32>
    %44 = vector.extract_strided_slice %38 {offsets = [0, 0, 8], sizes = [4, 8, 8], strides = [1, 1, 1]} : vector<4x8x32xf32> to vector<4x8x8xf32>
    %45 = vector.extract_strided_slice %38 {offsets = [0, 0, 16], sizes = [4, 8, 8], strides = [1, 1, 1]} : vector<4x8x32xf32> to vector<4x8x8xf32>
    %46 = vector.extract_strided_slice %38 {offsets = [0, 0, 24], sizes = [4, 8, 8], strides = [1, 1, 1]} : vector<4x8x32xf32> to vector<4x8x8xf32>
    %47 = tpu.concatenate %43, %44, %45, %46 in 0 : vector<4x8x8xf32>, vector<4x8x8xf32>, vector<4x8x8xf32>, vector<4x8x8xf32> -> vector<16x8x8xf32>
    %48 = arith.truncf %47 : vector<16x8x8xf32> to vector<16x8x8xbf16>
    %49 = vector.extract_strided_slice %40 {offsets = [0, 0, 0], sizes = [4, 8, 8], strides = [1, 1, 1]} : vector<4x8x32xf32> to vector<4x8x8xf32>
    %50 = vector.extract_strided_slice %40 {offsets = [0, 0, 8], sizes = [4, 8, 8], strides = [1, 1, 1]} : vector<4x8x32xf32> to vector<4x8x8xf32>
    %51 = vector.extract_strided_slice %40 {offsets = [0, 0, 16], sizes = [4, 8, 8], strides = [1, 1, 1]} : vector<4x8x32xf32> to vector<4x8x8xf32>
    %52 = vector.extract_strided_slice %40 {offsets = [0, 0, 24], sizes = [4, 8, 8], strides = [1, 1, 1]} : vector<4x8x32xf32> to vector<4x8x8xf32>
    %53 = tpu.concatenate %49, %50, %51, %52 in 0 : vector<4x8x8xf32>, vector<4x8x8xf32>, vector<4x8x8xf32>, vector<4x8x8xf32> -> vector<16x8x8xf32>
    %54 = arith.truncf %53 : vector<16x8x8xf32> to vector<16x8x8xbf16>
    %55 = vector.extract_strided_slice %42 {offsets = [0, 0, 0], sizes = [4, 8, 8], strides = [1, 1, 1]} : vector<4x8x32xf32> to vector<4x8x8xf32>
    %56 = vector.extract_strided_slice %42 {offsets = [0, 0, 8], sizes = [4, 8, 8], strides = [1, 1, 1]} : vector<4x8x32xf32> to vector<4x8x8xf32>
    %57 = vector.extract_strided_slice %42 {offsets = [0, 0, 16], sizes = [4, 8, 8], strides = [1, 1, 1]} : vector<4x8x32xf32> to vector<4x8x8xf32>
    %58 = vector.extract_strided_slice %42 {offsets = [0, 0, 24], sizes = [4, 8, 8], strides = [1, 1, 1]} : vector<4x8x32xf32> to vector<4x8x8xf32>
    %59 = tpu.concatenate %55, %56, %57, %58 in 0 : vector<4x8x8xf32>, vector<4x8x8xf32>, vector<4x8x8xf32>, vector<4x8x8xf32> -> vector<16x8x8xf32>
    %60 = arith.truncf %59 : vector<16x8x8xf32> to vector<16x8x8xbf16>
    "tpu.trace_start"() <{level = 10 : i32, message = "gqd,gkd->gqk"}> : () -> ()
    %cst_14 = arith.constant dense<0.000000e+00> : vector<16x8x8xf32>
    %61 = tpu.matmul %48, %54, %cst_14 {dimension_numbers = #tpu.dot_dimension_numbers<[2], [2], [1], [1], [0, 0, 0, 1, 1, 1], [0], [0]>} : vector<16x8x8xbf16>, vector<16x8x8xbf16>, vector<16x8x8xf32> -> vector<16x8x8xf32>
    "tpu.trace_stop"() : () -> ()
    %cst_15 = arith.constant dense<0xFF800000> : vector<16x8xf32>
    %62 = vector.multi_reduction <maximumf>, %61, %cst_15 [2] : vector<16x8x8xf32> to vector<16x8xf32>
    %63 = vector.shape_cast %62 : vector<16x8xf32> to vector<16x8x1xf32>
    %64 = vector.broadcast %63 : vector<16x8x1xf32> to vector<16x8x8xf32>
    %65 = arith.subf %61, %64 : vector<16x8x8xf32>
    %66 = math.exp %65 : vector<16x8x8xf32>
    %cst_16 = arith.constant dense<0.000000e+00> : vector<16x8xf32>
    %67 = vector.multi_reduction <add>, %66, %cst_16 [2] : vector<16x8x8xf32> to vector<16x8xf32>
    %68 = vector.shape_cast %67 : vector<16x8xf32> to vector<16x8x1xf32>
    %69 = tpu.reciprocal %68 {approx = true} : vector<16x8x1xf32> -> vector<16x8x1xf32>
    %70 = vector.broadcast %69 : vector<16x8x1xf32> to vector<16x8x8xf32>
    %71 = arith.mulf %66, %70 : vector<16x8x8xf32>
    %72 = arith.truncf %71 : vector<16x8x8xf32> to vector<16x8x8xbf16>
    "tpu.trace_start"() <{level = 10 : i32, message = "gqk,gkd->gqd"}> : () -> ()
    %cst_17 = arith.constant dense<0.000000e+00> : vector<16x8x8xf32>
    %73 = tpu.matmul %72, %60, %cst_17 {dimension_numbers = #tpu.dot_dimension_numbers<[2], [1], [1], [2], [0, 0, 0, 1, 1, 2], [0], [0]>} : vector<16x8x8xbf16>, vector<16x8x8xbf16>, vector<16x8x8xf32> -> vector<16x8x8xf32>
    %cst_18 = arith.constant 0.000000e+00 : f32
    "tpu.trace_stop"() : () -> ()
    %74 = vector.broadcast %cst_18 : f32 to vector<32x32xf32>
    %75 = vector.extract_strided_slice %73 {offsets = [0, 0, 0], sizes = [4, 8, 8], strides = [1, 1, 1]} : vector<16x8x8xf32> to vector<4x8x8xf32>
    %76 = vector.shape_cast %75 : vector<4x8x8xf32> to vector<32x8xf32>
    %77 = arith.truncf %76 : vector<32x8xf32> to vector<32x8xbf16>
    %c0_19 = arith.constant 0 : index
    %c0_20 = arith.constant 0 : index
    %c0_21 = arith.constant 0 : index
    %78 = vector.load %arg6[%c0_19, %c0_20, %c0_21] : memref<4x8x32xbf16, #tpu.memory_space<vmem>>, vector<1x8x32xbf16>
    %79 = vector.shape_cast %78 : vector<1x8x32xbf16> to vector<8x32xbf16>
    %cst_22 = arith.constant dense<0.000000e+00> : vector<32x32xf32>
    %80 = tpu.matmul %77, %79, %cst_22 {dimension_numbers = #tpu.dot_dimension_numbers<[1], [0], [0], [1], [0, 0, 1, 1], [], []>} : vector<32x8xbf16>, vector<8x32xbf16>, vector<32x32xf32> -> vector<32x32xf32>
    %81 = arith.addf %74, %80 : vector<32x32xf32>
    %82 = vector.extract_strided_slice %73 {offsets = [4, 0, 0], sizes = [4, 8, 8], strides = [1, 1, 1]} : vector<16x8x8xf32> to vector<4x8x8xf32>
    %83 = vector.shape_cast %82 : vector<4x8x8xf32> to vector<32x8xf32>
    %84 = arith.truncf %83 : vector<32x8xf32> to vector<32x8xbf16>
    %c1 = arith.constant 1 : index
    %c0_23 = arith.constant 0 : index
    %c0_24 = arith.constant 0 : index
    %85 = vector.load %arg6[%c1, %c0_23, %c0_24] : memref<4x8x32xbf16, #tpu.memory_space<vmem>>, vector<1x8x32xbf16>
    %86 = vector.shape_cast %85 : vector<1x8x32xbf16> to vector<8x32xbf16>
    %cst_25 = arith.constant dense<0.000000e+00> : vector<32x32xf32>
    %87 = tpu.matmul %84, %86, %cst_25 {dimension_numbers = #tpu.dot_dimension_numbers<[1], [0], [0], [1], [0, 0, 1, 1], [], []>} : vector<32x8xbf16>, vector<8x32xbf16>, vector<32x32xf32> -> vector<32x32xf32>
    %88 = arith.addf %81, %87 : vector<32x32xf32>
    %89 = vector.extract_strided_slice %73 {offsets = [8, 0, 0], sizes = [4, 8, 8], strides = [1, 1, 1]} : vector<16x8x8xf32> to vector<4x8x8xf32>
    %90 = vector.shape_cast %89 : vector<4x8x8xf32> to vector<32x8xf32>
    %91 = arith.truncf %90 : vector<32x8xf32> to vector<32x8xbf16>
    %c2 = arith.constant 2 : index
    %c0_26 = arith.constant 0 : index
    %c0_27 = arith.constant 0 : index
    %92 = vector.load %arg6[%c2, %c0_26, %c0_27] : memref<4x8x32xbf16, #tpu.memory_space<vmem>>, vector<1x8x32xbf16>
    %93 = vector.shape_cast %92 : vector<1x8x32xbf16> to vector<8x32xbf16>
    %cst_28 = arith.constant dense<0.000000e+00> : vector<32x32xf32>
    %94 = tpu.matmul %91, %93, %cst_28 {dimension_numbers = #tpu.dot_dimension_numbers<[1], [0], [0], [1], [0, 0, 1, 1], [], []>} : vector<32x8xbf16>, vector<8x32xbf16>, vector<32x32xf32> -> vector<32x32xf32>
    %95 = arith.addf %88, %94 : vector<32x32xf32>
    %96 = vector.extract_strided_slice %73 {offsets = [12, 0, 0], sizes = [4, 8, 8], strides = [1, 1, 1]} : vector<16x8x8xf32> to vector<4x8x8xf32>
    %97 = vector.shape_cast %96 : vector<4x8x8xf32> to vector<32x8xf32>
    %98 = arith.truncf %97 : vector<32x8xf32> to vector<32x8xbf16>
    %c3 = arith.constant 3 : index
    %c0_29 = arith.constant 0 : index
    %c0_30 = arith.constant 0 : index
    %99 = vector.load %arg6[%c3, %c0_29, %c0_30] : memref<4x8x32xbf16, #tpu.memory_space<vmem>>, vector<1x8x32xbf16>
    %100 = vector.shape_cast %99 : vector<1x8x32xbf16> to vector<8x32xbf16>
    %cst_31 = arith.constant dense<0.000000e+00> : vector<32x32xf32>
    %101 = tpu.matmul %98, %100, %cst_31 {dimension_numbers = #tpu.dot_dimension_numbers<[1], [0], [0], [1], [0, 0, 1, 1], [], []>} : vector<32x8xbf16>, vector<8x32xbf16>, vector<32x32xf32> -> vector<32x32xf32>
    %102 = arith.addf %95, %101 : vector<32x32xf32>
    %c0_32 = arith.constant 0 : index
    %c0_33 = arith.constant 0 : index
    %103 = vector.load %arg7[%c0_32, %c0_33] : memref<1x32xf32, #tpu.memory_space<vmem>>, vector<1x32xf32>
    %104 = vector.shape_cast %103 : vector<1x32xf32> to vector<32xf32>
    %105 = vector.shape_cast %104 : vector<32xf32> to vector<1x32xf32>
    %106 = vector.broadcast %105 : vector<1x32xf32> to vector<32x32xf32>
    %107 = arith.addf %102, %106 : vector<32x32xf32>
    %108 = arith.addf %0, %107 : vector<32x32xf32>
    %c0_34 = arith.constant 0 : index
    %c0_35 = arith.constant 0 : index
    %109 = vector.load %arg8[%c0_34, %c0_35] : memref<1x32xf32, #tpu.memory_space<vmem>>, vector<1x32xf32>
    %110 = vector.shape_cast %109 : vector<1x32xf32> to vector<32xf32>
    %c0_36 = arith.constant 0 : index
    %c0_37 = arith.constant 0 : index
    %111 = vector.load %arg9[%c0_36, %c0_37] : memref<1x32xf32, #tpu.memory_space<vmem>>, vector<1x32xf32>
    %112 = vector.shape_cast %111 : vector<1x32xf32> to vector<32xf32>
    %cst_38 = arith.constant dense<0.000000e+00> : vector<32xf32>
    %113 = vector.multi_reduction <add>, %108, %cst_38 [1] : vector<32x32xf32> to vector<32xf32>
    %114 = vector.shape_cast %113 : vector<32xf32> to vector<32x1xf32>
    %cst_39 = arith.constant 3.200000e+01 : f32
    %115 = vector.broadcast %cst_39 : f32 to vector<32x1xf32>
    %116 = arith.divf %114, %115 : vector<32x1xf32>
    %117 = vector.broadcast %116 : vector<32x1xf32> to vector<32x32xf32>
    %118 = arith.subf %108, %117 : vector<32x32xf32>
    %119 = arith.mulf %118, %118 : vector<32x32xf32>
    %cst_40 = arith.constant dense<0.000000e+00> : vector<32xf32>
    %120 = vector.multi_reduction <add>, %119, %cst_40 [1] : vector<32x32xf32> to vector<32xf32>
    %121 = vector.shape_cast %120 : vector<32xf32> to vector<32x1xf32>
    %cst_41 = arith.constant 3.200000e+01 : f32
    %122 = vector.broadcast %cst_41 : f32 to vector<32x1xf32>
    %123 = arith.divf %121, %122 : vector<32x1xf32>
    %124 = vector.broadcast %116 : vector<32x1xf32> to vector<32x32xf32>
    %125 = arith.subf %108, %124 : vector<32x32xf32>
    %cst_42 = arith.constant 9.99999974E-6 : f32
    %126 = vector.broadcast %cst_42 : f32 to vector<32x1xf32>
    %127 = arith.addf %123, %126 : vector<32x1xf32>
    %128 = math.rsqrt %127 : vector<32x1xf32>
    %129 = vector.broadcast %128 : vector<32x1xf32> to vector<32x32xf32>
    %130 = arith.mulf %125, %129 : vector<32x32xf32>
    %131 = vector.shape_cast %110 : vector<32xf32> to vector<1x32xf32>
    %132 = vector.broadcast %131 : vector<1x32xf32> to vector<32x32xf32>
    %133 = arith.mulf %130, %132 : vector<32x32xf32>
    %134 = vector.shape_cast %112 : vector<32xf32> to vector<1x32xf32>
    %135 = vector.broadcast %134 : vector<1x32xf32> to vector<32x32xf32>
    %136 = arith.addf %133, %135 : vector<32x32xf32>
    %137 = arith.truncf %136 : vector<32x32xf32> to vector<32x32xbf16>
    %c0_43 = arith.constant 0 : index
    %c0_44 = arith.constant 0 : index
    %138 = vector.load %arg10[%c0_43, %c0_44] : memref<32x64xbf16, #tpu.memory_space<vmem>>, vector<32x64xbf16>
    %cst_45 = arith.constant dense<0.000000e+00> : vector<32x64xf32>
    %139 = tpu.matmul %137, %138, %cst_45 {dimension_numbers = #tpu.dot_dimension_numbers<[1], [0], [0], [1], [0, 0, 1, 1], [], []>} : vector<32x32xbf16>, vector<32x64xbf16>, vector<32x64xf32> -> vector<32x64xf32>
    %c0_46 = arith.constant 0 : index
    %c0_47 = arith.constant 0 : index
    %140 = vector.load %arg11[%c0_46, %c0_47] : memref<1x64xf32, #tpu.memory_space<vmem>>, vector<1x64xf32>
    %141 = vector.shape_cast %140 : vector<1x64xf32> to vector<64xf32>
    %142 = vector.shape_cast %141 : vector<64xf32> to vector<1x64xf32>
    %143 = vector.broadcast %142 : vector<1x64xf32> to vector<32x64xf32>
    %144 = arith.addf %139, %143 : vector<32x64xf32>
    %cst_48 = arith.constant 0.000000e+00 : f32
    %145 = vector.broadcast %cst_48 : f32 to vector<32x64xf32>
    %146 = arith.maximumf %144, %145 : vector<32x64xf32>
    %147 = arith.truncf %146 : vector<32x64xf32> to vector<32x64xbf16>
    %c0_49 = arith.constant 0 : index
    %c0_50 = arith.constant 0 : index
    %148 = vector.load %arg12[%c0_49, %c0_50] : memref<64x32xbf16, #tpu.memory_space<vmem>>, vector<64x32xbf16>
    %cst_51 = arith.constant dense<0.000000e+00> : vector<32x32xf32>
    %149 = tpu.matmul %147, %148, %cst_51 {dimension_numbers = #tpu.dot_dimension_numbers<[1], [0], [0], [1], [0, 0, 1, 1], [], []>} : vector<32x64xbf16>, vector<64x32xbf16>, vector<32x32xf32> -> vector<32x32xf32>
    %c0_52 = arith.constant 0 : index
    %c0_53 = arith.constant 0 : index
    %150 = vector.load %arg13[%c0_52, %c0_53] : memref<1x32xf32, #tpu.memory_space<vmem>>, vector<1x32xf32>
    %151 = vector.shape_cast %150 : vector<1x32xf32> to vector<32xf32>
    %152 = vector.shape_cast %151 : vector<32xf32> to vector<1x32xf32>
    %153 = vector.broadcast %152 : vector<1x32xf32> to vector<32x32xf32>
    %154 = arith.addf %149, %153 : vector<32x32xf32>
    %155 = arith.addf %108, %154 : vector<32x32xf32>
    %c0_54 = arith.constant 0 : index
    %c0_55 = arith.constant 0 : index
    %156 = vector.load %arg14[%c0_54, %c0_55] : memref<32x32xf32, #tpu.memory_space<vmem>>, vector<32x32xf32>
    tpu.vector_store %arg14[%c0_54, %c0_55], %155 {strides = array<i32>} : memref<32x32xf32, #tpu.memory_space<vmem>>, vector<32x32xf32>,
    %157 = vector.shape_cast %71 : vector<16x8x8xf32> to vector<4x4x8x8xf32>
    %158 = vector.extract_strided_slice %157 {offsets = [0, 0, 0, 0], sizes = [1, 4, 8, 8], strides = [1, 1, 1, 1]} : vector<4x4x8x8xf32> to vector<1x4x8x8xf32>
    %159 = vector.shape_cast %158 : vector<1x4x8x8xf32> to vector<4x8x8xf32>
    %160 = vector.extract_strided_slice %157 {offsets = [1, 0, 0, 0], sizes = [1, 4, 8, 8], strides = [1, 1, 1, 1]} : vector<4x4x8x8xf32> to vector<1x4x8x8xf32>
    %161 = vector.shape_cast %160 : vector<1x4x8x8xf32> to vector<4x8x8xf32>
    %162 = arith.addf %159, %161 : vector<4x8x8xf32>
    %163 = vector.extract_strided_slice %157 {offsets = [2, 0, 0, 0], sizes = [1, 4, 8, 8], strides = [1, 1, 1, 1]} : vector<4x4x8x8xf32> to vector<1x4x8x8xf32>
    %164 = vector.shape_cast %163 : vector<1x4x8x8xf32> to vector<4x8x8xf32>
    %165 = arith.addf %162, %164 : vector<4x8x8xf32>
    %166 = vector.extract_strided_slice %157 {offsets = [3, 0, 0, 0], sizes = [1, 4, 8, 8], strides = [1, 1, 1, 1]} : vector<4x4x8x8xf32> to vector<1x4x8x8xf32>
    %167 = vector.shape_cast %166 : vector<1x4x8x8xf32> to vector<4x8x8xf32>
    %168 = arith.addf %165, %167 : vector<4x8x8xf32>
    %cst_56 = arith.constant 2.500000e-01 : f32
    %169 = vector.broadcast %cst_56 : f32 to vector<4x8x8xf32>
    %170 = arith.mulf %168, %169 : vector<4x8x8xf32>
    %c0_57 = arith.constant 0 : index
    %c0_58 = arith.constant 0 : index
    %c0_59 = arith.constant 0 : index
    %171 = vector.load %arg15[%c0_57, %c0_58, %c0_59] : memref<4x8x8xf32, #tpu.memory_space<vmem>>, vector<4x8x8xf32>
    tpu.vector_store %arg15[%c0_57, %c0_58, %c0_59], %170 {strides = array<i32>} : memref<4x8x8xf32, #tpu.memory_space<vmem>>, vector<4x8x8xf32>,
    return
  }
  func.func @transform_0(%arg0: i32) -> (i32, i32) {
    %c0_i32 = arith.constant 0 : i32
    %c0_i32_0 = arith.constant 0 : i32
    return %arg0, %c0_i32 : i32, i32
  }
  func.func @transform_1(%arg0: i32) -> (i32, i32) {
    %c0_i32 = arith.constant 0 : i32
    %c0_i32_0 = arith.constant 0 : i32
    %c0_i32_1 = arith.constant 0 : i32
    return %c0_i32, %c0_i32_0 : i32, i32
  }
  func.func @transform_2(%arg0: i32) -> (i32, i32) {
    %c0_i32 = arith.constant 0 : i32
    %c0_i32_0 = arith.constant 0 : i32
    %c0_i32_1 = arith.constant 0 : i32
    return %c0_i32, %c0_i32_0 : i32, i32
  }
  func.func @transform_3(%arg0: i32) -> (i32, i32) {
    %c0_i32 = arith.constant 0 : i32
    %c0_i32_0 = arith.constant 0 : i32
    %c0_i32_1 = arith.constant 0 : i32
    return %c0_i32, %c0_i32_0 : i32, i32
  }
  func.func @transform_4(%arg0: i32) -> (i32, i32) {
    %c0_i32 = arith.constant 0 : i32
    %c0_i32_0 = arith.constant 0 : i32
    %c0_i32_1 = arith.constant 0 : i32
    return %c0_i32, %c0_i32_0 : i32, i32
  }
  func.func @transform_5(%arg0: i32) -> (i32, i32, i32) {
    %c0_i32 = arith.constant 0 : i32
    %c0_i32_0 = arith.constant 0 : i32
    %c0_i32_1 = arith.constant 0 : i32
    %c0_i32_2 = arith.constant 0 : i32
    return %c0_i32, %c0_i32_0, %c0_i32_1 : i32, i32, i32
  }
  func.func @transform_6(%arg0: i32) -> (i32, i32) {
    %c0_i32 = arith.constant 0 : i32
    %c0_i32_0 = arith.constant 0 : i32
    %c0_i32_1 = arith.constant 0 : i32
    return %c0_i32, %c0_i32_0 : i32, i32
  }
  func.func @transform_7(%arg0: i32) -> (i32, i32) {
    %c0_i32 = arith.constant 0 : i32
    %c0_i32_0 = arith.constant 0 : i32
    %c0_i32_1 = arith.constant 0 : i32
    return %c0_i32, %c0_i32_0 : i32, i32
  }
  func.func @transform_8(%arg0: i32) -> (i32, i32) {
    %c0_i32 = arith.constant 0 : i32
    %c0_i32_0 = arith.constant 0 : i32
    %c0_i32_1 = arith.constant 0 : i32
    return %c0_i32, %c0_i32_0 : i32, i32
  }
  func.func @transform_9(%arg0: i32) -> (i32, i32) {
    %c0_i32 = arith.constant 0 : i32
    %c0_i32_0 = arith.constant 0 : i32
    %c0_i32_1 = arith.constant 0 : i32
    return %c0_i32, %c0_i32_0 : i32, i32
  }
  func.func @transform_10(%arg0: i32) -> (i32, i32) {
    %c0_i32 = arith.constant 0 : i32
    %c0_i32_0 = arith.constant 0 : i32
    %c0_i32_1 = arith.constant 0 : i32
    return %c0_i32, %c0_i32_0 : i32, i32
  }
  func.func @transform_11(%arg0: i32) -> (i32, i32) {
    %c0_i32 = arith.constant 0 : i32
    %c0_i32_0 = arith.constant 0 : i32
    %c0_i32_1 = arith.constant 0 : i32
    return %c0_i32, %c0_i32_0 : i32, i32
  }
  func.func @transform_12(%arg0: i32) -> (i32, i32) {
    %c0_i32 = arith.constant 0 : i32
    %c0_i32_0 = arith.constant 0 : i32
    %c0_i32_1 = arith.constant 0 : i32
    return %c0_i32, %c0_i32_0 : i32, i32
  }
  func.func @transform_13(%arg0: i32) -> (i32, i32) {
    %c0_i32 = arith.constant 0 : i32
    %c0_i32_0 = arith.constant 0 : i32
    return %arg0, %c0_i32 : i32, i32
  }
  func.func @transform_14(%arg0: i32) -> (i32, i32, i32) {
    %c0_i32 = arith.constant 0 : i32
    %c0_i32_0 = arith.constant 0 : i32
    %c0_i32_1 = arith.constant 0 : i32
    return %arg0, %c0_i32, %c0_i32_0 : i32, i32, i32
  }
}

</mosaic_0001>

<llo_original>
// kernel: tpu_custom_call.1
$region0: #{tpu_custom_call.1}
  #allocation0 [shape = 'u32[]', space=smem, size = 0x4, offset = 0x4, fixed_abs, tag = 'smem constant byte address 0x4 - core index']
  #allocation1 [shape = 'u32[144,128]{1,0:T(1,128)}', space=vmem, size = 0x12000, scoped, tag = 'internal scratch']
  %s0 = inlined_call_operand.vmem [shape: f32[64,32], index: 0, kind: input, shape index: {}]
  %s1 = inlined_call_operand.vmem [shape: f32[1,32], index: 1, kind: input, shape index: {}]
  %s2 = inlined_call_operand.vmem [shape: f32[1,32], index: 2, kind: input, shape index: {}]
  %s3 = inlined_call_operand.vmem [shape: bf16[32,96], index: 3, kind: input, shape index: {}]
  %s4 = inlined_call_operand.vmem [shape: f32[1,96], index: 4, kind: input, shape index: {}]
  %s5 = inlined_call_operand.vmem [shape: bf16[4,8,32], index: 5, kind: input, shape index: {}]
  %s6 = inlined_call_operand.vmem [shape: f32[1,32], index: 6, kind: input, shape index: {}]
  %s7 = inlined_call_operand.vmem [shape: f32[1,32], index: 7, kind: input, shape index: {}]
  %s8 = inlined_call_operand.vmem [shape: f32[1,32], index: 8, kind: input, shape index: {}]
  %s9 = inlined_call_operand.vmem [shape: bf16[32,64], index: 9, kind: input, shape index: {}]
  %s10 = inlined_call_operand.vmem [shape: f32[1,64], index: 10, kind: input, shape index: {}]
  %s11 = inlined_call_operand.vmem [shape: bf16[64,32], index: 11, kind: input, shape index: {}]
  %s12 = inlined_call_operand.vmem [shape: f32[1,32], index: 12, kind: input, shape index: {}]
  %s13 = inlined_call_operand.vmem [shape: f32[64,32], index: 13, kind: output, shape index: {0}]
  %s14 = inlined_call_operand.hbm [shape: f32[8,8,8], index: 14, kind: output, shape index: {1}]
  %15 = xla_tuple %s13, %s14
  %s16 = sld [smem:[#allocation0]]
  $region93: #{tpu_custom_call.1} parent=0
    _
  %s18 = ssub.s32 1, %s16
  %s19 = scalar_select 0, %s18, %s16
  $region1: #{tpu_custom_call.1} parent=0
    #allocation2 [shape = 'u8[32768]{0}', space=vmem, size = 0x8000, scoped, tag = 'output window, operand 1']
    #allocation3 [shape = 's32[2]{0}', space=sflag, size = 0x8, scoped, tag = 'scoped memory for tpu_custom_call.1']
    %20 = vsyncpa [#allocation3], 0
    %s21 = scalar_lea.sflag [#allocation3], 1
    %22 = vsyncpa %s21, 0
    loop: start=0, step=1, limit=4
    $region2: #{tpu_custom_call.1} parent=1 // loop_pre_header
      _
    $region3: #{tpu_custom_call.1} parent=1 // loop_header
      %s24 = sphi 0, %s28
      %p25 = scmp.ge.s32.totalorder %s24, 4
      %s34 = sphi 0, %s36
      %s37 = sphi 0, %s34
      %s38 = sphi 0, %s37
      %s54 = sphi 0, %s38
      %s58 = sphi 0, %s58
      %s60 = sphi 0, %s58
      %s61 = sphi 0, %s60
      %s75 = sphi 0, %s61
      %s79 = sphi 0, %s79
      %s81 = sphi 0, %s79
      %s82 = sphi 0, %s81
      %s96 = sphi 0, %s82
      %s100 = sphi 0, %s100
      %s102 = sphi 0, %s100
      %s103 = sphi 0, %s102
      %s117 = sphi 0, %s103
      %s121 = sphi 0, %s121
      %s123 = sphi 0, %s121
      %s124 = sphi 0, %s123
      %s138 = sphi 0, %s124
      %s142 = sphi 0, %s142
      %s144 = sphi 0, %s142
      %s145 = sphi 0, %s144
      %s159 = sphi 0, %s145
      %s163 = sphi 0, %s163
      %s165 = sphi 0, %s163
      %s166 = sphi 0, %s165
      %s180 = sphi 0, %s166
      %s184 = sphi 0, %s184
      %s186 = sphi 0, %s184
      %s187 = sphi 0, %s186
      %s201 = sphi 0, %s187
      %s205 = sphi 0, %s205
      %s207 = sphi 0, %s205
      %s208 = sphi 0, %s207
      %s222 = sphi 0, %s208
      %s226 = sphi 0, %s226
      %s228 = sphi 0, %s226
      %s229 = sphi 0, %s228
      %s243 = sphi 0, %s229
      %s247 = sphi 0, %s247
      %s249 = sphi 0, %s247
      %s250 = sphi 0, %s249
      %s264 = sphi 0, %s250
      %s268 = sphi 0, %s268
      %s270 = sphi 0, %s268
      %s271 = sphi 0, %s270
      %s285 = sphi 0, %s271
      %s289 = sphi 0, %s289
      %s291 = sphi 0, %s289
      %s292 = sphi 0, %s291
      %s306 = sphi 0, %s292
      %s312 = sphi 0, %s314
      %s315 = sphi 0, %s312
      %s316 = sphi 0, %s315
      %s332 = sphi 0, %s316
      %s338 = sphi 0, %s340
      %s341 = sphi 0, %s338
      %s342 = sphi 0, %s341
      %s358 = sphi 0, %s342
    $region4: #{tpu_custom_call.1} parent=1 // loop_header_branch
      %27 = sbr.rel (%p25) target = $region8
    $region5: #{tpu_custom_call.1} parent=1 // loop_body
      %s29 = ssub.s32 %s24, 1
      %s30 = ssub.s32 %s24, 2
      %s31 = sadd.s32 %s24, 1
      %s32 = ssub.s32 %s24, %s31
      %p33 = scmp.eq.s32.totalorder %s32, 0
      %s35 = sadd.s32 %s34, 1
      %s36 = scalar_select %p33, %s34, %s35
      %p39 = pneg %p33
      %p40 = scmp.eq.s32.totalorder %s24, 1
      %p41 = por %p39, %p40
      %p42 = scmp.ne.s32.totalorder %s34, %s37
      %p43 = scmp.eq.s32.totalorder %s24, 0
      %p44 = por %p42, %p43
      %p45 = scmp.ne.s32.totalorder %s34, %s37
      %p46 = scmp.eq.s32.totalorder %s29, 1
      %p47 = por %p45, %p46
      %p48 = scmp.ne.s32.totalorder %s37, %s38
      %p49 = scmp.eq.s32.totalorder %s29, 0
      %p50 = por %p48, %p49
      %p51 = scmp.ne.s32.totalorder %s37, %s38
      %p52 = scmp.eq.s32.totalorder %s30, 1
      %p53 = por %p51, %p52
      %p55 = scmp.ne.s32.totalorder %s38, %s54
      %p56 = scmp.eq.s32.totalorder %s30, 0
      %p57 = por %p55, %p56
      %s59 = sadd.s32 %s58, 1
      %p62 = scmp.eq.s32.totalorder %s24, 1
      %p63 = scmp.ne.s32.totalorder %s58, %s60
      %p64 = scmp.eq.s32.totalorder %s24, 0
      %p65 = por %p63, %p64
      %p66 = scmp.ne.s32.totalorder %s58, %s60
      %p67 = scmp.eq.s32.totalorder %s29, 1
      %p68 = por %p66, %p67
      %p69 = scmp.ne.s32.totalorder %s60, %s61
      %p70 = scmp.eq.s32.totalorder %s29, 0
      %p71 = por %p69, %p70
      %p72 = scmp.ne.s32.totalorder %s60, %s61
      %p73 = scmp.eq.s32.totalorder %s30, 1
      %p74 = por %p72, %p73
      %p76 = scmp.ne.s32.totalorder %s61, %s75
      %p77 = scmp.eq.s32.totalorder %s30, 0
      %p78 = por %p76, %p77
      %s80 = sadd.s32 %s79, 1
      %p83 = scmp.eq.s32.totalorder %s24, 1
      %p84 = scmp.ne.s32.totalorder %s79, %s81
      %p85 = scmp.eq.s32.totalorder %s24, 0
      %p86 = por %p84, %p85
      %p87 = scmp.ne.s32.totalorder %s79, %s81
      %p88 = scmp.eq.s32.totalorder %s29, 1
      %p89 = por %p87, %p88
      %p90 = scmp.ne.s32.totalorder %s81, %s82
      %p91 = scmp.eq.s32.totalorder %s29, 0
      %p92 = por %p90, %p91
      %p93 = scmp.ne.s32.totalorder %s81, %s82
      %p94 = scmp.eq.s32.totalorder %s30, 1
      %p95 = por %p93, %p94
      %p97 = scmp.ne.s32.totalorder %s82, %s96
      %p98 = scmp.eq.s32.totalorder %s30, 0
      %p99 = por %p97, %p98
      %s101 = sadd.s32 %s100, 1
      %p104 = scmp.eq.s32.totalorder %s24, 1
      %p105 = scmp.ne.s32.totalorder %s100, %s102
      %p106 = scmp.eq.s32.totalorder %s24, 0
      %p107 = por %p105, %p106
      %p108 = scmp.ne.s32.totalorder %s100, %s102
      %p109 = scmp.eq.s32.totalorder %s29, 1
      %p110 = por %p108, %p109
      %p111 = scmp.ne.s32.totalorder %s102, %s103
      %p112 = scmp.eq.s32.totalorder %s29, 0
      %p113 = por %p111, %p112
      %p114 = scmp.ne.s32.totalorder %s102, %s103
      %p115 = scmp.eq.s32.totalorder %s30, 1
      %p116 = por %p114, %p115
      %p118 = scmp.ne.s32.totalorder %s103, %s117
      %p119 = scmp.eq.s32.totalorder %s30, 0
      %p120 = por %p118, %p119
      %s122 = sadd.s32 %s121, 1
      %p125 = scmp.eq.s32.totalorder %s24, 1
      %p126 = scmp.ne.s32.totalorder %s121, %s123
      %p127 = scmp.eq.s32.totalorder %s24, 0
      %p128 = por %p126, %p127
      %p129 = scmp.ne.s32.totalorder %s121, %s123
      %p130 = scmp.eq.s32.totalorder %s29, 1
      %p131 = por %p129, %p130
      %p132 = scmp.ne.s32.totalorder %s123, %s124
      %p133 = scmp.eq.s32.totalorder %s29, 0
      %p134 = por %p132, %p133
      %p135 = scmp.ne.s32.totalorder %s123, %s124
      %p136 = scmp.eq.s32.totalorder %s30, 1
      %p137 = por %p135, %p136
      %p139 = scmp.ne.s32.totalorder %s124, %s138
      %p140 = scmp.eq.s32.totalorder %s30, 0
      %p141 = por %p139, %p140
      %s143 = sadd.s32 %s142, 1
      %p146 = scmp.eq.s32.totalorder %s24, 1
      %p147 = scmp.ne.s32.totalorder %s142, %s144
      %p148 = scmp.eq.s32.totalorder %s24, 0
      %p149 = por %p147, %p148
      %p150 = scmp.ne.s32.totalorder %s142, %s144
      %p151 = scmp.eq.s32.totalorder %s29, 1
      %p152 = por %p150, %p151
      %p153 = scmp.ne.s32.totalorder %s144, %s145
      %p154 = scmp.eq.s32.totalorder %s29, 0
      %p155 = por %p153, %p154
      %p156 = scmp.ne.s32.totalorder %s144, %s145
      %p157 = scmp.eq.s32.totalorder %s30, 1
      %p158 = por %p156, %p157
      %p160 = scmp.ne.s32.totalorder %s145, %s159
      %p161 = scmp.eq.s32.totalorder %s30, 0
      %p162 = por %p160, %p161
      %s164 = sadd.s32 %s163, 1
      %p167 = scmp.eq.s32.totalorder %s24, 1
      %p168 = scmp.ne.s32.totalorder %s163, %s165
      %p169 = scmp.eq.s32.totalorder %s24, 0
      %p170 = por %p168, %p169
      %p171 = scmp.ne.s32.totalorder %s163, %s165
      %p172 = scmp.eq.s32.totalorder %s29, 1
      %p173 = por %p171, %p172
      %p174 = scmp.ne.s32.totalorder %s165, %s166
      %p175 = scmp.eq.s32.totalorder %s29, 0
      %p176 = por %p174, %p175
      %p177 = scmp.ne.s32.totalorder %s165, %s166
      %p178 = scmp.eq.s32.totalorder %s30, 1
      %p179 = por %p177, %p178
      %p181 = scmp.ne.s32.totalorder %s166, %s180
      %p182 = scmp.eq.s32.totalorder %s30, 0
      %p183 = por %p181, %p182
      %s185 = sadd.s32 %s184, 1
      %p188 = scmp.eq.s32.totalorder %s24, 1
      %p189 = scmp.ne.s32.totalorder %s184, %s186
      %p190 = scmp.eq.s32.totalorder %s24, 0
      %p191 = por %p189, %p190
      %p192 = scmp.ne.s32.totalorder %s184, %s186
      %p193 = scmp.eq.s32.totalorder %s29, 1
      %p194 = por %p192, %p193
      %p195 = scmp.ne.s32.totalorder %s186, %s187
      %p196 = scmp.eq.s32.totalorder %s29, 0
      %p197 = por %p195, %p196
      %p198 = scmp.ne.s32.totalorder %s186, %s187
      %p199 = scmp.eq.s32.totalorder %s30, 1
      %p200 = por %p198, %p199
      %p202 = scmp.ne.s32.totalorder %s187, %s201
      %p203 = scmp.eq.s32.totalorder %s30, 0
      %p204 = por %p202, %p203
      %s206 = sadd.s32 %s205, 1
      %p209 = scmp.eq.s32.totalorder %s24, 1
      %p210 = scmp.ne.s32.totalorder %s205, %s207
      %p211 = scmp.eq.s32.totalorder %s24, 0
      %p212 = por %p210, %p211
      %p213 = scmp.ne.s32.totalorder %s205, %s207
      %p214 = scmp.eq.s32.totalorder %s29, 1
      %p215 = por %p213, %p214
      %p216 = scmp.ne.s32.totalorder %s207, %s208
      %p217 = scmp.eq.s32.totalorder %s29, 0
      %p218 = por %p216, %p217
      %p219 = scmp.ne.s32.totalorder %s207, %s208
      %p220 = scmp.eq.s32.totalorder %s30, 1
      %p221 = por %p219, %p220
      %p223 = scmp.ne.s32.totalorder %s208, %s222
      %p224 = scmp.eq.s32.totalorder %s30, 0
      %p225 = por %p223, %p224
      %s227 = sadd.s32 %s226, 1
      %p230 = scmp.eq.s32.totalorder %s24, 1
      %p231 = scmp.ne.s32.totalorder %s226, %s228
      %p232 = scmp.eq.s32.totalorder %s24, 0
      %p233 = por %p231, %p232
      %p234 = scmp.ne.s32.totalorder %s226, %s228
      %p235 = scmp.eq.s32.totalorder %s29, 1
      %p236 = por %p234, %p235
      %p237 = scmp.ne.s32.totalorder %s228, %s229
      %p238 = scmp.eq.s32.totalorder %s29, 0
      %p239 = por %p237, %p238
      %p240 = scmp.ne.s32.totalorder %s228, %s229
      %p241 = scmp.eq.s32.totalorder %s30, 1
      %p242 = por %p240, %p241
      %p244 = scmp.ne.s32.totalorder %s229, %s243
      %p245 = scmp.eq.s32.totalorder %s30, 0
      %p246 = por %p244, %p245
      %s248 = sadd.s32 %s247, 1
      %p251 = scmp.eq.s32.totalorder %s24, 1
      %p252 = scmp.ne.s32.totalorder %s247, %s249
      %p253 = scmp.eq.s32.totalorder %s24, 0
      %p254 = por %p252, %p253
      %p255 = scmp.ne.s32.totalorder %s247, %s249
      %p256 = scmp.eq.s32.totalorder %s29, 1
      %p257 = por %p255, %p256
      %p258 = scmp.ne.s32.totalorder %s249, %s250
      %p259 = scmp.eq.s32.totalorder %s29, 0
      %p260 = por %p258, %p259
      %p261 = scmp.ne.s32.totalorder %s249, %s250
      %p262 = scmp.eq.s32.totalorder %s30, 1
      %p263 = por %p261, %p262
      %p265 = scmp.ne.s32.totalorder %s250, %s264
      %p266 = scmp.eq.s32.totalorder %s30, 0
      %p267 = por %p265, %p266
      %s269 = sadd.s32 %s268, 1
      %p272 = scmp.eq.s32.totalorder %s24, 1
      %p273 = scmp.ne.s32.totalorder %s268, %s270
      %p274 = scmp.eq.s32.totalorder %s24, 0
      %p275 = por %p273, %p274
      %p276 = scmp.ne.s32.totalorder %s268, %s270
      %p277 = scmp.eq.s32.totalorder %s29, 1
      %p278 = por %p276, %p277
      %p279 = scmp.ne.s32.totalorder %s270, %s271
      %p280 = scmp.eq.s32.totalorder %s29, 0
      %p281 = por %p279, %p280
      %p282 = scmp.ne.s32.totalorder %s270, %s271
      %p283 = scmp.eq.s32.totalorder %s30, 1
      %p284 = por %p282, %p283
      %p286 = scmp.ne.s32.totalorder %s271, %s285
      %p287 = scmp.eq.s32.totalorder %s30, 0
      %p288 = por %p286, %p287
      %s290 = sadd.s32 %s289, 1
      %p293 = scmp.eq.s32.totalorder %s24, 1
      %p294 = scmp.ne.s32.totalorder %s289, %s291
      %p295 = scmp.eq.s32.totalorder %s24, 0
      %p296 = por %p294, %p295
      %p297 = scmp.ne.s32.totalorder %s289, %s291
      %p298 = scmp.eq.s32.totalorder %s29, 1
      %p299 = por %p297, %p298
      %p300 = scmp.ne.s32.totalorder %s291, %s292
      %p301 = scmp.eq.s32.totalorder %s29, 0
      %p302 = por %p300, %p301
      %p303 = scmp.ne.s32.totalorder %s291, %s292
      %p304 = scmp.eq.s32.totalorder %s30, 1
      %p305 = por %p303, %p304
      %p307 = scmp.ne.s32.totalorder %s292, %s306
      %p308 = scmp.eq.s32.totalorder %s30, 0
      %p309 = por %p307, %p308
      %s310 = ssub.s32 %s24, %s31
      %p311 = scmp.eq.s32.totalorder %s310, 0
      %s313 = sadd.s32 %s312, 1
      %s314 = scalar_select %p311, %s312, %s313
      %p317 = pneg %p311
      %p318 = scmp.eq.s32.totalorder %s24, 1
      %p319 = por %p317, %p318
      %p320 = scmp.ne.s32.totalorder %s312, %s315
      %p321 = scmp.eq.s32.totalorder %s24, 0
      %p322 = por %p320, %p321
      %p323 = scmp.ne.s32.totalorder %s312, %s315
      %p324 = scmp.eq.s32.totalorder %s29, 1
      %p325 = por %p323, %p324
      %p326 = scmp.ne.s32.totalorder %s315, %s316
      %p327 = scmp.eq.s32.totalorder %s29, 0
      %p328 = por %p326, %p327
      %p329 = scmp.ne.s32.totalorder %s315, %s316
      %p330 = scmp.eq.s32.totalorder %s30, 1
      %p331 = por %p329, %p330
      %p333 = scmp.ne.s32.totalorder %s316, %s332
      %p334 = scmp.eq.s32.totalorder %s30, 0
      %p335 = por %p333, %p334
      %s336 = ssub.s32 %s24, %s31
      %p337 = scmp.eq.s32.totalorder %s336, 0
      %s339 = sadd.s32 %s338, 1
      %s340 = scalar_select %p337, %s338, %s339
      %p343 = pneg %p337
      %p344 = scmp.eq.s32.totalorder %s24, 1
      %p345 = por %p343, %p344
      %p346 = scmp.ne.s32.totalorder %s338, %s341
      %p347 = scmp.eq.s32.totalorder %s24, 0
      %p348 = por %p346, %p347
      %p349 = scmp.ne.s32.totalorder %s338, %s341
      %p350 = scmp.eq.s32.totalorder %s29, 1
      %p351 = por %p349, %p350
      %p352 = scmp.ne.s32.totalorder %s341, %s342
      %p353 = scmp.eq.s32.totalorder %s29, 0
      %p354 = por %p352, %p353
      %p355 = scmp.ne.s32.totalorder %s341, %s342
      %p356 = scmp.eq.s32.totalorder %s30, 1
      %p357 = por %p355, %p356
      %p359 = scmp.ne.s32.totalorder %s342, %s358
      %p360 = scmp.eq.s32.totalorder %s30, 0
      %p361 = por %p359, %p360
      %p362 = scmp.le.s32.totalorder 1, %s24
      %p363 = scmp.lt.s32.totalorder %s24, 3
      %p364 = pnand %p362, %p363
      %p365 = pneg %p364
      // Predicated region
      $region9: #{tpu_custom_call.1} parent=5 // pred_check
        _
      $region10: #{tpu_custom_call.1} parent=5 // pred_check_branch
        %367 = sbr.rel (%p364) target = $region12
      $region11: #{tpu_custom_call.1} parent=5 // pred_region
        %s368 = ssub.s32 %s24, 1
        // Predicated region
        $region13: #{tpu_custom_call.1} parent=11 // pred_check
          %p369 = pneg %p71
        $region14: #{tpu_custom_call.1} parent=11 // pred_check_branch
          %371 = sbr.rel (%p369) target = $region16
        $region15: #{tpu_custom_call.1} parent=11 // pred_region
          _
        $region16: #{tpu_custom_call.1} parent=11 // pred_fallthru
          _
        // Predicated region
        $region17: #{tpu_custom_call.1} parent=11 // pred_check
          %p372 = pneg %p92
        $region18: #{tpu_custom_call.1} parent=11 // pred_check_branch
          %374 = sbr.rel (%p372) target = $region20
        $region19: #{tpu_custom_call.1} parent=11 // pred_region
          _
        $region20: #{tpu_custom_call.1} parent=11 // pred_fallthru
          _
        // Predicated region
        $region21: #{tpu_custom_call.1} parent=11 // pred_check
          %p375 = pneg %p113
        $region22: #{tpu_custom_call.1} parent=11 // pred_check_branch
          %377 = sbr.rel (%p375) target = $region24
        $region23: #{tpu_custom_call.1} parent=11 // pred_region
          _
        $region24: #{tpu_custom_call.1} parent=11 // pred_fallthru
          _
        // Predicated region
        $region25: #{tpu_custom_call.1} parent=11 // pred_check
          %p378 = pneg %p134
        $region26: #{tpu_custom_call.1} parent=11 // pred_check_branch
          %380 = sbr.rel (%p378) target = $region28
        $region27: #{tpu_custom_call.1} parent=11 // pred_region
          _
        $region28: #{tpu_custom_call.1} parent=11 // pred_fallthru
          _
        // Predicated region
        $region29: #{tpu_custom_call.1} parent=11 // pred_check
          %p381 = pneg %p155
        $region30: #{tpu_custom_call.1} parent=11 // pred_check_branch
          %383 = sbr.rel (%p381) target = $region32
        $region31: #{tpu_custom_call.1} parent=11 // pred_region
          _
        $region32: #{tpu_custom_call.1} parent=11 // pred_fallthru
          _
        // Predicated region
        $region33: #{tpu_custom_call.1} parent=11 // pred_check
          %p384 = pneg %p176
        $region34: #{tpu_custom_call.1} parent=11 // pred_check_branch
          %386 = sbr.rel (%p384) target = $region36
        $region35: #{tpu_custom_call.1} parent=11 // pred_region
          _
        $region36: #{tpu_custom_call.1} parent=11 // pred_fallthru
          _
        // Predicated region
        $region37: #{tpu_custom_call.1} parent=11 // pred_check
          %p387 = pneg %p197
        $region38: #{tpu_custom_call.1} parent=11 // pred_check_branch
          %389 = sbr.rel (%p387) target = $region40
        $region39: #{tpu_custom_call.1} parent=11 // pred_region
          _
        $region40: #{tpu_custom_call.1} parent=11 // pred_fallthru
          _
        // Predicated region
        $region41: #{tpu_custom_call.1} parent=11 // pred_check
          %p390 = pneg %p218
        $region42: #{tpu_custom_call.1} parent=11 // pred_check_branch
          %392 = sbr.rel (%p390) target = $region44
        $region43: #{tpu_custom_call.1} parent=11 // pred_region
          _
        $region44: #{tpu_custom_call.1} parent=11 // pred_fallthru
          _
        // Predicated region
        $region45: #{tpu_custom_call.1} parent=11 // pred_check
          %p393 = pneg %p239
        $region46: #{tpu_custom_call.1} parent=11 // pred_check_branch
          %395 = sbr.rel (%p393) target = $region48
        $region47: #{tpu_custom_call.1} parent=11 // pred_region
          _
        $region48: #{tpu_custom_call.1} parent=11 // pred_fallthru
          _
        // Predicated region
        $region49: #{tpu_custom_call.1} parent=11 // pred_check
          %p396 = pneg %p260
        $region50: #{tpu_custom_call.1} parent=11 // pred_check_branch
          %398 = sbr.rel (%p396) target = $region52
        $region51: #{tpu_custom_call.1} parent=11 // pred_region
          _
        $region52: #{tpu_custom_call.1} parent=11 // pred_fallthru
          _
        // Predicated region
        $region53: #{tpu_custom_call.1} parent=11 // pred_check
          %p399 = pneg %p281
        $region54: #{tpu_custom_call.1} parent=11 // pred_check_branch
          %401 = sbr.rel (%p399) target = $region56
        $region55: #{tpu_custom_call.1} parent=11 // pred_region
          _
        $region56: #{tpu_custom_call.1} parent=11 // pred_fallthru
          _
        // Predicated region
        $region57: #{tpu_custom_call.1} parent=11 // pred_check
          %p402 = pneg %p302
        $region58: #{tpu_custom_call.1} parent=11 // pred_check_branch
          %404 = sbr.rel (%p402) target = $region60
        $region59: #{tpu_custom_call.1} parent=11 // pred_region
          _
        $region60: #{tpu_custom_call.1} parent=11 // pred_fallthru
          _
      $region12: #{tpu_custom_call.1} parent=5 // pred_fallthru
        _
      %p405 = scmp.lt.s32.totalorder %s24, 2
      // Predicated region
      $region61: #{tpu_custom_call.1} parent=5 // pred_check
        %p406 = pneg %p405
      $region62: #{tpu_custom_call.1} parent=5 // pred_check_branch
        %408 = sbr.rel (%p406) target = $region64
      $region63: #{tpu_custom_call.1} parent=5 // pred_region
        // Predicated region
        $region65: #{tpu_custom_call.1} parent=63 // pred_check
          %p409 = pneg %p44
        $region66: #{tpu_custom_call.1} parent=63 // pred_check_branch
          %411 = sbr.rel (%p409) target = $region68
        $region67: #{tpu_custom_call.1} parent=63 // pred_region
          %s412 = smul.u32 4, %s24
          %p413 = scmp.lt.s32.totalorder %s412, 7
          %s414 = scalar_select %p413, %s412, 7
          %s415 = smul.addr %s414, 8
          %s416 = scalar_lea.vmem %s0, %s415
          %s417 = smul.u32 4, %s24
        $region68: #{tpu_custom_call.1} parent=63 // pred_fallthru
          _
      $region64: #{tpu_custom_call.1} parent=5 // pred_fallthru
        _
      %p418 = scmp.le.s32.totalorder 1, %s24
      %p419 = scmp.lt.s32.totalorder %s24, 3
      %p420 = pnand %p418, %p419
      %p421 = pneg %p420
      // Predicated region
      $region69: #{tpu_custom_call.1} parent=5 // pred_check
        _
      $region70: #{tpu_custom_call.1} parent=5 // pred_check_branch
        %423 = sbr.rel (%p420) target = $region72
      $region71: #{tpu_custom_call.1} parent=5 // pred_region
        %s424 = ssub.s32 %s24, 1
        %s425 = smul.u32 4, %s29
        %p426 = scmp.lt.s32.totalorder %s425, 7
        %s427 = scalar_select %p426, %s425, 7
        %s428 = smul.addr %s427, 8
        %s429 = scalar_lea.vmem %s0, %s428
        %p430 = pneg %p50
        %p431 = pneg %p47
        %p432 = pneg %p71
        %p433 = pneg %p68
        %p434 = pneg %p92
        %p435 = pneg %p89
        %p436 = pneg %p113
        %p437 = pneg %p110
        %p438 = pneg %p134
        %p439 = pneg %p131
        %p440 = pneg %p155
        %p441 = pneg %p152
        %p442 = pneg %p176
        %p443 = pneg %p173
        %p444 = pneg %p197
        %p445 = pneg %p194
        %p446 = pneg %p218
        %p447 = pneg %p215
        %p448 = pneg %p239
        %p449 = pneg %p236
        %p450 = pneg %p260
        %p451 = pneg %p257
        %p452 = pneg %p281
        %p453 = pneg %p278
        %p454 = pneg %p302
        %p455 = pneg %p299
        %p456 = pneg %p328
        %p457 = pneg %p325
        %s458 = smul.u32 4, %s29
        %p459 = scmp.lt.s32.totalorder %s458, 7
        %s460 = scalar_select %p459, %s458, 7
        %s461 = smul.addr %s460, 8
        %s462 = scalar_lea.vmem %s13, %s461
        %p463 = pneg %p354
        %p464 = pneg %p351
        %s465 = sand.u32 %s341, 1
        %s466 = scalar_lea.sflag [#allocation3], %s465
        %s467 = sand.u32 %s341, 1
        %s468 = smul.addr %s467, 32
        %s469 = scalar_lea.vmem [#allocation2], %s468
        %s470 = smul.u32 4, %s29
        %p471 = scmp.lt.s32.totalorder %s470, 7
        %s472 = scalar_select %p471, %s470, 7
        %s473 = smul.addr %s472, 8
        %s474 = scalar_lea.vmem %s0, %s473
        %s475 = smul.u32 4, %s29
        %s476 = smul.u32 4, %s29
        %p477 = scmp.lt.s32.totalorder %s476, 7
        %s478 = scalar_select %p477, %s476, 7
        %s479 = smul.addr %s478, 8
        %s480 = scalar_lea.vmem %s13, %s479
        %s481 = smul.u32 4, %s29
        %s482 = smul.u32 4, %s29
        %v484 = vld [vmem:[%s474] sm:$0xff]
        %v485 = vld [vmem:[%s474 + $0x8] sm:$0xff]
        %v486 = vld [vmem:[%s474 + $0x10] sm:$0xff]
        %v487 = vld [vmem:[%s474 + $0x18] sm:$0xff]
        %v488 = vld [vmem:[%s1] sm:$0x1]
        %v489 = vld [vmem:[%s2] sm:$0x1]
        %vm490 = vcmask 261120
        %v491 = vsel %vm490, %v484, 0.0
        %492 = vadd.xlane.f32.xlu0 %v491
        %v493 = vpop.xlane.xlu0 %492
        %v494 = vsel %vm490, %v485, 0.0
        %495 = vadd.xlane.f32.xlu0 %v494
        %v496 = vpop.xlane.xlu0 %495
        %v497 = vsel %vm490, %v486, 0.0
        %498 = vadd.xlane.f32.xlu0 %v497
        %v499 = vpop.xlane.xlu0 %498
        %v500 = vsel %vm490, %v487, 0.0
        %501 = vadd.xlane.f32.xlu0 %v500
        %v502 = vpop.xlane.xlu0 %501
        %v503 = vrcp.pop 32.0
        %v504 = vmul.f32 %v493, %v503
        %v505 = vmul.f32 %v496, %v503
        %v506 = vmul.f32 %v499, %v503
        %v507 = vmul.f32 %v502, %v503
        %v508 = vsub.f32 %v484, %v504
        %v509 = vsub.f32 %v485, %v505
        %v510 = vsub.f32 %v486, %v506
        %v511 = vsub.f32 %v487, %v507
        %v512 = vmul.f32 %v508, %v508
        %v513 = vmul.f32 %v509, %v509
        %v514 = vmul.f32 %v510, %v510
        %v515 = vmul.f32 %v511, %v511
        %v516 = vsel %vm490, %v512, 0.0
        %517 = vadd.xlane.f32.xlu0 %v516
        %v518 = vpop.xlane.xlu0 %517
        %v519 = vsel %vm490, %v513, 0.0
        %520 = vadd.xlane.f32.xlu0 %v519
        %v521 = vpop.xlane.xlu0 %520
        %v522 = vsel %vm490, %v514, 0.0
        %523 = vadd.xlane.f32.xlu0 %v522
        %v524 = vpop.xlane.xlu0 %523
        %v525 = vsel %vm490, %v515, 0.0
        %526 = vadd.xlane.f32.xlu0 %v525
        %v527 = vpop.xlane.xlu0 %526
        %v528 = vmul.f32 %v518, %v503
        %v529 = vmul.f32 %v521, %v503
        %v530 = vmul.f32 %v524, %v503
        %v531 = vmul.f32 %v527, %v503
        %v532 = vadd.f32 %v528, 1e-05
        %v533 = vadd.f32 %v529, 1e-05
        %v534 = vadd.f32 %v530, 1e-05
        %v535 = vadd.f32 %v531, 1e-05
        %v536 = vrsqrt.pop %v532
        %v537 = vrsqrt.pop %v533
        %v538 = vrsqrt.pop %v534
        %v539 = vrsqrt.pop %v535
        %v540 = vmul.f32 %v508, %v536
        %v541 = vmul.f32 %v509, %v537
        %v542 = vmul.f32 %v510, %v538
        %v543 = vmul.f32 %v511, %v539
        %v545 = vlaneseq
        %v546 = vshrl.u32 %v545, 7
        %v547 = vsub.s32 0, %v546
        %v548 = vrot.slane %v488, %v547
        %v550 = vmul.f32 %v540, %v548
        %v551 = vmul.f32 %v541, %v548
        %v552 = vmul.f32 %v542, %v548
        %v553 = vmul.f32 %v543, %v548
        %v555 = vlaneseq
        %v556 = vshrl.u32 %v555, 7
        %v557 = vsub.s32 0, %v556
        %v558 = vrot.slane %v489, %v557
        %v560 = vadd.f32 %v550, %v558
        %v561 = vadd.f32 %v551, %v558
        %v562 = vadd.f32 %v552, %v558
        %v563 = vadd.f32 %v553, %v558
        %v564 = vpack.c.bf16 %v561, %v560
        %v565 = vpack.c.bf16 %v563, %v562
        %v566 = vld [vmem:[%s3] sm:$0xf]
        %v567 = vld [vmem:[%s3 + $0x4] sm:$0xf]
        %v568 = vld [vmem:[%s3 + $0x8] sm:$0xf]
        %v569 = vld [vmem:[%s3 + $0xc] sm:$0xf]
        %v570 = vld [vmem:[%s4] sm:$0x1]
        %v572 = vlaneseq
        %v573 = vshrl.u32 %v572, 7
        %v574 = vsub.s32 0, %v573
        %v575 = vrot.slane %v570, %v574
        %v581 = vunpack.c.l.b16 %v566
        %v582 = vunpack.c.l.b16 %v567
        %v583 = vunpack.c.l.b16 %v568
        %v584 = vunpack.c.l.b16 %v569
        %v585 = vpack.c.b16 %v582, %v581
        %v586 = vpack.c.b16 %v584, %v583
        %v590 = vsel %vm490, %v564, 0
        %v593 = vsel %vm490, %v565, 0
        %595 = vmatprep.subr.bf16.mxu0 0
        %596 = vmatpush1.bf16.msra.mxu0 %v585
        %597 = vmatprep.subr.bf16.mxu0 0
        %598 = vmatpush1.bf16.msra.mxu0 %v586
        %599 = vmatprep.subr.bf16.mxu0 0
        %600 = vmatpush1.bf16.msra.mxu0 0
        %601 = vmatprep.subr.bf16.mxu0 0
        %602 = vmatpush1.bf16.msra.mxu0 0
        %603 = vmatprep.subr.bf16.mxu0 0
        %604 = vmatpush1.bf16.msra.mxu0 0
        %605 = vmatprep.subr.bf16.mxu0 0
        %606 = vmatpush1.bf16.msra.mxu0 0
        %607 = vmatprep.subr.bf16.mxu0 0
        %608 = vmatpush1.bf16.msra.mxu0 0
        %609 = vmatprep.subr.bf16.mxu0 0
        %610 = vmatpush1.bf16.msra.mxu0 0
        %611 = vmatprep.subr.bf16.mxu0 0
        %612 = vmatpush1.bf16.msra.mxu0 0
        %613 = vmatprep.subr.bf16.mxu0 0
        %614 = vmatpush1.bf16.msra.mxu0 0
        %615 = vmatprep.subr.bf16.mxu0 0
        %616 = vmatpush1.bf16.msra.mxu0 0
        %617 = vmatprep.subr.bf16.mxu0 0
        %618 = vmatpush1.bf16.msra.mxu0 0
        %619 = vmatprep.subr.bf16.mxu0 0
        %620 = vmatpush1.bf16.msra.mxu0 0
        %621 = vmatprep.subr.bf16.mxu0 0
        %622 = vmatpush1.bf16.msra.mxu0 0
        %623 = vmatprep.subr.bf16.mxu0 0
        %624 = vmatpush1.bf16.msra.mxu0 0
        %625 = vmatprep.subr.bf16.mxu0 0
        %626 = vmatpush1.bf16.msra.mxu0 0
        %627 = vmatprep.mubr.bf16.mxu0 0
        %628 = vmatmul.mubr.bf16.gmra.mrb[0].mxu0 %v590
        %v629 = vpop.f32.mrb[0].mxu0
        %v630 = vadd.f32 %v575, %v629
        %v631 = vpop.f32.mrb[0].mxu0
        %v632 = vpop.f32.mrb[0].mxu0
        %v633 = vadd.f32 %v575, %v632
        %v634 = vpop.f32.mrb[0].mxu0
        %635 = vmatprep.mubr.bf16.mxu0 0
        %636 = vmatmul.mubr.bf16.gmra.mrb[0].mxu0 %v593
        %v637 = vpop.f32.mrb[0].mxu0
        %v638 = vadd.f32 %v575, %v637
        %v639 = vpop.f32.mrb[0].mxu0
        %v640 = vpop.f32.mrb[0].mxu0
        %v641 = vadd.f32 %v575, %v640
        %v642 = vpop.f32.mrb[0].mxu0
        %643 = vdwg.mxu0
        %648 = vrot.lane.b32.xlu0 %v630, 120
        %v649 = vpop.permute.xlu0 %648
        %650 = vrot.lane.b32.xlu0 %v633, 120
        %v651 = vpop.permute.xlu0 %650
        %652 = vrot.lane.b32.xlu0 %v638, 120
        %v653 = vpop.permute.xlu0 %652
        %654 = vrot.lane.b32.xlu0 %v641, 120
        %v655 = vpop.permute.xlu0 %654
        %660 = vrot.lane.b32.xlu0 %v630, 112
        %v661 = vpop.permute.xlu0 %660
        %662 = vrot.lane.b32.xlu0 %v633, 112
        %v663 = vpop.permute.xlu0 %662
        %664 = vrot.lane.b32.xlu0 %v638, 112
        %v665 = vpop.permute.xlu0 %664
        %666 = vrot.lane.b32.xlu0 %v641, 112
        %v667 = vpop.permute.xlu0 %666
        %672 = vrot.lane.b32.xlu0 %v630, 104
        %v673 = vpop.permute.xlu0 %672
        %674 = vrot.lane.b32.xlu0 %v633, 104
        %v675 = vpop.permute.xlu0 %674
        %676 = vrot.lane.b32.xlu0 %v638, 104
        %v677 = vpop.permute.xlu0 %676
        %678 = vrot.lane.b32.xlu0 %v641, 104
        %v679 = vpop.permute.xlu0 %678
        %v684 = vpack.c.bf16 %v630, %v630
        %v685 = vpack.c.bf16 %v633, %v633
        %v686 = vpack.c.bf16 %v638, %v638
        %v687 = vpack.c.bf16 %v641, %v641
        %v688 = vpack.c.bf16 %v649, %v649
        %v689 = vpack.c.bf16 %v651, %v651
        %v690 = vpack.c.bf16 %v653, %v653
        %v691 = vpack.c.bf16 %v655, %v655
        %v692 = vpack.c.bf16 %v661, %v661
        %v693 = vpack.c.bf16 %v663, %v663
        %v694 = vpack.c.bf16 %v665, %v665
        %v695 = vpack.c.bf16 %v667, %v667
        %v696 = vpack.c.bf16 %v673, %v673
        %v697 = vpack.c.bf16 %v675, %v675
        %v698 = vpack.c.bf16 %v677, %v677
        %v699 = vpack.c.bf16 %v679, %v679
        %701 = vrot.lane.b32.xlu0 %v684, 96
        %v702 = vpop.permute.xlu0 %701
        %vm703 = vcmask 64512
        %v705 = vsel %vm703, %v684, 0
        %v708 = vsel %vm703, %v702, 0
        %710 = vmatprep.subr.bf16.mxu0 0
        %711 = vmatpush1.bf16.xpose.msra.mxu0 %v708
        %712 = vmatprep.subr.bf16.mxu0 0
        %713 = vmatpush1.bf16.xpose.msra.mxu0 0
        %714 = vmatprep.subr.bf16.mxu0 0
        %715 = vmatpush1.bf16.xpose.msra.mxu0 0
        %716 = vmatprep.subr.bf16.mxu0 0
        %717 = vmatpush1.bf16.xpose.msra.mxu0 0
        %718 = vmatprep.subr.bf16.mxu0 0
        %719 = vmatpush1.bf16.xpose.msra.mxu0 0
        %720 = vmatprep.subr.bf16.mxu0 0
        %721 = vmatpush1.bf16.xpose.msra.mxu0 0
        %722 = vmatprep.subr.bf16.mxu0 0
        %723 = vmatpush1.bf16.xpose.msra.mxu0 0
        %724 = vmatprep.subr.bf16.mxu0 0
        %725 = vmatpush1.bf16.xpose.msra.mxu0 0
        %726 = vmatprep.subr.bf16.mxu0 0
        %727 = vmatpush1.bf16.xpose.msra.mxu0 0
        %728 = vmatprep.subr.bf16.mxu0 0
        %729 = vmatpush1.bf16.xpose.msra.mxu0 0
        %730 = vmatprep.subr.bf16.mxu0 0
        %731 = vmatpush1.bf16.xpose.msra.mxu0 0
        %732 = vmatprep.subr.bf16.mxu0 0
        %733 = vmatpush1.bf16.xpose.msra.mxu0 0
        %734 = vmatprep.subr.bf16.mxu0 0
        %735 = vmatpush1.bf16.xpose.msra.mxu0 0
        %736 = vmatprep.subr.bf16.mxu0 0
        %737 = vmatpush1.bf16.xpose.msra.mxu0 0
        %738 = vmatprep.subr.bf16.mxu0 0
        %739 = vmatpush1.bf16.xpose.msra.mxu0 0
        %740 = vmatprep.subr.bf16.mxu0 0
        %741 = vmatpush1.bf16.xpose.msra.mxu0 0
        %742 = vmatprep.mubr.bf16.mxu0 0
        %743 = vmatmul.mubr.bf16.gmra.mrb[0].mxu0 %v705
        %v744 = vpop.f32.mrb[0].mxu0
        %v745 = vadd.f32 0.0, %v744
        %v746 = vpop.f32.mrb[0].mxu0
        %v747 = vpop.f32.mrb[0].mxu0
        %v748 = vpop.f32.mrb[0].mxu0
        %749 = vdwg.mxu0
        %751 = vrot.lane.b32.xlu0 %v685, 96
        %v752 = vpop.permute.xlu0 %751
        %v754 = vsel %vm703, %v685, 0
        %v757 = vsel %vm703, %v752, 0
        %759 = vmatprep.subr.bf16.mxu0 0
        %760 = vmatpush1.bf16.xpose.msra.mxu0 %v757
        %761 = vmatprep.subr.bf16.mxu0 0
        %762 = vmatpush1.bf16.xpose.msra.mxu0 0
        %763 = vmatprep.subr.bf16.mxu0 0
        %764 = vmatpush1.bf16.xpose.msra.mxu0 0
        %765 = vmatprep.subr.bf16.mxu0 0
        %766 = vmatpush1.bf16.xpose.msra.mxu0 0
        %767 = vmatprep.subr.bf16.mxu0 0
        %768 = vmatpush1.bf16.xpose.msra.mxu0 0
        %769 = vmatprep.subr.bf16.mxu0 0
        %770 = vmatpush1.bf16.xpose.msra.mxu0 0
        %771 = vmatprep.subr.bf16.mxu0 0
        %772 = vmatpush1.bf16.xpose.msra.mxu0 0
        %773 = vmatprep.subr.bf16.mxu0 0
        %774 = vmatpush1.bf16.xpose.msra.mxu0 0
        %775 = vmatprep.subr.bf16.mxu0 0
        %776 = vmatpush1.bf16.xpose.msra.mxu0 0
        %777 = vmatprep.subr.bf16.mxu0 0
        %778 = vmatpush1.bf16.xpose.msra.mxu0 0
        %779 = vmatprep.subr.bf16.mxu0 0
        %780 = vmatpush1.bf16.xpose.msra.mxu0 0
        %781 = vmatprep.subr.bf16.mxu0 0
        %782 = vmatpush1.bf16.xpose.msra.mxu0 0
        %783 = vmatprep.subr.bf16.mxu0 0
        %784 = vmatpush1.bf16.xpose.msra.mxu0 0
        %785 = vmatprep.subr.bf16.mxu0 0
        %786 = vmatpush1.bf16.xpose.msra.mxu0 0
        %787 = vmatprep.subr.bf16.mxu0 0
        %788 = vmatpush1.bf16.xpose.msra.mxu0 0
        %789 = vmatprep.subr.bf16.mxu0 0
        %790 = vmatpush1.bf16.xpose.msra.mxu0 0
        %791 = vmatprep.mubr.bf16.mxu0 0
        %792 = vmatmul.mubr.bf16.gmra.mrb[0].mxu0 %v754
        %v793 = vpop.f32.mrb[0].mxu0
        %v794 = vadd.f32 0.0, %v793
        %v795 = vpop.f32.mrb[0].mxu0
        %v796 = vpop.f32.mrb[0].mxu0
        %v797 = vpop.f32.mrb[0].mxu0
        %798 = vdwg.mxu0
        %800 = vrot.lane.b32.xlu0 %v686, 96
        %v801 = vpop.permute.xlu0 %800
        %v803 = vsel %vm703, %v686, 0
        %v806 = vsel %vm703, %v801, 0
        %808 = vmatprep.subr.bf16.mxu0 0
        %809 = vmatpush1.bf16.xpose.msra.mxu0 %v806
        %810 = vmatprep.subr.bf16.mxu0 0
        %811 = vmatpush1.bf16.xpose.msra.mxu0 0
        %812 = vmatprep.subr.bf16.mxu0 0
        %813 = vmatpush1.bf16.xpose.msra.mxu0 0
        %814 = vmatprep.subr.bf16.mxu0 0
        %815 = vmatpush1.bf16.xpose.msra.mxu0 0
        %816 = vmatprep.subr.bf16.mxu0 0
        %817 = vmatpush1.bf16.xpose.msra.mxu0 0
        %818 = vmatprep.subr.bf16.mxu0 0
        %819 = vmatpush1.bf16.xpose.msra.mxu0 0
        %820 = vmatprep.subr.bf16.mxu0 0
        %821 = vmatpush1.bf16.xpose.msra.mxu0 0
        %822 = vmatprep.subr.bf16.mxu0 0
        %823 = vmatpush1.bf16.xpose.msra.mxu0 0
        %824 = vmatprep.subr.bf16.mxu0 0
        %825 = vmatpush1.bf16.xpose.msra.mxu0 0
        %826 = vmatprep.subr.bf16.mxu0 0
        %827 = vmatpush1.bf16.xpose.msra.mxu0 0
        %828 = vmatprep.subr.bf16.mxu0 0
        %829 = vmatpush1.bf16.xpose.msra.mxu0 0
        %830 = vmatprep.subr.bf16.mxu0 0
        %831 = vmatpush1.bf16.xpose.msra.mxu0 0
        %832 = vmatprep.subr.bf16.mxu0 0
        %833 = vmatpush1.bf16.xpose.msra.mxu0 0
        %834 = vmatprep.subr.bf16.mxu0 0
        %835 = vmatpush1.bf16.xpose.msra.mxu0 0
        %836 = vmatprep.subr.bf16.mxu0 0
        %837 = vmatpush1.bf16.xpose.msra.mxu0 0
        %838 = vmatprep.subr.bf16.mxu0 0
        %839 = vmatpush1.bf16.xpose.msra.mxu0 0
        %840 = vmatprep.mubr.bf16.mxu0 0
        %841 = vmatmul.mubr.bf16.gmra.mrb[0].mxu0 %v803
        %v842 = vpop.f32.mrb[0].mxu0
        %v843 = vadd.f32 0.0, %v842
        %v844 = vpop.f32.mrb[0].mxu0
        %v845 = vpop.f32.mrb[0].mxu0
        %v846 = vpop.f32.mrb[0].mxu0
        %847 = vdwg.mxu0
        %849 = vrot.lane.b32.xlu0 %v687, 96
        %v850 = vpop.permute.xlu0 %849
        %v852 = vsel %vm703, %v687, 0
        %v855 = vsel %vm703, %v850, 0
        %857 = vmatprep.subr.bf16.mxu0 0
        %858 = vmatpush1.bf16.xpose.msra.mxu0 %v855
        %859 = vmatprep.subr.bf16.mxu0 0
        %860 = vmatpush1.bf16.xpose.msra.mxu0 0
        %861 = vmatprep.subr.bf16.mxu0 0
        %862 = vmatpush1.bf16.xpose.msra.mxu0 0
        %863 = vmatprep.subr.bf16.mxu0 0
        %864 = vmatpush1.bf16.xpose.msra.mxu0 0
        %865 = vmatprep.subr.bf16.mxu0 0
        %866 = vmatpush1.bf16.xpose.msra.mxu0 0
        %867 = vmatprep.subr.bf16.mxu0 0
        %868 = vmatpush1.bf16.xpose.msra.mxu0 0
        %869 = vmatprep.subr.bf16.mxu0 0
        %870 = vmatpush1.bf16.xpose.msra.mxu0 0
        %871 = vmatprep.subr.bf16.mxu0 0
        %872 = vmatpush1.bf16.xpose.msra.mxu0 0
        %873 = vmatprep.subr.bf16.mxu0 0
        %874 = vmatpush1.bf16.xpose.msra.mxu0 0
        %875 = vmatprep.subr.bf16.mxu0 0
        %876 = vmatpush1.bf16.xpose.msra.mxu0 0
        %877 = vmatprep.subr.bf16.mxu0 0
        %878 = vmatpush1.bf16.xpose.msra.mxu0 0
        %879 = vmatprep.subr.bf16.mxu0 0
        %880 = vmatpush1.bf16.xpose.msra.mxu0 0
        %881 = vmatprep.subr.bf16.mxu0 0
        %882 = vmatpush1.bf16.xpose.msra.mxu0 0
        %883 = vmatprep.subr.bf16.mxu0 0
        %884 = vmatpush1.bf16.xpose.msra.mxu0 0
        %885 = vmatprep.subr.bf16.mxu0 0
        %886 = vmatpush1.bf16.xpose.msra.mxu0 0
        %887 = vmatprep.subr.bf16.mxu0 0
        %888 = vmatpush1.bf16.xpose.msra.mxu0 0
        %889 = vmatprep.mubr.bf16.mxu0 0
        %890 = vmatmul.mubr.bf16.gmra.mrb[0].mxu0 %v852
        %v891 = vpop.f32.mrb[0].mxu0
        %v892 = vadd.f32 0.0, %v891
        %v893 = vpop.f32.mrb[0].mxu0
        %v894 = vpop.f32.mrb[0].mxu0
        %v895 = vpop.f32.mrb[0].mxu0
        %896 = vdwg.mxu0
        %898 = vrot.lane.b32.xlu0 %v688, 96
        %v899 = vpop.permute.xlu0 %898
        %v901 = vsel %vm703, %v688, 0
        %v904 = vsel %vm703, %v899, 0
        %906 = vmatprep.subr.bf16.mxu0 0
        %907 = vmatpush1.bf16.xpose.msra.mxu0 %v904
        %908 = vmatprep.subr.bf16.mxu0 0
        %909 = vmatpush1.bf16.xpose.msra.mxu0 0
        %910 = vmatprep.subr.bf16.mxu0 0
        %911 = vmatpush1.bf16.xpose.msra.mxu0 0
        %912 = vmatprep.subr.bf16.mxu0 0
        %913 = vmatpush1.bf16.xpose.msra.mxu0 0
        %914 = vmatprep.subr.bf16.mxu0 0
        %915 = vmatpush1.bf16.xpose.msra.mxu0 0
        %916 = vmatprep.subr.bf16.mxu0 0
        %917 = vmatpush1.bf16.xpose.msra.mxu0 0
        %918 = vmatprep.subr.bf16.mxu0 0
        %919 = vmatpush1.bf16.xpose.msra.mxu0 0
        %920 = vmatprep.subr.bf16.mxu0 0
        %921 = vmatpush1.bf16.xpose.msra.mxu0 0
        %922 = vmatprep.subr.bf16.mxu0 0
        %923 = vmatpush1.bf16.xpose.msra.mxu0 0
        %924 = vmatprep.subr.bf16.mxu0 0
        %925 = vmatpush1.bf16.xpose.msra.mxu0 0
        %926 = vmatprep.subr.bf16.mxu0 0
        %927 = vmatpush1.bf16.xpose.msra.mxu0 0
        %928 = vmatprep.subr.bf16.mxu0 0
        %929 = vmatpush1.bf16.xpose.msra.mxu0 0
        %930 = vmatprep.subr.bf16.mxu0 0
        %931 = vmatpush1.bf16.xpose.msra.mxu0 0
        %932 = vmatprep.subr.bf16.mxu0 0
        %933 = vmatpush1.bf16.xpose.msra.mxu0 0
        %934 = vmatprep.subr.bf16.mxu0 0
        %935 = vmatpush1.bf16.xpose.msra.mxu0 0
        %936 = vmatprep.subr.bf16.mxu0 0
        %937 = vmatpush1.bf16.xpose.msra.mxu0 0
        %938 = vmatprep.mubr.bf16.mxu0 0
        %939 = vmatmul.mubr.bf16.gmra.mrb[0].mxu0 %v901
        %v940 = vpop.f32.mrb[0].mxu0
        %v941 = vadd.f32 0.0, %v940
        %v942 = vpop.f32.mrb[0].mxu0
        %v943 = vpop.f32.mrb[0].mxu0
        %v944 = vpop.f32.mrb[0].mxu0
        %945 = vdwg.mxu0
        %947 = vrot.lane.b32.xlu0 %v689, 96
        %v948 = vpop.permute.xlu0 %947
        %v950 = vsel %vm703, %v689, 0
        %v953 = vsel %vm703, %v948, 0
        %955 = vmatprep.subr.bf16.mxu0 0
        %956 = vmatpush1.bf16.xpose.msra.mxu0 %v953
        %957 = vmatprep.subr.bf16.mxu0 0
        %958 = vmatpush1.bf16.xpose.msra.mxu0 0
        %959 = vmatprep.subr.bf16.mxu0 0
        %960 = vmatpush1.bf16.xpose.msra.mxu0 0
        %961 = vmatprep.subr.bf16.mxu0 0
        %962 = vmatpush1.bf16.xpose.msra.mxu0 0
        %963 = vmatprep.subr.bf16.mxu0 0
        %964 = vmatpush1.bf16.xpose.msra.mxu0 0
        %965 = vmatprep.subr.bf16.mxu0 0
        %966 = vmatpush1.bf16.xpose.msra.mxu0 0
        %967 = vmatprep.subr.bf16.mxu0 0
        %968 = vmatpush1.bf16.xpose.msra.mxu0 0
        %969 = vmatprep.subr.bf16.mxu0 0
        %970 = vmatpush1.bf16.xpose.msra.mxu0 0
        %971 = vmatprep.subr.bf16.mxu0 0
        %972 = vmatpush1.bf16.xpose.msra.mxu0 0
        %973 = vmatprep.subr.bf16.mxu0 0
        %974 = vmatpush1.bf16.xpose.msra.mxu0 0
        %975 = vmatprep.subr.bf16.mxu0 0
        %976 = vmatpush1.bf16.xpose.msra.mxu0 0
        %977 = vmatprep.subr.bf16.mxu0 0
        %978 = vmatpush1.bf16.xpose.msra.mxu0 0
        %979 = vmatprep.subr.bf16.mxu0 0
        %980 = vmatpush1.bf16.xpose.msra.mxu0 0
        %981 = vmatprep.subr.bf16.mxu0 0
        %982 = vmatpush1.bf16.xpose.msra.mxu0 0
        %983 = vmatprep.subr.bf16.mxu0 0
        %984 = vmatpush1.bf16.xpose.msra.mxu0 0
        %985 = vmatprep.subr.bf16.mxu0 0
        %986 = vmatpush1.bf16.xpose.msra.mxu0 0
        %987 = vmatprep.mubr.bf16.mxu0 0
        %988 = vmatmul.mubr.bf16.gmra.mrb[0].mxu0 %v950
        %v989 = vpop.f32.mrb[0].mxu0
        %v990 = vadd.f32 0.0, %v989
        %v991 = vpop.f32.mrb[0].mxu0
        %v992 = vpop.f32.mrb[0].mxu0
        %v993 = vpop.f32.mrb[0].mxu0
        %994 = vdwg.mxu0
        %996 = vrot.lane.b32.xlu0 %v690, 96
        %v997 = vpop.permute.xlu0 %996
        %v999 = vsel %vm703, %v690, 0
        %v1002 = vsel %vm703, %v997, 0
        %1004 = vmatprep.subr.bf16.mxu0 0
        %1005 = vmatpush1.bf16.xpose.msra.mxu0 %v1002
        %1006 = vmatprep.subr.bf16.mxu0 0
        %1007 = vmatpush1.bf16.xpose.msra.mxu0 0
        %1008 = vmatprep.subr.bf16.mxu0 0
        %1009 = vmatpush1.bf16.xpose.msra.mxu0 0
        %1010 = vmatprep.subr.bf16.mxu0 0
        %1011 = vmatpush1.bf16.xpose.msra.mxu0 0
        %1012 = vmatprep.subr.bf16.mxu0 0
        %1013 = vmatpush1.bf16.xpose.msra.mxu0 0
        %1014 = vmatprep.subr.bf16.mxu0 0
        %1015 = vmatpush1.bf16.xpose.msra.mxu0 0
        %1016 = vmatprep.subr.bf16.mxu0 0
        %1017 = vmatpush1.bf16.xpose.msra.mxu0 0
        %1018 = vmatprep.subr.bf16.mxu0 0
        %1019 = vmatpush1.bf16.xpose.msra.mxu0 0
        %1020 = vmatprep.subr.bf16.mxu0 0
        %1021 = vmatpush1.bf16.xpose.msra.mxu0 0
        %1022 = vmatprep.subr.bf16.mxu0 0
        %1023 = vmatpush1.bf16.xpose.msra.mxu0 0
        %1024 = vmatprep.subr.bf16.mxu0 0
        %1025 = vmatpush1.bf16.xpose.msra.mxu0 0
        %1026 = vmatprep.subr.bf16.mxu0 0
        %1027 = vmatpush1.bf16.xpose.msra.mxu0 0
        %1028 = vmatprep.subr.bf16.mxu0 0
        %1029 = vmatpush1.bf16.xpose.msra.mxu0 0
        %1030 = vmatprep.subr.bf16.mxu0 0
        %1031 = vmatpush1.bf16.xpose.msra.mxu0 0
        %1032 = vmatprep.subr.bf16.mxu0 0
        %1033 = vmatpush1.bf16.xpose.msra.mxu0 0
        %1034 = vmatprep.subr.bf16.mxu0 0
        %1035 = vmatpush1.bf16.xpose.msra.mxu0 0
        %1036 = vmatprep.mubr.bf16.mxu0 0
        %1037 = vmatmul.mubr.bf16.gmra.mrb[0].mxu0 %v999
        %v1038 = vpop.f32.mrb[0].mxu0
        %v1039 = vadd.f32 0.0, %v1038
        %v1040 = vpop.f32.mrb[0].mxu0
        %v1041 = vpop.f32.mrb[0].mxu0
        %v1042 = vpop.f32.mrb[0].mxu0
        %1043 = vdwg.mxu0
        %1045 = vrot.lane.b32.xlu0 %v691, 96
        %v1046 = vpop.permute.xlu0 %1045
        %v1048 = vsel %vm703, %v691, 0
        %v1051 = vsel %vm703, %v1046, 0
        %1053 = vmatprep.subr.bf16.mxu0 0
        %1054 = vmatpush1.bf16.xpose.msra.mxu0 %v1051
        %1055 = vmatprep.subr.bf16.mxu0 0
        %1056 = vmatpush1.bf16.xpose.msra.mxu0 0
        %1057 = vmatprep.subr.bf16.mxu0 0
        %1058 = vmatpush1.bf16.xpose.msra.mxu0 0
        %1059 = vmatprep.subr.bf16.mxu0 0
        %1060 = vmatpush1.bf16.xpose.msra.mxu0 0
        %1061 = vmatprep.subr.bf16.mxu0 0
        %1062 = vmatpush1.bf16.xpose.msra.mxu0 0
        %1063 = vmatprep.subr.bf16.mxu0 0
        %1064 = vmatpush1.bf16.xpose.msra.mxu0 0
        %1065 = vmatprep.subr.bf16.mxu0 0
        %1066 = vmatpush1.bf16.xpose.msra.mxu0 0
        %1067 = vmatprep.subr.bf16.mxu0 0
        %1068 = vmatpush1.bf16.xpose.msra.mxu0 0
        %1069 = vmatprep.subr.bf16.mxu0 0
        %1070 = vmatpush1.bf16.xpose.msra.mxu0 0
        %1071 = vmatprep.subr.bf16.mxu0 0
        %1072 = vmatpush1.bf16.xpose.msra.mxu0 0
        %1073 = vmatprep.subr.bf16.mxu0 0
        %1074 = vmatpush1.bf16.xpose.msra.mxu0 0
        %1075 = vmatprep.subr.bf16.mxu0 0
        %1076 = vmatpush1.bf16.xpose.msra.mxu0 0
        %1077 = vmatprep.subr.bf16.mxu0 0
        %1078 = vmatpush1.bf16.xpose.msra.mxu0 0
        %1079 = vmatprep.subr.bf16.mxu0 0
        %1080 = vmatpush1.bf16.xpose.msra.mxu0 0
        %1081 = vmatprep.subr.bf16.mxu0 0
        %1082 = vmatpush1.bf16.xpose.msra.mxu0 0
        %1083 = vmatprep.subr.bf16.mxu0 0
        %1084 = vmatpush1.bf16.xpose.msra.mxu0 0
        %1085 = vmatprep.mubr.bf16.mxu0 0
        %1086 = vmatmul.mubr.bf16.gmra.mrb[0].mxu0 %v1048
        %v1087 = vpop.f32.mrb[0].mxu0
        %v1088 = vadd.f32 0.0, %v1087
        %v1089 = vpop.f32.mrb[0].mxu0
        %v1090 = vpop.f32.mrb[0].mxu0
        %v1091 = vpop.f32.mrb[0].mxu0
        %1092 = vdwg.mxu0
        %1094 = vrot.lane.b32.xlu0 %v692, 96
        %v1095 = vpop.permute.xlu0 %1094
        %v1097 = vsel %vm703, %v692, 0
        %v1100 = vsel %vm703, %v1095, 0
        %1102 = vmatprep.subr.bf16.mxu0 0
        %1103 = vmatpush1.bf16.xpose.msra.mxu0 %v1100
        %1104 = vmatprep.subr.bf16.mxu0 0
        %1105 = vmatpush1.bf16.xpose.msra.mxu0 0
        %1106 = vmatprep.subr.bf16.mxu0 0
        %1107 = vmatpush1.bf16.xpose.msra.mxu0 0
        %1108 = vmatprep.subr.bf16.mxu0 0
        %1109 = vmatpush1.bf16.xpose.msra.mxu0 0
        %1110 = vmatprep.subr.bf16.mxu0 0
        %1111 = vmatpush1.bf16.xpose.msra.mxu0 0
        %1112 = vmatprep.subr.bf16.mxu0 0
        %1113 = vmatpush1.bf16.xpose.msra.mxu0 0
        %1114 = vmatprep.subr.bf16.mxu0 0
        %1115 = vmatpush1.bf16.xpose.msra.mxu0 0
        %1116 = vmatprep.subr.bf16.mxu0 0
        %1117 = vmatpush1.bf16.xpose.msra.mxu0 0
        %1118 = vmatprep.subr.bf16.mxu0 0
        %1119 = vmatpush1.bf16.xpose.msra.mxu0 0
        %1120 = vmatprep.subr.bf16.mxu0 0
        %1121 = vmatpush1.bf16.xpose.msra.mxu0 0
        %1122 = vmatprep.subr.bf16.mxu0 0
        %1123 = vmatpush1.bf16.xpose.msra.mxu0 0
        %1124 = vmatprep.subr.bf16.mxu0 0
        %1125 = vmatpush1.bf16.xpose.msra.mxu0 0
        %1126 = vmatprep.subr.bf16.mxu0 0
        %1127 = vmatpush1.bf16.xpose.msra.mxu0 0
        %1128 = vmatprep.subr.bf16.mxu0 0
        %1129 = vmatpush1.bf16.xpose.msra.mxu0 0
        %1130 = vmatprep.subr.bf16.mxu0 0
        %1131 = vmatpush1.bf16.xpose.msra.mxu0 0
        %1132 = vmatprep.subr.bf16.mxu0 0
        %1133 = vmatpush1.bf16.xpose.msra.mxu0 0
        %1134 = vmatprep.mubr.bf16.mxu0 0
        %1135 = vmatmul.mubr.bf16.gmra.mrb[0].mxu0 %v1097
        %v1136 = vpop.f32.mrb[0].mxu0
        %v1137 = vadd.f32 0.0, %v1136
        %v1138 = vpop.f32.mrb[0].mxu0
        %v1139 = vpop.f32.mrb[0].mxu0
        %v1140 = vpop.f32.mrb[0].mxu0
        %1141 = vdwg.mxu0
        %1143 = vrot.lane.b32.xlu0 %v693, 96
        %v1144 = vpop.permute.xlu0 %1143
        %v1146 = vsel %vm703, %v693, 0
        %v1149 = vsel %vm703, %v1144, 0
        %1151 = vmatprep.subr.bf16.mxu0 0
        %1152 = vmatpush1.bf16.xpose.msra.mxu0 %v1149
        %1153 = vmatprep.subr.bf16.mxu0 0
        %1154 = vmatpush1.bf16.xpose.msra.mxu0 0
        %1155 = vmatprep.subr.bf16.mxu0 0
        %1156 = vmatpush1.bf16.xpose.msra.mxu0 0
        %1157 = vmatprep.subr.bf16.mxu0 0
        %1158 = vmatpush1.bf16.xpose.msra.mxu0 0
        %1159 = vmatprep.subr.bf16.mxu0 0
        %1160 = vmatpush1.bf16.xpose.msra.mxu0 0
        %1161 = vmatprep.subr.bf16.mxu0 0
        %1162 = vmatpush1.bf16.xpose.msra.mxu0 0
        %1163 = vmatprep.subr.bf16.mxu0 0
        %1164 = vmatpush1.bf16.xpose.msra.mxu0 0
        %1165 = vmatprep.subr.bf16.mxu0 0
        %1166 = vmatpush1.bf16.xpose.msra.mxu0 0
        %1167 = vmatprep.subr.bf16.mxu0 0
        %1168 = vmatpush1.bf16.xpose.msra.mxu0 0
        %1169 = vmatprep.subr.bf16.mxu0 0
        %1170 = vmatpush1.bf16.xpose.msra.mxu0 0
        %1171 = vmatprep.subr.bf16.mxu0 0
        %1172 = vmatpush1.bf16.xpose.msra.mxu0 0
        %1173 = vmatprep.subr.bf16.mxu0 0
        %1174 = vmatpush1.bf16.xpose.msra.mxu0 0
        %1175 = vmatprep.subr.bf16.mxu0 0
        %1176 = vmatpush1.bf16.xpose.msra.mxu0 0
        %1177 = vmatprep.subr.bf16.mxu0 0
        %1178 = vmatpush1.bf16.xpose.msra.mxu0 0
        %1179 = vmatprep.subr.bf16.mxu0 0
        %1180 = vmatpush1.bf16.xpose.msra.mxu0 0
        %1181 = vmatprep.subr.bf16.mxu0 0
        %1182 = vmatpush1.bf16.xpose.msra.mxu0 0
        %1183 = vmatprep.mubr.bf16.mxu0 0
        %1184 = vmatmul.mubr.bf16.gmra.mrb[0].mxu0 %v1146
        %v1185 = vpop.f32.mrb[0].mxu0
        %v1186 = vadd.f32 0.0, %v1185
        %v1187 = vpop.f32.mrb[0].mxu0
        %v1188 = vpop.f32.mrb[0].mxu0
        %v1189 = vpop.f32.mrb[0].mxu0
        %1190 = vdwg.mxu0
        %1192 = vrot.lane.b32.xlu0 %v694, 96
        %v1193 = vpop.permute.xlu0 %1192
        %v1195 = vsel %vm703, %v694, 0
        %v1198 = vsel %vm703, %v1193, 0
        %1200 = vmatprep.subr.bf16.mxu0 0
        %1201 = vmatpush1.bf16.xpose.msra.mxu0 %v1198
        %1202 = vmatprep.subr.bf16.mxu0 0
        %1203 = vmatpush1.bf16.xpose.msra.mxu0 0
        %1204 = vmatprep.subr.bf16.mxu0 0
        %1205 = vmatpush1.bf16.xpose.msra.mxu0 0
        %1206 = vmatprep.subr.bf16.mxu0 0
        %1207 = vmatpush1.bf16.xpose.msra.mxu0 0
        %1208 = vmatprep.subr.bf16.mxu0 0
        %1209 = vmatpush1.bf16.xpose.msra.mxu0 0
        %1210 = vmatprep.subr.bf16.mxu0 0
        %1211 = vmatpush1.bf16.xpose.msra.mxu0 0
        %1212 = vmatprep.subr.bf16.mxu0 0
        %1213 = vmatpush1.bf16.xpose.msra.mxu0 0
        %1214 = vmatprep.subr.bf16.mxu0 0
        %1215 = vmatpush1.bf16.xpose.msra.mxu0 0
        %1216 = vmatprep.subr.bf16.mxu0 0
        %1217 = vmatpush1.bf16.xpose.msra.mxu0 0
        %1218 = vmatprep.subr.bf16.mxu0 0
        %1219 = vmatpush1.bf16.xpose.msra.mxu0 0
        %1220 = vmatprep.subr.bf16.mxu0 0
        %1221 = vmatpush1.bf16.xpose.msra.mxu0 0
        %1222 = vmatprep.subr.bf16.mxu0 0
        %1223 = vmatpush1.bf16.xpose.msra.mxu0 0
        %1224 = vmatprep.subr.bf16.mxu0 0
        %1225 = vmatpush1.bf16.xpose.msra.mxu0 0
        %1226 = vmatprep.subr.bf16.mxu0 0
        %1227 = vmatpush1.bf16.xpose.msra.mxu0 0
        %1228 = vmatprep.subr.bf16.mxu0 0
        %1229 = vmatpush1.bf16.xpose.msra.mxu0 0
        %1230 = vmatprep.subr.bf16.mxu0 0
        %1231 = vmatpush1.bf16.xpose.msra.mxu0 0
        %1232 = vmatprep.mubr.bf16.mxu0 0
        %1233 = vmatmul.mubr.bf16.gmra.mrb[0].mxu0 %v1195
        %v1234 = vpop.f32.mrb[0].mxu0
        %v1235 = vadd.f32 0.0, %v1234
        %v1236 = vpop.f32.mrb[0].mxu0
        %v1237 = vpop.f32.mrb[0].mxu0
        %v1238 = vpop.f32.mrb[0].mxu0
        %1239 = vdwg.mxu0
        %1241 = vrot.lane.b32.xlu0 %v695, 96
        %v1242 = vpop.permute.xlu0 %1241
        %v1244 = vsel %vm703, %v695, 0
        %v1247 = vsel %vm703, %v1242, 0
        %1249 = vmatprep.subr.bf16.mxu0 0
        %1250 = vmatpush1.bf16.xpose.msra.mxu0 %v1247
        %1251 = vmatprep.subr.bf16.mxu0 0
        %1252 = vmatpush1.bf16.xpose.msra.mxu0 0
        %1253 = vmatprep.subr.bf16.mxu0 0
        %1254 = vmatpush1.bf16.xpose.msra.mxu0 0
        %1255 = vmatprep.subr.bf16.mxu0 0
        %1256 = vmatpush1.bf16.xpose.msra.mxu0 0
        %1257 = vmatprep.subr.bf16.mxu0 0
        %1258 = vmatpush1.bf16.xpose.msra.mxu0 0
        %1259 = vmatprep.subr.bf16.mxu0 0
        %1260 = vmatpush1.bf16.xpose.msra.mxu0 0
        %1261 = vmatprep.subr.bf16.mxu0 0
        %1262 = vmatpush1.bf16.xpose.msra.mxu0 0
        %1263 = vmatprep.subr.bf16.mxu0 0
        %1264 = vmatpush1.bf16.xpose.msra.mxu0 0
        %1265 = vmatprep.subr.bf16.mxu0 0
        %1266 = vmatpush1.bf16.xpose.msra.mxu0 0
        %1267 = vmatprep.subr.bf16.mxu0 0
        %1268 = vmatpush1.bf16.xpose.msra.mxu0 0
        %1269 = vmatprep.subr.bf16.mxu0 0
        %1270 = vmatpush1.bf16.xpose.msra.mxu0 0
        %1271 = vmatprep.subr.bf16.mxu0 0
        %1272 = vmatpush1.bf16.xpose.msra.mxu0 0
        %1273 = vmatprep.subr.bf16.mxu0 0
        %1274 = vmatpush1.bf16.xpose.msra.mxu0 0
        %1275 = vmatprep.subr.bf16.mxu0 0
        %1276 = vmatpush1.bf16.xpose.msra.mxu0 0
        %1277 = vmatprep.subr.bf16.mxu0 0
        %1278 = vmatpush1.bf16.xpose.msra.mxu0 0
        %1279 = vmatprep.subr.bf16.mxu0 0
        %1280 = vmatpush1.bf16.xpose.msra.mxu0 0
        %1281 = vmatprep.mubr.bf16.mxu0 0
        %1282 = vmatmul.mubr.bf16.gmra.mrb[0].mxu0 %v1244
        %v1283 = vpop.f32.mrb[0].mxu0
        %v1284 = vadd.f32 0.0, %v1283
        %v1285 = vpop.f32.mrb[0].mxu0
        %v1286 = vpop.f32.mrb[0].mxu0
        %v1287 = vpop.f32.mrb[0].mxu0
        %1288 = vdwg.mxu0
        %1290 = vrot.lane.b32.xlu0 %v696, 96
        %v1291 = vpop.permute.xlu0 %1290
        %v1293 = vsel %vm703, %v696, 0
        %v1296 = vsel %vm703, %v1291, 0
        %1298 = vmatprep.subr.bf16.mxu0 0
        %1299 = vmatpush1.bf16.xpose.msra.mxu0 %v1296
        %1300 = vmatprep.subr.bf16.mxu0 0
        %1301 = vmatpush1.bf16.xpose.msra.mxu0 0
        %1302 = vmatprep.subr.bf16.mxu0 0
        %1303 = vmatpush1.bf16.xpose.msra.mxu0 0
        %1304 = vmatprep.subr.bf16.mxu0 0
        %1305 = vmatpush1.bf16.xpose.msra.mxu0 0
        %1306 = vmatprep.subr.bf16.mxu0 0
        %1307 = vmatpush1.bf16.xpose.msra.mxu0 0
        %1308 = vmatprep.subr.bf16.mxu0 0
        %1309 = vmatpush1.bf16.xpose.msra.mxu0 0
        %1310 = vmatprep.subr.bf16.mxu0 0
        %1311 = vmatpush1.bf16.xpose.msra.mxu0 0
        %1312 = vmatprep.subr.bf16.mxu0 0
        %1313 = vmatpush1.bf16.xpose.msra.mxu0 0
        %1314 = vmatprep.subr.bf16.mxu0 0
        %1315 = vmatpush1.bf16.xpose.msra.mxu0 0
        %1316 = vmatprep.subr.bf16.mxu0 0
        %1317 = vmatpush1.bf16.xpose.msra.mxu0 0
        %1318 = vmatprep.subr.bf16.mxu0 0
        %1319 = vmatpush1.bf16.xpose.msra.mxu0 0
        %1320 = vmatprep.subr.bf16.mxu0 0
        %1321 = vmatpush1.bf16.xpose.msra.mxu0 0
        %1322 = vmatprep.subr.bf16.mxu0 0
        %1323 = vmatpush1.bf16.xpose.msra.mxu0 0
        %1324 = vmatprep.subr.bf16.mxu0 0
        %1325 = vmatpush1.bf16.xpose.msra.mxu0 0
        %1326 = vmatprep.subr.bf16.mxu0 0
        %1327 = vmatpush1.bf16.xpose.msra.mxu0 0
        %1328 = vmatprep.subr.bf16.mxu0 0
        %1329 = vmatpush1.bf16.xpose.msra.mxu0 0
        %1330 = vmatprep.mubr.bf16.mxu0 0
        %1331 = vmatmul.mubr.bf16.gmra.mrb[0].mxu0 %v1293
        %v1332 = vpop.f32.mrb[0].mxu0
        %v1333 = vadd.f32 0.0, %v1332
        %v1334 = vpop.f32.mrb[0].mxu0
        %v1335 = vpop.f32.mrb[0].mxu0
        %v1336 = vpop.f32.mrb[0].mxu0
        %1337 = vdwg.mxu0
        %1339 = vrot.lane.b32.xlu0 %v697, 96
        %v1340 = vpop.permute.xlu0 %1339
        %v1342 = vsel %vm703, %v697, 0
        %v1345 = vsel %vm703, %v1340, 0
        %1347 = vmatprep.subr.bf16.mxu0 0
        %1348 = vmatpush1.bf16.xpose.msra.mxu0 %v1345
        %1349 = vmatprep.subr.bf16.mxu0 0
        %1350 = vmatpush1.bf16.xpose.msra.mxu0 0
        %1351 = vmatprep.subr.bf16.mxu0 0
        %1352 = vmatpush1.bf16.xpose.msra.mxu0 0
        %1353 = vmatprep.subr.bf16.mxu0 0
        %1354 = vmatpush1.bf16.xpose.msra.mxu0 0
        %1355 = vmatprep.subr.bf16.mxu0 0
        %1356 = vmatpush1.bf16.xpose.msra.mxu0 0
        %1357 = vmatprep.subr.bf16.mxu0 0
        %1358 = vmatpush1.bf16.xpose.msra.mxu0 0
        %1359 = vmatprep.subr.bf16.mxu0 0
        %1360 = vmatpush1.bf16.xpose.msra.mxu0 0
        %1361 = vmatprep.subr.bf16.mxu0 0
        %1362 = vmatpush1.bf16.xpose.msra.mxu0 0
        %1363 = vmatprep.subr.bf16.mxu0 0
        %1364 = vmatpush1.bf16.xpose.msra.mxu0 0
        %1365 = vmatprep.subr.bf16.mxu0 0
        %1366 = vmatpush1.bf16.xpose.msra.mxu0 0
        %1367 = vmatprep.subr.bf16.mxu0 0
        %1368 = vmatpush1.bf16.xpose.msra.mxu0 0
        %1369 = vmatprep.subr.bf16.mxu0 0
        %1370 = vmatpush1.bf16.xpose.msra.mxu0 0
        %1371 = vmatprep.subr.bf16.mxu0 0
        %1372 = vmatpush1.bf16.xpose.msra.mxu0 0
        %1373 = vmatprep.subr.bf16.mxu0 0
        %1374 = vmatpush1.bf16.xpose.msra.mxu0 0
        %1375 = vmatprep.subr.bf16.mxu0 0
        %1376 = vmatpush1.bf16.xpose.msra.mxu0 0
        %1377 = vmatprep.subr.bf16.mxu0 0
        %1378 = vmatpush1.bf16.xpose.msra.mxu0 0
        %1379 = vmatprep.mubr.bf16.mxu0 0
        %1380 = vmatmul.mubr.bf16.gmra.mrb[0].mxu0 %v1342
        %v1381 = vpop.f32.mrb[0].mxu0
        %v1382 = vadd.f32 0.0, %v1381
        %v1383 = vpop.f32.mrb[0].mxu0
        %v1384 = vpop.f32.mrb[0].mxu0
        %v1385 = vpop.f32.mrb[0].mxu0
        %1386 = vdwg.mxu0
        %1388 = vrot.lane.b32.xlu0 %v698, 96
        %v1389 = vpop.permute.xlu0 %1388
        %v1391 = vsel %vm703, %v698, 0
        %v1394 = vsel %vm703, %v1389, 0
        %1396 = vmatprep.subr.bf16.mxu0 0
        %1397 = vmatpush1.bf16.xpose.msra.mxu0 %v1394
        %1398 = vmatprep.subr.bf16.mxu0 0
        %1399 = vmatpush1.bf16.xpose.msra.mxu0 0
        %1400 = vmatprep.subr.bf16.mxu0 0
        %1401 = vmatpush1.bf16.xpose.msra.mxu0 0
        %1402 = vmatprep.subr.bf16.mxu0 0
        %1403 = vmatpush1.bf16.xpose.msra.mxu0 0
        %1404 = vmatprep.subr.bf16.mxu0 0
        %1405 = vmatpush1.bf16.xpose.msra.mxu0 0
        %1406 = vmatprep.subr.bf16.mxu0 0
        %1407 = vmatpush1.bf16.xpose.msra.mxu0 0
        %1408 = vmatprep.subr.bf16.mxu0 0
        %1409 = vmatpush1.bf16.xpose.msra.mxu0 0
        %1410 = vmatprep.subr.bf16.mxu0 0
        %1411 = vmatpush1.bf16.xpose.msra.mxu0 0
        %1412 = vmatprep.subr.bf16.mxu0 0
        %1413 = vmatpush1.bf16.xpose.msra.mxu0 0
        %1414 = vmatprep.subr.bf16.mxu0 0
        %1415 = vmatpush1.bf16.xpose.msra.mxu0 0
        %1416 = vmatprep.subr.bf16.mxu0 0
        %1417 = vmatpush1.bf16.xpose.msra.mxu0 0
        %1418 = vmatprep.subr.bf16.mxu0 0
        %1419 = vmatpush1.bf16.xpose.msra.mxu0 0
        %1420 = vmatprep.subr.bf16.mxu0 0
        %1421 = vmatpush1.bf16.xpose.msra.mxu0 0
        %1422 = vmatprep.subr.bf16.mxu0 0
        %1423 = vmatpush1.bf16.xpose.msra.mxu0 0
        %1424 = vmatprep.subr.bf16.mxu0 0
        %1425 = vmatpush1.bf16.xpose.msra.mxu0 0
        %1426 = vmatprep.subr.bf16.mxu0 0
        %1427 = vmatpush1.bf16.xpose.msra.mxu0 0
        %1428 = vmatprep.mubr.bf16.mxu0 0
        %1429 = vmatmul.mubr.bf16.gmra.mrb[0].mxu0 %v1391
        %v1430 = vpop.f32.mrb[0].mxu0
        %v1431 = vadd.f32 0.0, %v1430
        %v1432 = vpop.f32.mrb[0].mxu0
        %v1433 = vpop.f32.mrb[0].mxu0
        %v1434 = vpop.f32.mrb[0].mxu0
        %1435 = vdwg.mxu0
        %1437 = vrot.lane.b32.xlu0 %v699, 96
        %v1438 = vpop.permute.xlu0 %1437
        %v1440 = vsel %vm703, %v699, 0
        %v1443 = vsel %vm703, %v1438, 0
        %1445 = vmatprep.subr.bf16.mxu0 0
        %1446 = vmatpush1.bf16.xpose.msra.mxu0 %v1443
        %1447 = vmatprep.subr.bf16.mxu0 0
        %1448 = vmatpush1.bf16.xpose.msra.mxu0 0
        %1449 = vmatprep.subr.bf16.mxu0 0
        %1450 = vmatpush1.bf16.xpose.msra.mxu0 0
        %1451 = vmatprep.subr.bf16.mxu0 0
        %1452 = vmatpush1.bf16.xpose.msra.mxu0 0
        %1453 = vmatprep.subr.bf16.mxu0 0
        %1454 = vmatpush1.bf16.xpose.msra.mxu0 0
        %1455 = vmatprep.subr.bf16.mxu0 0
        %1456 = vmatpush1.bf16.xpose.msra.mxu0 0
        %1457 = vmatprep.subr.bf16.mxu0 0
        %1458 = vmatpush1.bf16.xpose.msra.mxu0 0
        %1459 = vmatprep.subr.bf16.mxu0 0
        %1460 = vmatpush1.bf16.xpose.msra.mxu0 0
        %1461 = vmatprep.subr.bf16.mxu0 0
        %1462 = vmatpush1.bf16.xpose.msra.mxu0 0
        %1463 = vmatprep.subr.bf16.mxu0 0
        %1464 = vmatpush1.bf16.xpose.msra.mxu0 0
        %1465 = vmatprep.subr.bf16.mxu0 0
        %1466 = vmatpush1.bf16.xpose.msra.mxu0 0
        %1467 = vmatprep.subr.bf16.mxu0 0
        %1468 = vmatpush1.bf16.xpose.msra.mxu0 0
        %1469 = vmatprep.subr.bf16.mxu0 0
        %1470 = vmatpush1.bf16.xpose.msra.mxu0 0
        %1471 = vmatprep.subr.bf16.mxu0 0
        %1472 = vmatpush1.bf16.xpose.msra.mxu0 0
        %1473 = vmatprep.subr.bf16.mxu0 0
        %1474 = vmatpush1.bf16.xpose.msra.mxu0 0
        %1475 = vmatprep.subr.bf16.mxu0 0
        %1476 = vmatpush1.bf16.xpose.msra.mxu0 0
        %1477 = vmatprep.mubr.bf16.mxu0 0
        %1478 = vmatmul.mubr.bf16.gmra.mrb[0].mxu0 %v1440
        %v1479 = vpop.f32.mrb[0].mxu0
        %v1480 = vadd.f32 0.0, %v1479
        %v1481 = vpop.f32.mrb[0].mxu0
        %v1482 = vpop.f32.mrb[0].mxu0
        %v1483 = vpop.f32.mrb[0].mxu0
        %1484 = vdwg.mxu0
        %v1485 = vsel %vm703, %v745, -inf
        %1486 = vmax.xlane.f32.xlu0 %v1485
        %v1487 = vpop.xlane.xlu0 %1486
        %v1488 = vsel %vm703, %v794, -inf
        %1489 = vmax.xlane.f32.xlu0 %v1488
        %v1490 = vpop.xlane.xlu0 %1489
        %v1491 = vsel %vm703, %v843, -inf
        %1492 = vmax.xlane.f32.xlu0 %v1491
        %v1493 = vpop.xlane.xlu0 %1492
        %v1494 = vsel %vm703, %v892, -inf
        %1495 = vmax.xlane.f32.xlu0 %v1494
        %v1496 = vpop.xlane.xlu0 %1495
        %v1497 = vsel %vm703, %v941, -inf
        %1498 = vmax.xlane.f32.xlu0 %v1497
        %v1499 = vpop.xlane.xlu0 %1498
        %v1500 = vsel %vm703, %v990, -inf
        %1501 = vmax.xlane.f32.xlu0 %v1500
        %v1502 = vpop.xlane.xlu0 %1501
        %v1503 = vsel %vm703, %v1039, -inf
        %1504 = vmax.xlane.f32.xlu0 %v1503
        %v1505 = vpop.xlane.xlu0 %1504
        %v1506 = vsel %vm703, %v1088, -inf
        %1507 = vmax.xlane.f32.xlu0 %v1506
        %v1508 = vpop.xlane.xlu0 %1507
        %v1509 = vsel %vm703, %v1137, -inf
        %1510 = vmax.xlane.f32.xlu0 %v1509
        %v1511 = vpop.xlane.xlu0 %1510
        %v1512 = vsel %vm703, %v1186, -inf
        %1513 = vmax.xlane.f32.xlu0 %v1512
        %v1514 = vpop.xlane.xlu0 %1513
        %v1515 = vsel %vm703, %v1235, -inf
        %1516 = vmax.xlane.f32.xlu0 %v1515
        %v1517 = vpop.xlane.xlu0 %1516
        %v1518 = vsel %vm703, %v1284, -inf
        %1519 = vmax.xlane.f32.xlu0 %v1518
        %v1520 = vpop.xlane.xlu0 %1519
        %v1521 = vsel %vm703, %v1333, -inf
        %1522 = vmax.xlane.f32.xlu0 %v1521
        %v1523 = vpop.xlane.xlu0 %1522
        %v1524 = vsel %vm703, %v1382, -inf
        %1525 = vmax.xlane.f32.xlu0 %v1524
        %v1526 = vpop.xlane.xlu0 %1525
        %v1527 = vsel %vm703, %v1431, -inf
        %1528 = vmax.xlane.f32.xlu0 %v1527
        %v1529 = vpop.xlane.xlu0 %1528
        %v1530 = vsel %vm703, %v1480, -inf
        %1531 = vmax.xlane.f32.xlu0 %v1530
        %v1532 = vpop.xlane.xlu0 %1531
        %v1533 = vsub.f32 %v745, %v1487
        %v1534 = vsub.f32 %v794, %v1490
        %v1535 = vsub.f32 %v843, %v1493
        %v1536 = vsub.f32 %v892, %v1496
        %v1537 = vsub.f32 %v941, %v1499
        %v1538 = vsub.f32 %v990, %v1502
        %v1539 = vsub.f32 %v1039, %v1505
        %v1540 = vsub.f32 %v1088, %v1508
        %v1541 = vsub.f32 %v1137, %v1511
        %v1542 = vsub.f32 %v1186, %v1514
        %v1543 = vsub.f32 %v1235, %v1517
        %v1544 = vsub.f32 %v1284, %v1520
        %v1545 = vsub.f32 %v1333, %v1523
        %v1546 = vsub.f32 %v1382, %v1526
        %v1547 = vsub.f32 %v1431, %v1529
        %v1548 = vsub.f32 %v1480, %v1532
        %v1549 = vmul.f32 %v1533, 1.442695
        %v1550 = vpow.pop %v1549
        %v1551 = vmul.f32 %v1534, 1.442695
        %v1552 = vpow.pop %v1551
        %v1553 = vmul.f32 %v1535, 1.442695
        %v1554 = vpow.pop %v1553
        %v1555 = vmul.f32 %v1536, 1.442695
        %v1556 = vpow.pop %v1555
        %v1557 = vmul.f32 %v1537, 1.442695
        %v1558 = vpow.pop %v1557
        %v1559 = vmul.f32 %v1538, 1.442695
        %v1560 = vpow.pop %v1559
        %v1561 = vmul.f32 %v1539, 1.442695
        %v1562 = vpow.pop %v1561
        %v1563 = vmul.f32 %v1540, 1.442695
        %v1564 = vpow.pop %v1563
        %v1565 = vmul.f32 %v1541, 1.442695
        %v1566 = vpow.pop %v1565
        %v1567 = vmul.f32 %v1542, 1.442695
        %v1568 = vpow.pop %v1567
        %v1569 = vmul.f32 %v1543, 1.442695
        %v1570 = vpow.pop %v1569
        %v1571 = vmul.f32 %v1544, 1.442695
        %v1572 = vpow.pop %v1571
        %v1573 = vmul.f32 %v1545, 1.442695
        %v1574 = vpow.pop %v1573
        %v1575 = vmul.f32 %v1546, 1.442695
        %v1576 = vpow.pop %v1575
        %v1577 = vmul.f32 %v1547, 1.442695
        %v1578 = vpow.pop %v1577
        %v1579 = vmul.f32 %v1548, 1.442695
        %v1580 = vpow.pop %v1579
        %v1581 = vsel %vm703, %v1550, 0.0
        %1582 = vadd.xlane.f32.xlu0 %v1581
        %v1583 = vpop.xlane.xlu0 %1582
        %v1584 = vsel %vm703, %v1552, 0.0
        %1585 = vadd.xlane.f32.xlu0 %v1584
        %v1586 = vpop.xlane.xlu0 %1585
        %v1587 = vsel %vm703, %v1554, 0.0
        %1588 = vadd.xlane.f32.xlu0 %v1587
        %v1589 = vpop.xlane.xlu0 %1588
        %v1590 = vsel %vm703, %v1556, 0.0
        %1591 = vadd.xlane.f32.xlu0 %v1590
        %v1592 = vpop.xlane.xlu0 %1591
        %v1593 = vsel %vm703, %v1558, 0.0
        %1594 = vadd.xlane.f32.xlu0 %v1593
        %v1595 = vpop.xlane.xlu0 %1594
        %v1596 = vsel %vm703, %v1560, 0.0
        %1597 = vadd.xlane.f32.xlu0 %v1596
        %v1598 = vpop.xlane.xlu0 %1597
        %v1599 = vsel %vm703, %v1562, 0.0
        %1600 = vadd.xlane.f32.xlu0 %v1599
        %v1601 = vpop.xlane.xlu0 %1600
        %v1602 = vsel %vm703, %v1564, 0.0
        %1603 = vadd.xlane.f32.xlu0 %v1602
        %v1604 = vpop.xlane.xlu0 %1603
        %v1605 = vsel %vm703, %v1566, 0.0
        %1606 = vadd.xlane.f32.xlu0 %v1605
        %v1607 = vpop.xlane.xlu0 %1606
        %v1608 = vsel %vm703, %v1568, 0.0
        %1609 = vadd.xlane.f32.xlu0 %v1608
        %v1610 = vpop.xlane.xlu0 %1609
        %v1611 = vsel %vm703, %v1570, 0.0
        %1612 = vadd.xlane.f32.xlu0 %v1611
        %v1613 = vpop.xlane.xlu0 %1612
        %v1614 = vsel %vm703, %v1572, 0.0
        %1615 = vadd.xlane.f32.xlu0 %v1614
        %v1616 = vpop.xlane.xlu0 %1615
        %v1617 = vsel %vm703, %v1574, 0.0
        %1618 = vadd.xlane.f32.xlu0 %v1617
        %v1619 = vpop.xlane.xlu0 %1618
        %v1620 = vsel %vm703, %v1576, 0.0
        %1621 = vadd.xlane.f32.xlu0 %v1620
        %v1622 = vpop.xlane.xlu0 %1621
        %v1623 = vsel %vm703, %v1578, 0.0
        %1624 = vadd.xlane.f32.xlu0 %v1623
        %v1625 = vpop.xlane.xlu0 %1624
        %v1626 = vsel %vm703, %v1580, 0.0
        %1627 = vadd.xlane.f32.xlu0 %v1626
        %v1628 = vpop.xlane.xlu0 %1627
        %v1629 = vrcp.pop %v1583
        %v1630 = vrcp.pop %v1586
        %v1631 = vrcp.pop %v1589
        %v1632 = vrcp.pop %v1592
        %v1633 = vrcp.pop %v1595
        %v1634 = vrcp.pop %v1598
        %v1635 = vrcp.pop %v1601
        %v1636 = vrcp.pop %v1604
        %v1637 = vrcp.pop %v1607
        %v1638 = vrcp.pop %v1610
        %v1639 = vrcp.pop %v1613
        %v1640 = vrcp.pop %v1616
        %v1641 = vrcp.pop %v1619
        %v1642 = vrcp.pop %v1622
        %v1643 = vrcp.pop %v1625
        %v1644 = vrcp.pop %v1628
        %v1645 = vmul.f32 %v1550, %v1629
        %v1646 = vmul.f32 %v1552, %v1630
        %v1647 = vmul.f32 %v1554, %v1631
        %v1648 = vmul.f32 %v1556, %v1632
        %v1649 = vmul.f32 %v1558, %v1633
        %v1650 = vmul.f32 %v1560, %v1634
        %v1651 = vmul.f32 %v1562, %v1635
        %v1652 = vmul.f32 %v1564, %v1636
        %v1653 = vmul.f32 %v1566, %v1637
        %v1654 = vmul.f32 %v1568, %v1638
        %v1655 = vmul.f32 %v1570, %v1639
        %v1656 = vmul.f32 %v1572, %v1640
        %v1657 = vmul.f32 %v1574, %v1641
        %v1658 = vmul.f32 %v1576, %v1642
        %v1659 = vmul.f32 %v1578, %v1643
        %v1660 = vmul.f32 %v1580, %v1644
        %v1661 = vpack.c.bf16 %v1645, %v1645
        %v1662 = vpack.c.bf16 %v1646, %v1646
        %v1663 = vpack.c.bf16 %v1647, %v1647
        %v1664 = vpack.c.bf16 %v1648, %v1648
        %v1665 = vpack.c.bf16 %v1649, %v1649
        %v1666 = vpack.c.bf16 %v1650, %v1650
        %v1667 = vpack.c.bf16 %v1651, %v1651
        %v1668 = vpack.c.bf16 %v1652, %v1652
        %v1669 = vpack.c.bf16 %v1653, %v1653
        %v1670 = vpack.c.bf16 %v1654, %v1654
        %v1671 = vpack.c.bf16 %v1655, %v1655
        %v1672 = vpack.c.bf16 %v1656, %v1656
        %v1673 = vpack.c.bf16 %v1657, %v1657
        %v1674 = vpack.c.bf16 %v1658, %v1658
        %v1675 = vpack.c.bf16 %v1659, %v1659
        %v1676 = vpack.c.bf16 %v1660, %v1660
        %1677 = vrot.lane.b32.xlu0 %v684, 64
        %v1678 = vpop.permute.xlu0 %1677
        %v1680 = vsel %vm703, %v1661, 0
        %vm1682 = vcmask 1043456
        %v1684 = vsel %vm1682, %v1678, 0
        %1686 = vmatprep.subr.bf16.mxu0 0
        %1687 = vmatpush1.bf16.msra.mxu0 %v1684
        %1688 = vmatprep.subr.bf16.mxu0 0
        %1689 = vmatpush1.bf16.msra.mxu0 0
        %1690 = vmatprep.subr.bf16.mxu0 0
        %1691 = vmatpush1.bf16.msra.mxu0 0
        %1692 = vmatprep.subr.bf16.mxu0 0
        %1693 = vmatpush1.bf16.msra.mxu0 0
        %1694 = vmatprep.subr.bf16.mxu0 0
        %1695 = vmatpush1.bf16.msra.mxu0 0
        %1696 = vmatprep.subr.bf16.mxu0 0
        %1697 = vmatpush1.bf16.msra.mxu0 0
        %1698 = vmatprep.subr.bf16.mxu0 0
        %1699 = vmatpush1.bf16.msra.mxu0 0
        %1700 = vmatprep.subr.bf16.mxu0 0
        %1701 = vmatpush1.bf16.msra.mxu0 0
        %1702 = vmatprep.subr.bf16.mxu0 0
        %1703 = vmatpush1.bf16.msra.mxu0 0
        %1704 = vmatprep.subr.bf16.mxu0 0
        %1705 = vmatpush1.bf16.msra.mxu0 0
        %1706 = vmatprep.subr.bf16.mxu0 0
        %1707 = vmatpush1.bf16.msra.mxu0 0
        %1708 = vmatprep.subr.bf16.mxu0 0
        %1709 = vmatpush1.bf16.msra.mxu0 0
        %1710 = vmatprep.subr.bf16.mxu0 0
        %1711 = vmatpush1.bf16.msra.mxu0 0
        %1712 = vmatprep.subr.bf16.mxu0 0
        %1713 = vmatpush1.bf16.msra.mxu0 0
        %1714 = vmatprep.subr.bf16.mxu0 0
        %1715 = vmatpush1.bf16.msra.mxu0 0
        %1716 = vmatprep.subr.bf16.mxu0 0
        %1717 = vmatpush1.bf16.msra.mxu0 0
        %1718 = vmatprep.mubr.bf16.mxu0 0
        %1719 = vmatmul.mubr.bf16.gmra.mrb[0].mxu0 %v1680
        %v1720 = vpop.f32.mrb[0].mxu0
        %v1721 = vadd.f32 0.0, %v1720
        %v1722 = vpop.f32.mrb[0].mxu0
        %v1723 = vpop.f32.mrb[0].mxu0
        %v1724 = vpop.f32.mrb[0].mxu0
        %1725 = vdwg.mxu0
        %1726 = vrot.lane.b32.xlu0 %v685, 64
        %v1727 = vpop.permute.xlu0 %1726
        %v1729 = vsel %vm703, %v1662, 0
        %v1732 = vsel %vm1682, %v1727, 0
        %1734 = vmatprep.subr.bf16.mxu0 0
        %1735 = vmatpush1.bf16.msra.mxu0 %v1732
        %1736 = vmatprep.subr.bf16.mxu0 0
        %1737 = vmatpush1.bf16.msra.mxu0 0
        %1738 = vmatprep.subr.bf16.mxu0 0
        %1739 = vmatpush1.bf16.msra.mxu0 0
        %1740 = vmatprep.subr.bf16.mxu0 0
        %1741 = vmatpush1.bf16.msra.mxu0 0
        %1742 = vmatprep.subr.bf16.mxu0 0
        %1743 = vmatpush1.bf16.msra.mxu0 0
        %1744 = vmatprep.subr.bf16.mxu0 0
        %1745 = vmatpush1.bf16.msra.mxu0 0
        %1746 = vmatprep.subr.bf16.mxu0 0
        %1747 = vmatpush1.bf16.msra.mxu0 0
        %1748 = vmatprep.subr.bf16.mxu0 0
        %1749 = vmatpush1.bf16.msra.mxu0 0
        %1750 = vmatprep.subr.bf16.mxu0 0
        %1751 = vmatpush1.bf16.msra.mxu0 0
        %1752 = vmatprep.subr.bf16.mxu0 0
        %1753 = vmatpush1.bf16.msra.mxu0 0
        %1754 = vmatprep.subr.bf16.mxu0 0
        %1755 = vmatpush1.bf16.msra.mxu0 0
        %1756 = vmatprep.subr.bf16.mxu0 0
        %1757 = vmatpush1.bf16.msra.mxu0 0
        %1758 = vmatprep.subr.bf16.mxu0 0
        %1759 = vmatpush1.bf16.msra.mxu0 0
        %1760 = vmatprep.subr.bf16.mxu0 0
        %1761 = vmatpush1.bf16.msra.mxu0 0
        %1762 = vmatprep.subr.bf16.mxu0 0
        %1763 = vmatpush1.bf16.msra.mxu0 0
        %1764 = vmatprep.subr.bf16.mxu0 0
        %1765 = vmatpush1.bf16.msra.mxu0 0
        %1766 = vmatprep.mubr.bf16.mxu0 0
        %1767 = vmatmul.mubr.bf16.gmra.mrb[0].mxu0 %v1729
        %v1768 = vpop.f32.mrb[0].mxu0
        %v1769 = vadd.f32 0.0, %v1768
        %v1770 = vpop.f32.mrb[0].mxu0
        %v1771 = vpop.f32.mrb[0].mxu0
        %v1772 = vpop.f32.mrb[0].mxu0
        %1773 = vdwg.mxu0
        %1774 = vrot.lane.b32.xlu0 %v686, 64
        %v1775 = vpop.permute.xlu0 %1774
        %v1777 = vsel %vm703, %v1663, 0
        %v1780 = vsel %vm1682, %v1775, 0
        %1782 = vmatprep.subr.bf16.mxu0 0
        %1783 = vmatpush1.bf16.msra.mxu0 %v1780
        %1784 = vmatprep.subr.bf16.mxu0 0
        %1785 = vmatpush1.bf16.msra.mxu0 0
        %1786 = vmatprep.subr.bf16.mxu0 0
        %1787 = vmatpush1.bf16.msra.mxu0 0
        %1788 = vmatprep.subr.bf16.mxu0 0
        %1789 = vmatpush1.bf16.msra.mxu0 0
        %1790 = vmatprep.subr.bf16.mxu0 0
        %1791 = vmatpush1.bf16.msra.mxu0 0
        %1792 = vmatprep.subr.bf16.mxu0 0
        %1793 = vmatpush1.bf16.msra.mxu0 0
        %1794 = vmatprep.subr.bf16.mxu0 0
        %1795 = vmatpush1.bf16.msra.mxu0 0
        %1796 = vmatprep.subr.bf16.mxu0 0
        %1797 = vmatpush1.bf16.msra.mxu0 0
        %1798 = vmatprep.subr.bf16.mxu0 0
        %1799 = vmatpush1.bf16.msra.mxu0 0
        %1800 = vmatprep.subr.bf16.mxu0 0
        %1801 = vmatpush1.bf16.msra.mxu0 0
        %1802 = vmatprep.subr.bf16.mxu0 0
        %1803 = vmatpush1.bf16.msra.mxu0 0
        %1804 = vmatprep.subr.bf16.mxu0 0
        %1805 = vmatpush1.bf16.msra.mxu0 0
        %1806 = vmatprep.subr.bf16.mxu0 0
        %1807 = vmatpush1.bf16.msra.mxu0 0
        %1808 = vmatprep.subr.bf16.mxu0 0
        %1809 = vmatpush1.bf16.msra.mxu0 0
        %1810 = vmatprep.subr.bf16.mxu0 0
        %1811 = vmatpush1.bf16.msra.mxu0 0
        %1812 = vmatprep.subr.bf16.mxu0 0
        %1813 = vmatpush1.bf16.msra.mxu0 0
        %1814 = vmatprep.mubr.bf16.mxu0 0
        %1815 = vmatmul.mubr.bf16.gmra.mrb[0].mxu0 %v1777
        %v1816 = vpop.f32.mrb[0].mxu0
        %v1817 = vadd.f32 0.0, %v1816
        %v1818 = vpop.f32.mrb[0].mxu0
        %v1819 = vpop.f32.mrb[0].mxu0
        %v1820 = vpop.f32.mrb[0].mxu0
        %1821 = vdwg.mxu0
        %1822 = vrot.lane.b32.xlu0 %v687, 64
        %v1823 = vpop.permute.xlu0 %1822
        %v1825 = vsel %vm703, %v1664, 0
        %v1828 = vsel %vm1682, %v1823, 0
        %1830 = vmatprep.subr.bf16.mxu0 0
        %1831 = vmatpush1.bf16.msra.mxu0 %v1828
        %1832 = vmatprep.subr.bf16.mxu0 0
        %1833 = vmatpush1.bf16.msra.mxu0 0
        %1834 = vmatprep.subr.bf16.mxu0 0
        %1835 = vmatpush1.bf16.msra.mxu0 0
        %1836 = vmatprep.subr.bf16.mxu0 0
        %1837 = vmatpush1.bf16.msra.mxu0 0
        %1838 = vmatprep.subr.bf16.mxu0 0
        %1839 = vmatpush1.bf16.msra.mxu0 0
        %1840 = vmatprep.subr.bf16.mxu0 0
        %1841 = vmatpush1.bf16.msra.mxu0 0
        %1842 = vmatprep.subr.bf16.mxu0 0
        %1843 = vmatpush1.bf16.msra.mxu0 0
        %1844 = vmatprep.subr.bf16.mxu0 0
        %1845 = vmatpush1.bf16.msra.mxu0 0
        %1846 = vmatprep.subr.bf16.mxu0 0
        %1847 = vmatpush1.bf16.msra.mxu0 0
        %1848 = vmatprep.subr.bf16.mxu0 0
        %1849 = vmatpush1.bf16.msra.mxu0 0
        %1850 = vmatprep.subr.bf16.mxu0 0
        %1851 = vmatpush1.bf16.msra.mxu0 0
        %1852 = vmatprep.subr.bf16.mxu0 0
        %1853 = vmatpush1.bf16.msra.mxu0 0
        %1854 = vmatprep.subr.bf16.mxu0 0
        %1855 = vmatpush1.bf16.msra.mxu0 0
        %1856 = vmatprep.subr.bf16.mxu0 0
        %1857 = vmatpush1.bf16.msra.mxu0 0
        %1858 = vmatprep.subr.bf16.mxu0 0
        %1859 = vmatpush1.bf16.msra.mxu0 0
        %1860 = vmatprep.subr.bf16.mxu0 0
        %1861 = vmatpush1.bf16.msra.mxu0 0
        %1862 = vmatprep.mubr.bf16.mxu0 0
        %1863 = vmatmul.mubr.bf16.gmra.mrb[0].mxu0 %v1825
        %v1864 = vpop.f32.mrb[0].mxu0
        %v1865 = vadd.f32 0.0, %v1864
        %v1866 = vpop.f32.mrb[0].mxu0
        %v1867 = vpop.f32.mrb[0].mxu0
        %v1868 = vpop.f32.mrb[0].mxu0
        %1869 = vdwg.mxu0
        %1870 = vrot.lane.b32.xlu0 %v688, 64
        %v1871 = vpop.permute.xlu0 %1870
        %v1873 = vsel %vm703, %v1665, 0
        %v1876 = vsel %vm1682, %v1871, 0
        %1878 = vmatprep.subr.bf16.mxu0 0
        %1879 = vmatpush1.bf16.msra.mxu0 %v1876
        %1880 = vmatprep.subr.bf16.mxu0 0
        %1881 = vmatpush1.bf16.msra.mxu0 0
        %1882 = vmatprep.subr.bf16.mxu0 0
        %1883 = vmatpush1.bf16.msra.mxu0 0
        %1884 = vmatprep.subr.bf16.mxu0 0
        %1885 = vmatpush1.bf16.msra.mxu0 0
        %1886 = vmatprep.subr.bf16.mxu0 0
        %1887 = vmatpush1.bf16.msra.mxu0 0
        %1888 = vmatprep.subr.bf16.mxu0 0
        %1889 = vmatpush1.bf16.msra.mxu0 0
        %1890 = vmatprep.subr.bf16.mxu0 0
        %1891 = vmatpush1.bf16.msra.mxu0 0
        %1892 = vmatprep.subr.bf16.mxu0 0
        %1893 = vmatpush1.bf16.msra.mxu0 0
        %1894 = vmatprep.subr.bf16.mxu0 0
        %1895 = vmatpush1.bf16.msra.mxu0 0
        %1896 = vmatprep.subr.bf16.mxu0 0
        %1897 = vmatpush1.bf16.msra.mxu0 0
        %1898 = vmatprep.subr.bf16.mxu0 0
        %1899 = vmatpush1.bf16.msra.mxu0 0
        %1900 = vmatprep.subr.bf16.mxu0 0
        %1901 = vmatpush1.bf16.msra.mxu0 0
        %1902 = vmatprep.subr.bf16.mxu0 0
        %1903 = vmatpush1.bf16.msra.mxu0 0
        %1904 = vmatprep.subr.bf16.mxu0 0
        %1905 = vmatpush1.bf16.msra.mxu0 0
        %1906 = vmatprep.subr.bf16.mxu0 0
        %1907 = vmatpush1.bf16.msra.mxu0 0
        %1908 = vmatprep.subr.bf16.mxu0 0
        %1909 = vmatpush1.bf16.msra.mxu0 0
        %1910 = vmatprep.mubr.bf16.mxu0 0
        %1911 = vmatmul.mubr.bf16.gmra.mrb[0].mxu0 %v1873
        %v1912 = vpop.f32.mrb[0].mxu0
        %v1913 = vadd.f32 0.0, %v1912
        %v1914 = vpop.f32.mrb[0].mxu0
        %v1915 = vpop.f32.mrb[0].mxu0
        %v1916 = vpop.f32.mrb[0].mxu0
        %1917 = vdwg.mxu0
        %1918 = vrot.lane.b32.xlu0 %v689, 64
        %v1919 = vpop.permute.xlu0 %1918
        %v1921 = vsel %vm703, %v1666, 0
        %v1924 = vsel %vm1682, %v1919, 0
        %1926 = vmatprep.subr.bf16.mxu0 0
        %1927 = vmatpush1.bf16.msra.mxu0 %v1924
        %1928 = vmatprep.subr.bf16.mxu0 0
        %1929 = vmatpush1.bf16.msra.mxu0 0
        %1930 = vmatprep.subr.bf16.mxu0 0
        %1931 = vmatpush1.bf16.msra.mxu0 0
        %1932 = vmatprep.subr.bf16.mxu0 0
        %1933 = vmatpush1.bf16.msra.mxu0 0
        %1934 = vmatprep.subr.bf16.mxu0 0
        %1935 = vmatpush1.bf16.msra.mxu0 0
        %1936 = vmatprep.subr.bf16.mxu0 0
        %1937 = vmatpush1.bf16.msra.mxu0 0
        %1938 = vmatprep.subr.bf16.mxu0 0
        %1939 = vmatpush1.bf16.msra.mxu0 0
        %1940 = vmatprep.subr.bf16.mxu0 0
        %1941 = vmatpush1.bf16.msra.mxu0 0
        %1942 = vmatprep.subr.bf16.mxu0 0
        %1943 = vmatpush1.bf16.msra.mxu0 0
        %1944 = vmatprep.subr.bf16.mxu0 0
        %1945 = vmatpush1.bf16.msra.mxu0 0
        %1946 = vmatprep.subr.bf16.mxu0 0
        %1947 = vmatpush1.bf16.msra.mxu0 0
        %1948 = vmatprep.subr.bf16.mxu0 0
        %1949 = vmatpush1.bf16.msra.mxu0 0
        %1950 = vmatprep.subr.bf16.mxu0 0
        %1951 = vmatpush1.bf16.msra.mxu0 0
        %1952 = vmatprep.subr.bf16.mxu0 0
        %1953 = vmatpush1.bf16.msra.mxu0 0
        %1954 = vmatprep.subr.bf16.mxu0 0
        %1955 = vmatpush1.bf16.msra.mxu0 0
        %1956 = vmatprep.subr.bf16.mxu0 0
        %1957 = vmatpush1.bf16.msra.mxu0 0
        %1958 = vmatprep.mubr.bf16.mxu0 0
        %1959 = vmatmul.mubr.bf16.gmra.mrb[0].mxu0 %v1921
        %v1960 = vpop.f32.mrb[0].mxu0
        %v1961 = vadd.f32 0.0, %v1960
        %v1962 = vpop.f32.mrb[0].mxu0
        %v1963 = vpop.f32.mrb[0].mxu0
        %v1964 = vpop.f32.mrb[0].mxu0
        %1965 = vdwg.mxu0
        %1966 = vrot.lane.b32.xlu0 %v690, 64
        %v1967 = vpop.permute.xlu0 %1966
        %v1969 = vsel %vm703, %v1667, 0
        %v1972 = vsel %vm1682, %v1967, 0
        %1974 = vmatprep.subr.bf16.mxu0 0
        %1975 = vmatpush1.bf16.msra.mxu0 %v1972
        %1976 = vmatprep.subr.bf16.mxu0 0
        %1977 = vmatpush1.bf16.msra.mxu0 0
        %1978 = vmatprep.subr.bf16.mxu0 0
        %1979 = vmatpush1.bf16.msra.mxu0 0
        %1980 = vmatprep.subr.bf16.mxu0 0
        %1981 = vmatpush1.bf16.msra.mxu0 0
        %1982 = vmatprep.subr.bf16.mxu0 0
        %1983 = vmatpush1.bf16.msra.mxu0 0
        %1984 = vmatprep.subr.bf16.mxu0 0
        %1985 = vmatpush1.bf16.msra.mxu0 0
        %1986 = vmatprep.subr.bf16.mxu0 0
        %1987 = vmatpush1.bf16.msra.mxu0 0
        %1988 = vmatprep.subr.bf16.mxu0 0
        %1989 = vmatpush1.bf16.msra.mxu0 0
        %1990 = vmatprep.subr.bf16.mxu0 0
        %1991 = vmatpush1.bf16.msra.mxu0 0
        %1992 = vmatprep.subr.bf16.mxu0 0
        %1993 = vmatpush1.bf16.msra.mxu0 0
        %1994 = vmatprep.subr.bf16.mxu0 0
        %1995 = vmatpush1.bf16.msra.mxu0 0
        %1996 = vmatprep.subr.bf16.mxu0 0
        %1997 = vmatpush1.bf16.msra.mxu0 0
        %1998 = vmatprep.subr.bf16.mxu0 0
        %1999 = vmatpush1.bf16.msra.mxu0 0
        %2000 = vmatprep.subr.bf16.mxu0 0
        %2001 = vmatpush1.bf16.msra.mxu0 0
        %2002 = vmatprep.subr.bf16.mxu0 0
        %2003 = vmatpush1.bf16.msra.mxu0 0
        %2004 = vmatprep.subr.bf16.mxu0 0
        %2005 = vmatpush1.bf16.msra.mxu0 0
        %2006 = vmatprep.mubr.bf16.mxu0 0
        %2007 = vmatmul.mubr.bf16.gmra.mrb[0].mxu0 %v1969
        %v2008 = vpop.f32.mrb[0].mxu0
        %v2009 = vadd.f32 0.0, %v2008
        %v2010 = vpop.f32.mrb[0].mxu0
        %v2011 = vpop.f32.mrb[0].mxu0
        %v2012 = vpop.f32.mrb[0].mxu0
        %2013 = vdwg.mxu0
        %2014 = vrot.lane.b32.xlu0 %v691, 64
        %v2015 = vpop.permute.xlu0 %2014
        %v2017 = vsel %vm703, %v1668, 0
        %v2020 = vsel %vm1682, %v2015, 0
        %2022 = vmatprep.subr.bf16.mxu0 0
        %2023 = vmatpush1.bf16.msra.mxu0 %v2020
        %2024 = vmatprep.subr.bf16.mxu0 0
        %2025 = vmatpush1.bf16.msra.mxu0 0
        %2026 = vmatprep.subr.bf16.mxu0 0
        %2027 = vmatpush1.bf16.msra.mxu0 0
        %2028 = vmatprep.subr.bf16.mxu0 0
        %2029 = vmatpush1.bf16.msra.mxu0 0
        %2030 = vmatprep.subr.bf16.mxu0 0
        %2031 = vmatpush1.bf16.msra.mxu0 0
        %2032 = vmatprep.subr.bf16.mxu0 0
        %2033 = vmatpush1.bf16.msra.mxu0 0
        %2034 = vmatprep.subr.bf16.mxu0 0
        %2035 = vmatpush1.bf16.msra.mxu0 0
        %2036 = vmatprep.subr.bf16.mxu0 0
        %2037 = vmatpush1.bf16.msra.mxu0 0
        %2038 = vmatprep.subr.bf16.mxu0 0
        %2039 = vmatpush1.bf16.msra.mxu0 0
        %2040 = vmatprep.subr.bf16.mxu0 0
        %2041 = vmatpush1.bf16.msra.mxu0 0
        %2042 = vmatprep.subr.bf16.mxu0 0
        %2043 = vmatpush1.bf16.msra.mxu0 0
        %2044 = vmatprep.subr.bf16.mxu0 0
        %2045 = vmatpush1.bf16.msra.mxu0 0
        %2046 = vmatprep.subr.bf16.mxu0 0
        %2047 = vmatpush1.bf16.msra.mxu0 0
        %2048 = vmatprep.subr.bf16.mxu0 0
        %2049 = vmatpush1.bf16.msra.mxu0 0
        %2050 = vmatprep.subr.bf16.mxu0 0
        %2051 = vmatpush1.bf16.msra.mxu0 0
        %2052 = vmatprep.subr.bf16.mxu0 0
        %2053 = vmatpush1.bf16.msra.mxu0 0
        %2054 = vmatprep.mubr.bf16.mxu0 0
        %2055 = vmatmul.mubr.bf16.gmra.mrb[0].mxu0 %v2017
        %v2056 = vpop.f32.mrb[0].mxu0
        %v2057 = vadd.f32 0.0, %v2056
        %v2058 = vpop.f32.mrb[0].mxu0
        %v2059 = vpop.f32.mrb[0].mxu0
        %v2060 = vpop.f32.mrb[0].mxu0
        %2061 = vdwg.mxu0
        %2062 = vrot.lane.b32.xlu0 %v692, 64
        %v2063 = vpop.permute.xlu0 %2062
        %v2065 = vsel %vm703, %v1669, 0
        %v2068 = vsel %vm1682, %v2063, 0
        %2070 = vmatprep.subr.bf16.mxu0 0
        %2071 = vmatpush1.bf16.msra.mxu0 %v2068
        %2072 = vmatprep.subr.bf16.mxu0 0
        %2073 = vmatpush1.bf16.msra.mxu0 0
        %2074 = vmatprep.subr.bf16.mxu0 0
        %2075 = vmatpush1.bf16.msra.mxu0 0
        %2076 = vmatprep.subr.bf16.mxu0 0
        %2077 = vmatpush1.bf16.msra.mxu0 0
        %2078 = vmatprep.subr.bf16.mxu0 0
        %2079 = vmatpush1.bf16.msra.mxu0 0
        %2080 = vmatprep.subr.bf16.mxu0 0
        %2081 = vmatpush1.bf16.msra.mxu0 0
        %2082 = vmatprep.subr.bf16.mxu0 0
        %2083 = vmatpush1.bf16.msra.mxu0 0
        %2084 = vmatprep.subr.bf16.mxu0 0
        %2085 = vmatpush1.bf16.msra.mxu0 0
        %2086 = vmatprep.subr.bf16.mxu0 0
        %2087 = vmatpush1.bf16.msra.mxu0 0
        %2088 = vmatprep.subr.bf16.mxu0 0
        %2089 = vmatpush1.bf16.msra.mxu0 0
        %2090 = vmatprep.subr.bf16.mxu0 0
        %2091 = vmatpush1.bf16.msra.mxu0 0
        %2092 = vmatprep.subr.bf16.mxu0 0
        %2093 = vmatpush1.bf16.msra.mxu0 0
        %2094 = vmatprep.subr.bf16.mxu0 0
        %2095 = vmatpush1.bf16.msra.mxu0 0
        %2096 = vmatprep.subr.bf16.mxu0 0
        %2097 = vmatpush1.bf16.msra.mxu0 0
        %2098 = vmatprep.subr.bf16.mxu0 0
        %2099 = vmatpush1.bf16.msra.mxu0 0
        %2100 = vmatprep.subr.bf16.mxu0 0
        %2101 = vmatpush1.bf16.msra.mxu0 0
        %2102 = vmatprep.mubr.bf16.mxu0 0
        %2103 = vmatmul.mubr.bf16.gmra.mrb[0].mxu0 %v2065
        %v2104 = vpop.f32.mrb[0].mxu0
        %v2105 = vadd.f32 0.0, %v2104
        %v2106 = vpop.f32.mrb[0].mxu0
        %v2107 = vpop.f32.mrb[0].mxu0
        %v2108 = vpop.f32.mrb[0].mxu0
        %2109 = vdwg.mxu0
        %2110 = vrot.lane.b32.xlu0 %v693, 64
        %v2111 = vpop.permute.xlu0 %2110
        %v2113 = vsel %vm703, %v1670, 0
        %v2116 = vsel %vm1682, %v2111, 0
        %2118 = vmatprep.subr.bf16.mxu0 0
        %2119 = vmatpush1.bf16.msra.mxu0 %v2116
        %2120 = vmatprep.subr.bf16.mxu0 0
        %2121 = vmatpush1.bf16.msra.mxu0 0
        %2122 = vmatprep.subr.bf16.mxu0 0
        %2123 = vmatpush1.bf16.msra.mxu0 0
        %2124 = vmatprep.subr.bf16.mxu0 0
        %2125 = vmatpush1.bf16.msra.mxu0 0
        %2126 = vmatprep.subr.bf16.mxu0 0
        %2127 = vmatpush1.bf16.msra.mxu0 0
        %2128 = vmatprep.subr.bf16.mxu0 0
        %2129 = vmatpush1.bf16.msra.mxu0 0
        %2130 = vmatprep.subr.bf16.mxu0 0
        %2131 = vmatpush1.bf16.msra.mxu0 0
        %2132 = vmatprep.subr.bf16.mxu0 0
        %2133 = vmatpush1.bf16.msra.mxu0 0
        %2134 = vmatprep.subr.bf16.mxu0 0
        %2135 = vmatpush1.bf16.msra.mxu0 0
        %2136 = vmatprep.subr.bf16.mxu0 0
        %2137 = vmatpush1.bf16.msra.mxu0 0
        %2138 = vmatprep.subr.bf16.mxu0 0
        %2139 = vmatpush1.bf16.msra.mxu0 0
        %2140 = vmatprep.subr.bf16.mxu0 0
        %2141 = vmatpush1.bf16.msra.mxu0 0
        %2142 = vmatprep.subr.bf16.mxu0 0
        %2143 = vmatpush1.bf16.msra.mxu0 0
        %2144 = vmatprep.subr.bf16.mxu0 0
        %2145 = vmatpush1.bf16.msra.mxu0 0
        %2146 = vmatprep.subr.bf16.mxu0 0
        %2147 = vmatpush1.bf16.msra.mxu0 0
        %2148 = vmatprep.subr.bf16.mxu0 0
        %2149 = vmatpush1.bf16.msra.mxu0 0
        %2150 = vmatprep.mubr.bf16.mxu0 0
        %2151 = vmatmul.mubr.bf16.gmra.mrb[0].mxu0 %v2113
        %v2152 = vpop.f32.mrb[0].mxu0
        %v2153 = vadd.f32 0.0, %v2152
        %v2154 = vpop.f32.mrb[0].mxu0
        %v2155 = vpop.f32.mrb[0].mxu0
        %v2156 = vpop.f32.mrb[0].mxu0
        %2157 = vdwg.mxu0
        %2158 = vrot.lane.b32.xlu0 %v694, 64
        %v2159 = vpop.permute.xlu0 %2158
        %v2161 = vsel %vm703, %v1671, 0
        %v2164 = vsel %vm1682, %v2159, 0
        %2166 = vmatprep.subr.bf16.mxu0 0
        %2167 = vmatpush1.bf16.msra.mxu0 %v2164
        %2168 = vmatprep.subr.bf16.mxu0 0
        %2169 = vmatpush1.bf16.msra.mxu0 0
        %2170 = vmatprep.subr.bf16.mxu0 0
        %2171 = vmatpush1.bf16.msra.mxu0 0
        %2172 = vmatprep.subr.bf16.mxu0 0
        %2173 = vmatpush1.bf16.msra.mxu0 0
        %2174 = vmatprep.subr.bf16.mxu0 0
        %2175 = vmatpush1.bf16.msra.mxu0 0
        %2176 = vmatprep.subr.bf16.mxu0 0
        %2177 = vmatpush1.bf16.msra.mxu0 0
        %2178 = vmatprep.subr.bf16.mxu0 0
        %2179 = vmatpush1.bf16.msra.mxu0 0
        %2180 = vmatprep.subr.bf16.mxu0 0
        %2181 = vmatpush1.bf16.msra.mxu0 0
        %2182 = vmatprep.subr.bf16.mxu0 0
        %2183 = vmatpush1.bf16.msra.mxu0 0
        %2184 = vmatprep.subr.bf16.mxu0 0
        %2185 = vmatpush1.bf16.msra.mxu0 0
        %2186 = vmatprep.subr.bf16.mxu0 0
        %2187 = vmatpush1.bf16.msra.mxu0 0
        %2188 = vmatprep.subr.bf16.mxu0 0
        %2189 = vmatpush1.bf16.msra.mxu0 0
        %2190 = vmatprep.subr.bf16.mxu0 0
        %2191 = vmatpush1.bf16.msra.mxu0 0
        %2192 = vmatprep.subr.bf16.mxu0 0
        %2193 = vmatpush1.bf16.msra.mxu0 0
        %2194 = vmatprep.subr.bf16.mxu0 0
        %2195 = vmatpush1.bf16.msra.mxu0 0
        %2196 = vmatprep.subr.bf16.mxu0 0
        %2197 = vmatpush1.bf16.msra.mxu0 0
        %2198 = vmatprep.mubr.bf16.mxu0 0
        %2199 = vmatmul.mubr.bf16.gmra.mrb[0].mxu0 %v2161
        %v2200 = vpop.f32.mrb[0].mxu0
        %v2201 = vadd.f32 0.0, %v2200
        %v2202 = vpop.f32.mrb[0].mxu0
        %v2203 = vpop.f32.mrb[0].mxu0
        %v2204 = vpop.f32.mrb[0].mxu0
        %2205 = vdwg.mxu0
        %2206 = vrot.lane.b32.xlu0 %v695, 64
        %v2207 = vpop.permute.xlu0 %2206
        %v2209 = vsel %vm703, %v1672, 0
        %v2212 = vsel %vm1682, %v2207, 0
        %2214 = vmatprep.subr.bf16.mxu0 0
        %2215 = vmatpush1.bf16.msra.mxu0 %v2212
        %2216 = vmatprep.subr.bf16.mxu0 0
        %2217 = vmatpush1.bf16.msra.mxu0 0
        %2218 = vmatprep.subr.bf16.mxu0 0
        %2219 = vmatpush1.bf16.msra.mxu0 0
        %2220 = vmatprep.subr.bf16.mxu0 0
        %2221 = vmatpush1.bf16.msra.mxu0 0
        %2222 = vmatprep.subr.bf16.mxu0 0
        %2223 = vmatpush1.bf16.msra.mxu0 0
        %2224 = vmatprep.subr.bf16.mxu0 0
        %2225 = vmatpush1.bf16.msra.mxu0 0
        %2226 = vmatprep.subr.bf16.mxu0 0
        %2227 = vmatpush1.bf16.msra.mxu0 0
        %2228 = vmatprep.subr.bf16.mxu0 0
        %2229 = vmatpush1.bf16.msra.mxu0 0
        %2230 = vmatprep.subr.bf16.mxu0 0
        %2231 = vmatpush1.bf16.msra.mxu0 0
        %2232 = vmatprep.subr.bf16.mxu0 0
        %2233 = vmatpush1.bf16.msra.mxu0 0
        %2234 = vmatprep.subr.bf16.mxu0 0
        %2235 = vmatpush1.bf16.msra.mxu0 0
        %2236 = vmatprep.subr.bf16.mxu0 0
        %2237 = vmatpush1.bf16.msra.mxu0 0
        %2238 = vmatprep.subr.bf16.mxu0 0
        %2239 = vmatpush1.bf16.msra.mxu0 0
        %2240 = vmatprep.subr.bf16.mxu0 0
        %2241 = vmatpush1.bf16.msra.mxu0 0
        %2242 = vmatprep.subr.bf16.mxu0 0
        %2243 = vmatpush1.bf16.msra.mxu0 0
        %2244 = vmatprep.subr.bf16.mxu0 0
        %2245 = vmatpush1.bf16.msra.mxu0 0
        %2246 = vmatprep.mubr.bf16.mxu0 0
        %2247 = vmatmul.mubr.bf16.gmra.mrb[0].mxu0 %v2209
        %v2248 = vpop.f32.mrb[0].mxu0
        %v2249 = vadd.f32 0.0, %v2248
        %v2250 = vpop.f32.mrb[0].mxu0
        %v2251 = vpop.f32.mrb[0].mxu0
        %v2252 = vpop.f32.mrb[0].mxu0
        %2253 = vdwg.mxu0
        %2254 = vrot.lane.b32.xlu0 %v696, 64
        %v2255 = vpop.permute.xlu0 %2254
        %v2257 = vsel %vm703, %v1673, 0
        %v2260 = vsel %vm1682, %v2255, 0
        %2262 = vmatprep.subr.bf16.mxu0 0
        %2263 = vmatpush1.bf16.msra.mxu0 %v2260
        %2264 = vmatprep.subr.bf16.mxu0 0
        %2265 = vmatpush1.bf16.msra.mxu0 0
        %2266 = vmatprep.subr.bf16.mxu0 0
        %2267 = vmatpush1.bf16.msra.mxu0 0
        %2268 = vmatprep.subr.bf16.mxu0 0
        %2269 = vmatpush1.bf16.msra.mxu0 0
        %2270 = vmatprep.subr.bf16.mxu0 0
        %2271 = vmatpush1.bf16.msra.mxu0 0
        %2272 = vmatprep.subr.bf16.mxu0 0
        %2273 = vmatpush1.bf16.msra.mxu0 0
        %2274 = vmatprep.subr.bf16.mxu0 0
        %2275 = vmatpush1.bf16.msra.mxu0 0
        %2276 = vmatprep.subr.bf16.mxu0 0
        %2277 = vmatpush1.bf16.msra.mxu0 0
        %2278 = vmatprep.subr.bf16.mxu0 0
        %2279 = vmatpush1.bf16.msra.mxu0 0
        %2280 = vmatprep.subr.bf16.mxu0 0
        %2281 = vmatpush1.bf16.msra.mxu0 0
        %2282 = vmatprep.subr.bf16.mxu0 0
        %2283 = vmatpush1.bf16.msra.mxu0 0
        %2284 = vmatprep.subr.bf16.mxu0 0
        %2285 = vmatpush1.bf16.msra.mxu0 0
        %2286 = vmatprep.subr.bf16.mxu0 0
        %2287 = vmatpush1.bf16.msra.mxu0 0
        %2288 = vmatprep.subr.bf16.mxu0 0
        %2289 = vmatpush1.bf16.msra.mxu0 0
        %2290 = vmatprep.subr.bf16.mxu0 0
        %2291 = vmatpush1.bf16.msra.mxu0 0
        %2292 = vmatprep.subr.bf16.mxu0 0
        %2293 = vmatpush1.bf16.msra.mxu0 0
        %2294 = vmatprep.mubr.bf16.mxu0 0
        %2295 = vmatmul.mubr.bf16.gmra.mrb[0].mxu0 %v2257
        %v2296 = vpop.f32.mrb[0].mxu0
        %v2297 = vadd.f32 0.0, %v2296
        %v2298 = vpop.f32.mrb[0].mxu0
        %v2299 = vpop.f32.mrb[0].mxu0
        %v2300 = vpop.f32.mrb[0].mxu0
        %2301 = vdwg.mxu0
        %2302 = vrot.lane.b32.xlu0 %v697, 64
        %v2303 = vpop.permute.xlu0 %2302
        %v2305 = vsel %vm703, %v1674, 0
        %v2308 = vsel %vm1682, %v2303, 0
        %2310 = vmatprep.subr.bf16.mxu0 0
        %2311 = vmatpush1.bf16.msra.mxu0 %v2308
        %2312 = vmatprep.subr.bf16.mxu0 0
        %2313 = vmatpush1.bf16.msra.mxu0 0
        %2314 = vmatprep.subr.bf16.mxu0 0
        %2315 = vmatpush1.bf16.msra.mxu0 0
        %2316 = vmatprep.subr.bf16.mxu0 0
        %2317 = vmatpush1.bf16.msra.mxu0 0
        %2318 = vmatprep.subr.bf16.mxu0 0
        %2319 = vmatpush1.bf16.msra.mxu0 0
        %2320 = vmatprep.subr.bf16.mxu0 0
        %2321 = vmatpush1.bf16.msra.mxu0 0
        %2322 = vmatprep.subr.bf16.mxu0 0
        %2323 = vmatpush1.bf16.msra.mxu0 0
        %2324 = vmatprep.subr.bf16.mxu0 0
        %2325 = vmatpush1.bf16.msra.mxu0 0
        %2326 = vmatprep.subr.bf16.mxu0 0
        %2327 = vmatpush1.bf16.msra.mxu0 0
        %2328 = vmatprep.subr.bf16.mxu0 0
        %2329 = vmatpush1.bf16.msra.mxu0 0
        %2330 = vmatprep.subr.bf16.mxu0 0
        %2331 = vmatpush1.bf16.msra.mxu0 0
        %2332 = vmatprep.subr.bf16.mxu0 0
        %2333 = vmatpush1.bf16.msra.mxu0 0
        %2334 = vmatprep.subr.bf16.mxu0 0
        %2335 = vmatpush1.bf16.msra.mxu0 0
        %2336 = vmatprep.subr.bf16.mxu0 0
        %2337 = vmatpush1.bf16.msra.mxu0 0
        %2338 = vmatprep.subr.bf16.mxu0 0
        %2339 = vmatpush1.bf16.msra.mxu0 0
        %2340 = vmatprep.subr.bf16.mxu0 0
        %2341 = vmatpush1.bf16.msra.mxu0 0
        %2342 = vmatprep.mubr.bf16.mxu0 0
        %2343 = vmatmul.mubr.bf16.gmra.mrb[0].mxu0 %v2305
        %v2344 = vpop.f32.mrb[0].mxu0
        %v2345 = vadd.f32 0.0, %v2344
        %v2346 = vpop.f32.mrb[0].mxu0
        %v2347 = vpop.f32.mrb[0].mxu0
        %v2348 = vpop.f32.mrb[0].mxu0
        %2349 = vdwg.mxu0
        %2350 = vrot.lane.b32.xlu0 %v698, 64
        %v2351 = vpop.permute.xlu0 %2350
        %v2353 = vsel %vm703, %v1675, 0
        %v2356 = vsel %vm1682, %v2351, 0
        %2358 = vmatprep.subr.bf16.mxu0 0
        %2359 = vmatpush1.bf16.msra.mxu0 %v2356
        %2360 = vmatprep.subr.bf16.mxu0 0
        %2361 = vmatpush1.bf16.msra.mxu0 0
        %2362 = vmatprep.subr.bf16.mxu0 0
        %2363 = vmatpush1.bf16.msra.mxu0 0
        %2364 = vmatprep.subr.bf16.mxu0 0
        %2365 = vmatpush1.bf16.msra.mxu0 0
        %2366 = vmatprep.subr.bf16.mxu0 0
        %2367 = vmatpush1.bf16.msra.mxu0 0
        %2368 = vmatprep.subr.bf16.mxu0 0
        %2369 = vmatpush1.bf16.msra.mxu0 0
        %2370 = vmatprep.subr.bf16.mxu0 0
        %2371 = vmatpush1.bf16.msra.mxu0 0
        %2372 = vmatprep.subr.bf16.mxu0 0
        %2373 = vmatpush1.bf16.msra.mxu0 0
        %2374 = vmatprep.subr.bf16.mxu0 0
        %2375 = vmatpush1.bf16.msra.mxu0 0
        %2376 = vmatprep.subr.bf16.mxu0 0
        %2377 = vmatpush1.bf16.msra.mxu0 0
        %2378 = vmatprep.subr.bf16.mxu0 0
        %2379 = vmatpush1.bf16.msra.mxu0 0
        %2380 = vmatprep.subr.bf16.mxu0 0
        %2381 = vmatpush1.bf16.msra.mxu0 0
        %2382 = vmatprep.subr.bf16.mxu0 0
        %2383 = vmatpush1.bf16.msra.mxu0 0
        %2384 = vmatprep.subr.bf16.mxu0 0
        %2385 = vmatpush1.bf16.msra.mxu0 0
        %2386 = vmatprep.subr.bf16.mxu0 0
        %2387 = vmatpush1.bf16.msra.mxu0 0
        %2388 = vmatprep.subr.bf16.mxu0 0
        %2389 = vmatpush1.bf16.msra.mxu0 0
        %2390 = vmatprep.mubr.bf16.mxu0 0
        %2391 = vmatmul.mubr.bf16.gmra.mrb[0].mxu0 %v2353
        %v2392 = vpop.f32.mrb[0].mxu0
        %v2393 = vadd.f32 0.0, %v2392
        %v2394 = vpop.f32.mrb[0].mxu0
        %v2395 = vpop.f32.mrb[0].mxu0
        %v2396 = vpop.f32.mrb[0].mxu0
        %2397 = vdwg.mxu0
        %2398 = vrot.lane.b32.xlu0 %v699, 64
        %v2399 = vpop.permute.xlu0 %2398
        %v2401 = vsel %vm703, %v1676, 0
        %v2404 = vsel %vm1682, %v2399, 0
        %2406 = vmatprep.subr.bf16.mxu0 0
        %2407 = vmatpush1.bf16.msra.mxu0 %v2404
        %2408 = vmatprep.subr.bf16.mxu0 0
        %2409 = vmatpush1.bf16.msra.mxu0 0
        %2410 = vmatprep.subr.bf16.mxu0 0
        %2411 = vmatpush1.bf16.msra.mxu0 0
        %2412 = vmatprep.subr.bf16.mxu0 0
        %2413 = vmatpush1.bf16.msra.mxu0 0
        %2414 = vmatprep.subr.bf16.mxu0 0
        %2415 = vmatpush1.bf16.msra.mxu0 0
        %2416 = vmatprep.subr.bf16.mxu0 0
        %2417 = vmatpush1.bf16.msra.mxu0 0
        %2418 = vmatprep.subr.bf16.mxu0 0
        %2419 = vmatpush1.bf16.msra.mxu0 0
        %2420 = vmatprep.subr.bf16.mxu0 0
        %2421 = vmatpush1.bf16.msra.mxu0 0
        %2422 = vmatprep.subr.bf16.mxu0 0
        %2423 = vmatpush1.bf16.msra.mxu0 0
        %2424 = vmatprep.subr.bf16.mxu0 0
        %2425 = vmatpush1.bf16.msra.mxu0 0
        %2426 = vmatprep.subr.bf16.mxu0 0
        %2427 = vmatpush1.bf16.msra.mxu0 0
        %2428 = vmatprep.subr.bf16.mxu0 0
        %2429 = vmatpush1.bf16.msra.mxu0 0
        %2430 = vmatprep.subr.bf16.mxu0 0
        %2431 = vmatpush1.bf16.msra.mxu0 0
        %2432 = vmatprep.subr.bf16.mxu0 0
        %2433 = vmatpush1.bf16.msra.mxu0 0
        %2434 = vmatprep.subr.bf16.mxu0 0
        %2435 = vmatpush1.bf16.msra.mxu0 0
        %2436 = vmatprep.subr.bf16.mxu0 0
        %2437 = vmatpush1.bf16.msra.mxu0 0
        %2438 = vmatprep.mubr.bf16.mxu0 0
        %2439 = vmatmul.mubr.bf16.gmra.mrb[0].mxu0 %v2401
        %v2440 = vpop.f32.mrb[0].mxu0
        %v2441 = vadd.f32 0.0, %v2440
        %v2442 = vpop.f32.mrb[0].mxu0
        %v2443 = vpop.f32.mrb[0].mxu0
        %v2444 = vpop.f32.mrb[0].mxu0
        %2445 = vdwg.mxu0
        %v2446 = vpack.c.bf16 %v1769, %v1721
        %v2447 = vpack.c.bf16 %v1865, %v1817
        %v2448 = vld [vmem:[%s5] sm:$0xf]
        %v2449 = vpack.c.bf16 %v1961, %v1913
        %v2450 = vpack.c.bf16 %v2057, %v2009
        %s2451 = scalar_lea.vmem %s5, 4
        %v2452 = vld [vmem:[%s2451] sm:$0xf]
        %v2454 = vsel %vm703, %v2449, 0
        %v2457 = vsel %vm703, %v2450, 0
        %v2460 = vsel %vm1682, %v2452, 0
        %2462 = vmatprep.subr.bf16.mxu0 0
        %2463 = vmatpush1.bf16.msra.mxu0 %v2460
        %2464 = vmatprep.subr.bf16.mxu0 0
        %2465 = vmatpush1.bf16.msra.mxu0 0
        %2466 = vmatprep.subr.bf16.mxu0 0
        %2467 = vmatpush1.bf16.msra.mxu0 0
        %2468 = vmatprep.subr.bf16.mxu0 0
        %2469 = vmatpush1.bf16.msra.mxu0 0
        %2470 = vmatprep.subr.bf16.mxu0 0
        %2471 = vmatpush1.bf16.msra.mxu0 0
        %2472 = vmatprep.subr.bf16.mxu0 0
        %2473 = vmatpush1.bf16.msra.mxu0 0
        %2474 = vmatprep.subr.bf16.mxu0 0
        %2475 = vmatpush1.bf16.msra.mxu0 0
        %2476 = vmatprep.subr.bf16.mxu0 0
        %2477 = vmatpush1.bf16.msra.mxu0 0
        %2478 = vmatprep.subr.bf16.mxu0 0
        %2479 = vmatpush1.bf16.msra.mxu0 0
        %2480 = vmatprep.subr.bf16.mxu0 0
        %2481 = vmatpush1.bf16.msra.mxu0 0
        %2482 = vmatprep.subr.bf16.mxu0 0
        %2483 = vmatpush1.bf16.msra.mxu0 0
        %2484 = vmatprep.subr.bf16.mxu0 0
        %2485 = vmatpush1.bf16.msra.mxu0 0
        %2486 = vmatprep.subr.bf16.mxu0 0
        %2487 = vmatpush1.bf16.msra.mxu0 0
        %2488 = vmatprep.subr.bf16.mxu0 0
        %2489 = vmatpush1.bf16.msra.mxu0 0
        %2490 = vmatprep.subr.bf16.mxu0 0
        %2491 = vmatpush1.bf16.msra.mxu0 0
        %2492 = vmatprep.subr.bf16.mxu0 0
        %2493 = vmatpush1.bf16.msra.mxu0 0
        %2494 = vmatprep.mubr.bf16.mxu0 0
        %2495 = vmatmul.mubr.bf16.gmra.mrb[0].mxu0 %v2454
        %v2496 = vpop.f32.mrb[0].mxu0
        %v2497 = vadd.f32 0.0, %v2496
        %v2498 = vpop.f32.mrb[0].mxu0
        %v2499 = vpop.f32.mrb[0].mxu0
        %v2500 = vadd.f32 0.0, %v2499
        %v2501 = vpop.f32.mrb[0].mxu0
        %2502 = vmatprep.mubr.bf16.mxu0 0
        %2503 = vmatmul.mubr.bf16.gmra.mrb[0].mxu0 %v2457
        %v2504 = vpop.f32.mrb[0].mxu0
        %v2505 = vadd.f32 0.0, %v2504
        %v2506 = vpop.f32.mrb[0].mxu0
        %v2507 = vpop.f32.mrb[0].mxu0
        %v2508 = vadd.f32 0.0, %v2507
        %v2509 = vpop.f32.mrb[0].mxu0
        %2510 = vdwg.mxu0
        %v2512 = vsel %vm703, %v2446, 0
        %v2515 = vsel %vm703, %v2447, 0
        %v2518 = vsel %vm1682, %v2448, 0
        %2520 = vmatprep.subr.bf16.mxu0 0
        %2521 = vmatpush1.bf16.msra.mxu0 %v2518
        %2522 = vmatprep.subr.bf16.mxu0 0
        %2523 = vmatpush1.bf16.msra.mxu0 0
        %2524 = vmatprep.subr.bf16.mxu0 0
        %2525 = vmatpush1.bf16.msra.mxu0 0
        %2526 = vmatprep.subr.bf16.mxu0 0
        %2527 = vmatpush1.bf16.msra.mxu0 0
        %2528 = vmatprep.subr.bf16.mxu0 0
        %2529 = vmatpush1.bf16.msra.mxu0 0
        %2530 = vmatprep.subr.bf16.mxu0 0
        %2531 = vmatpush1.bf16.msra.mxu0 0
        %2532 = vmatprep.subr.bf16.mxu0 0
        %2533 = vmatpush1.bf16.msra.mxu0 0
        %2534 = vmatprep.subr.bf16.mxu0 0
        %2535 = vmatpush1.bf16.msra.mxu0 0
        %2536 = vmatprep.subr.bf16.mxu0 0
        %2537 = vmatpush1.bf16.msra.mxu0 0
        %2538 = vmatprep.subr.bf16.mxu0 0
        %2539 = vmatpush1.bf16.msra.mxu0 0
        %2540 = vmatprep.subr.bf16.mxu0 0
        %2541 = vmatpush1.bf16.msra.mxu0 0
        %2542 = vmatprep.subr.bf16.mxu0 0
        %2543 = vmatpush1.bf16.msra.mxu0 0
        %2544 = vmatprep.subr.bf16.mxu0 0
        %2545 = vmatpush1.bf16.msra.mxu0 0
        %2546 = vmatprep.subr.bf16.mxu0 0
        %2547 = vmatpush1.bf16.msra.mxu0 0
        %2548 = vmatprep.subr.bf16.mxu0 0
        %2549 = vmatpush1.bf16.msra.mxu0 0
        %2550 = vmatprep.subr.bf16.mxu0 0
        %2551 = vmatpush1.bf16.msra.mxu0 0
        %2552 = vmatprep.mubr.bf16.mxu0 0
        %2553 = vmatmul.mubr.bf16.gmra.mrb[0].mxu0 %v2512
        %v2554 = vpop.f32.mrb[0].mxu0
        %v2555 = vadd.f32 %v2497, %v2554
        %v2556 = vpop.f32.mrb[0].mxu0
        %v2557 = vpop.f32.mrb[0].mxu0
        %v2558 = vadd.f32 %v2500, %v2557
        %v2559 = vpop.f32.mrb[0].mxu0
        %2560 = vmatprep.mubr.bf16.mxu0 0
        %2561 = vmatmul.mubr.bf16.gmra.mrb[0].mxu0 %v2515
        %v2562 = vpop.f32.mrb[0].mxu0
        %v2563 = vadd.f32 %v2505, %v2562
        %v2564 = vpop.f32.mrb[0].mxu0
        %v2565 = vpop.f32.mrb[0].mxu0
        %v2566 = vadd.f32 %v2508, %v2565
        %v2567 = vpop.f32.mrb[0].mxu0
        %2568 = vdwg.mxu0
        %v2569 = vpack.c.bf16 %v2153, %v2105
        %v2570 = vpack.c.bf16 %v2249, %v2201
        %s2571 = scalar_lea.vmem %s5, 8
        %v2572 = vld [vmem:[%s2571] sm:$0xf]
        %v2574 = vsel %vm703, %v2569, 0
        %v2577 = vsel %vm703, %v2570, 0
        %v2580 = vsel %vm1682, %v2572, 0
        %2582 = vmatprep.subr.bf16.mxu0 0
        %2583 = vmatpush1.bf16.msra.mxu0 %v2580
        %2584 = vmatprep.subr.bf16.mxu0 0
        %2585 = vmatpush1.bf16.msra.mxu0 0
        %2586 = vmatprep.subr.bf16.mxu0 0
        %2587 = vmatpush1.bf16.msra.mxu0 0
        %2588 = vmatprep.subr.bf16.mxu0 0
        %2589 = vmatpush1.bf16.msra.mxu0 0
        %2590 = vmatprep.subr.bf16.mxu0 0
        %2591 = vmatpush1.bf16.msra.mxu0 0
        %2592 = vmatprep.subr.bf16.mxu0 0
        %2593 = vmatpush1.bf16.msra.mxu0 0
        %2594 = vmatprep.subr.bf16.mxu0 0
        %2595 = vmatpush1.bf16.msra.mxu0 0
        %2596 = vmatprep.subr.bf16.mxu0 0
        %2597 = vmatpush1.bf16.msra.mxu0 0
        %2598 = vmatprep.subr.bf16.mxu0 0
        %2599 = vmatpush1.bf16.msra.mxu0 0
        %2600 = vmatprep.subr.bf16.mxu0 0
        %2601 = vmatpush1.bf16.msra.mxu0 0
        %2602 = vmatprep.subr.bf16.mxu0 0
        %2603 = vmatpush1.bf16.msra.mxu0 0
        %2604 = vmatprep.subr.bf16.mxu0 0
        %2605 = vmatpush1.bf16.msra.mxu0 0
        %2606 = vmatprep.subr.bf16.mxu0 0
        %2607 = vmatpush1.bf16.msra.mxu0 0
        %2608 = vmatprep.subr.bf16.mxu0 0
        %2609 = vmatpush1.bf16.msra.mxu0 0
        %2610 = vmatprep.subr.bf16.mxu0 0
        %2611 = vmatpush1.bf16.msra.mxu0 0
        %2612 = vmatprep.subr.bf16.mxu0 0
        %2613 = vmatpush1.bf16.msra.mxu0 0
        %2614 = vmatprep.mubr.bf16.mxu0 0
        %2615 = vmatmul.mubr.bf16.gmra.mrb[0].mxu0 %v2574
        %v2616 = vpop.f32.mrb[0].mxu0
        %v2617 = vadd.f32 0.0, %v2616
        %v2618 = vpop.f32.mrb[0].mxu0
        %v2619 = vpop.f32.mrb[0].mxu0
        %v2620 = vadd.f32 0.0, %v2619
        %v2621 = vpop.f32.mrb[0].mxu0
        %2622 = vmatprep.mubr.bf16.mxu0 0
        %2623 = vmatmul.mubr.bf16.gmra.mrb[0].mxu0 %v2577
        %v2624 = vpop.f32.mrb[0].mxu0
        %v2625 = vadd.f32 0.0, %v2624
        %v2626 = vpop.f32.mrb[0].mxu0
        %v2627 = vpop.f32.mrb[0].mxu0
        %v2628 = vadd.f32 0.0, %v2627
        %v2629 = vpop.f32.mrb[0].mxu0
        %2630 = vdwg.mxu0
        %v2631 = vadd.f32 %v2555, %v2617
        %v2632 = vadd.f32 %v2558, %v2620
        %v2633 = vadd.f32 %v2563, %v2625
        %v2634 = vadd.f32 %v2566, %v2628
        %v2635 = vpack.c.bf16 %v2345, %v2297
        %v2636 = vpack.c.bf16 %v2441, %v2393
        %s2637 = scalar_lea.vmem %s5, 12
        %v2638 = vld [vmem:[%s2637] sm:$0xf]
        %v2640 = vsel %vm703, %v2635, 0
        %v2643 = vsel %vm703, %v2636, 0
        %v2646 = vsel %vm1682, %v2638, 0
        %2648 = vmatprep.subr.bf16.mxu0 0
        %2649 = vmatpush1.bf16.msra.mxu0 %v2646
        %2650 = vmatprep.subr.bf16.mxu0 0
        %2651 = vmatpush1.bf16.msra.mxu0 0
        %2652 = vmatprep.subr.bf16.mxu0 0
        %2653 = vmatpush1.bf16.msra.mxu0 0
        %2654 = vmatprep.subr.bf16.mxu0 0
        %2655 = vmatpush1.bf16.msra.mxu0 0
        %2656 = vmatprep.subr.bf16.mxu0 0
        %2657 = vmatpush1.bf16.msra.mxu0 0
        %2658 = vmatprep.subr.bf16.mxu0 0
        %2659 = vmatpush1.bf16.msra.mxu0 0
        %2660 = vmatprep.subr.bf16.mxu0 0
        %2661 = vmatpush1.bf16.msra.mxu0 0
        %2662 = vmatprep.subr.bf16.mxu0 0
        %2663 = vmatpush1.bf16.msra.mxu0 0
        %2664 = vmatprep.subr.bf16.mxu0 0
        %2665 = vmatpush1.bf16.msra.mxu0 0
        %2666 = vmatprep.subr.bf16.mxu0 0
        %2667 = vmatpush1.bf16.msra.mxu0 0
        %2668 = vmatprep.subr.bf16.mxu0 0
        %2669 = vmatpush1.bf16.msra.mxu0 0
        %2670 = vmatprep.subr.bf16.mxu0 0
        %2671 = vmatpush1.bf16.msra.mxu0 0
        %2672 = vmatprep.subr.bf16.mxu0 0
        %2673 = vmatpush1.bf16.msra.mxu0 0
        %2674 = vmatprep.subr.bf16.mxu0 0
        %2675 = vmatpush1.bf16.msra.mxu0 0
        %2676 = vmatprep.subr.bf16.mxu0 0
        %2677 = vmatpush1.bf16.msra.mxu0 0
        %2678 = vmatprep.subr.bf16.mxu0 0
        %2679 = vmatpush1.bf16.msra.mxu0 0
        %2680 = vmatprep.mubr.bf16.mxu0 0
        %2681 = vmatmul.mubr.bf16.gmra.mrb[0].mxu0 %v2640
        %v2682 = vpop.f32.mrb[0].mxu0
        %v2683 = vadd.f32 0.0, %v2682
        %v2684 = vpop.f32.mrb[0].mxu0
        %v2685 = vpop.f32.mrb[0].mxu0
        %v2686 = vadd.f32 0.0, %v2685
        %v2687 = vpop.f32.mrb[0].mxu0
        %2688 = vmatprep.mubr.bf16.mxu0 0
        %2689 = vmatmul.mubr.bf16.gmra.mrb[0].mxu0 %v2643
        %v2690 = vpop.f32.mrb[0].mxu0
        %v2691 = vadd.f32 0.0, %v2690
        %v2692 = vpop.f32.mrb[0].mxu0
        %v2693 = vpop.f32.mrb[0].mxu0
        %v2694 = vadd.f32 0.0, %v2693
        %v2695 = vpop.f32.mrb[0].mxu0
        %2696 = vdwg.mxu0
        %v2697 = vadd.f32 %v2631, %v2683
        %v2698 = vadd.f32 %v2632, %v2686
        %v2699 = vadd.f32 %v2633, %v2691
        %v2700 = vadd.f32 %v2634, %v2694
        %v2701 = vld [vmem:[%s6] sm:$0x1]
        %v2703 = vlaneseq
        %v2704 = vshrl.u32 %v2703, 7
        %v2705 = vsub.s32 0, %v2704
        %v2706 = vrot.slane %v2701, %v2705
        %v2708 = vadd.f32 %v2697, %v2706
        %v2709 = vadd.f32 %v2698, %v2706
        %v2710 = vadd.f32 %v2699, %v2706
        %v2711 = vadd.f32 %v2700, %v2706
        %v2712 = vadd.f32 %v484, %v2708
        %v2713 = vadd.f32 %v485, %v2709
        %v2714 = vadd.f32 %v486, %v2710
        %v2715 = vadd.f32 %v487, %v2711
        %v2716 = vld [vmem:[%s7] sm:$0x1]
        %v2717 = vld [vmem:[%s8] sm:$0x1]
        %v2718 = vsel %vm490, %v2712, 0.0
        %2719 = vadd.xlane.f32.xlu0 %v2718
        %v2720 = vpop.xlane.xlu0 %2719
        %v2721 = vsel %vm490, %v2713, 0.0
        %2722 = vadd.xlane.f32.xlu0 %v2721
        %v2723 = vpop.xlane.xlu0 %2722
        %v2724 = vsel %vm490, %v2714, 0.0
        %2725 = vadd.xlane.f32.xlu0 %v2724
        %v2726 = vpop.xlane.xlu0 %2725
        %v2727 = vsel %vm490, %v2715, 0.0
        %2728 = vadd.xlane.f32.xlu0 %v2727
        %v2729 = vpop.xlane.xlu0 %2728
        %v2730 = vmul.f32 %v2720, %v503
        %v2731 = vmul.f32 %v2723, %v503
        %v2732 = vmul.f32 %v2726, %v503
        %v2733 = vmul.f32 %v2729, %v503
        %v2734 = vsub.f32 %v2712, %v2730
        %v2735 = vsub.f32 %v2713, %v2731
        %v2736 = vsub.f32 %v2714, %v2732
        %v2737 = vsub.f32 %v2715, %v2733
        %v2738 = vmul.f32 %v2734, %v2734
        %v2739 = vmul.f32 %v2735, %v2735
        %v2740 = vmul.f32 %v2736, %v2736
        %v2741 = vmul.f32 %v2737, %v2737
        %v2742 = vsel %vm490, %v2738, 0.0
        %2743 = vadd.xlane.f32.xlu0 %v2742
        %v2744 = vpop.xlane.xlu0 %2743
        %v2745 = vsel %vm490, %v2739, 0.0
        %2746 = vadd.xlane.f32.xlu0 %v2745
        %v2747 = vpop.xlane.xlu0 %2746
        %v2748 = vsel %vm490, %v2740, 0.0
        %2749 = vadd.xlane.f32.xlu0 %v2748
        %v2750 = vpop.xlane.xlu0 %2749
        %v2751 = vsel %vm490, %v2741, 0.0
        %2752 = vadd.xlane.f32.xlu0 %v2751
        %v2753 = vpop.xlane.xlu0 %2752
        %v2754 = vmul.f32 %v2744, %v503
        %v2755 = vmul.f32 %v2747, %v503
        %v2756 = vmul.f32 %v2750, %v503
        %v2757 = vmul.f32 %v2753, %v503
        %v2758 = vadd.f32 %v2754, 1e-05
        %v2759 = vadd.f32 %v2755, 1e-05
        %v2760 = vadd.f32 %v2756, 1e-05
        %v2761 = vadd.f32 %v2757, 1e-05
        %v2762 = vrsqrt.pop %v2758
        %v2763 = vrsqrt.pop %v2759
        %v2764 = vrsqrt.pop %v2760
        %v2765 = vrsqrt.pop %v2761
        %v2766 = vmul.f32 %v2734, %v2762
        %v2767 = vmul.f32 %v2735, %v2763
        %v2768 = vmul.f32 %v2736, %v2764
        %v2769 = vmul.f32 %v2737, %v2765
        %v2771 = vlaneseq
        %v2772 = vshrl.u32 %v2771, 7
        %v2773 = vsub.s32 0, %v2772
        %v2774 = vrot.slane %v2716, %v2773
        %v2776 = vmul.f32 %v2766, %v2774
        %v2777 = vmul.f32 %v2767, %v2774
        %v2778 = vmul.f32 %v2768, %v2774
        %v2779 = vmul.f32 %v2769, %v2774
        %v2781 = vlaneseq
        %v2782 = vshrl.u32 %v2781, 7
        %v2783 = vsub.s32 0, %v2782
        %v2784 = vrot.slane %v2717, %v2783
        %v2786 = vadd.f32 %v2776, %v2784
        %v2787 = vadd.f32 %v2777, %v2784
        %v2788 = vadd.f32 %v2778, %v2784
        %v2789 = vadd.f32 %v2779, %v2784
        %v2790 = vpack.c.bf16 %v2787, %v2786
        %v2791 = vpack.c.bf16 %v2789, %v2788
        %v2792 = vld [vmem:[%s9] sm:$0xf]
        %v2793 = vld [vmem:[%s9 + $0x4] sm:$0xf]
        %v2794 = vld [vmem:[%s9 + $0x8] sm:$0xf]
        %v2795 = vld [vmem:[%s9 + $0xc] sm:$0xf]
        %v2796 = vld [vmem:[%s10] sm:$0x1]
        %v2798 = vlaneseq
        %v2799 = vshrl.u32 %v2798, 7
        %v2800 = vsub.s32 0, %v2799
        %v2801 = vrot.slane %v2796, %v2800
        %v2807 = vunpack.c.l.b16 %v2792
        %v2808 = vunpack.c.l.b16 %v2793
        %v2809 = vunpack.c.l.b16 %v2794
        %v2810 = vunpack.c.l.b16 %v2795
        %v2811 = vpack.c.b16 %v2808, %v2807
        %v2812 = vpack.c.b16 %v2810, %v2809
        %v2816 = vsel %vm490, %v2790, 0
        %v2819 = vsel %vm490, %v2791, 0
        %2821 = vmatprep.subr.bf16.mxu0 0
        %2822 = vmatpush1.bf16.msra.mxu0 %v2811
        %2823 = vmatprep.subr.bf16.mxu0 0
        %2824 = vmatpush1.bf16.msra.mxu0 %v2812
        %2825 = vmatprep.subr.bf16.mxu0 0
        %2826 = vmatpush1.bf16.msra.mxu0 0
        %2827 = vmatprep.subr.bf16.mxu0 0
        %2828 = vmatpush1.bf16.msra.mxu0 0
        %2829 = vmatprep.subr.bf16.mxu0 0
        %2830 = vmatpush1.bf16.msra.mxu0 0
        %2831 = vmatprep.subr.bf16.mxu0 0
        %2832 = vmatpush1.bf16.msra.mxu0 0
        %2833 = vmatprep.subr.bf16.mxu0 0
        %2834 = vmatpush1.bf16.msra.mxu0 0
        %2835 = vmatprep.subr.bf16.mxu0 0
        %2836 = vmatpush1.bf16.msra.mxu0 0
        %2837 = vmatprep.subr.bf16.mxu0 0
        %2838 = vmatpush1.bf16.msra.mxu0 0
        %2839 = vmatprep.subr.bf16.mxu0 0
        %2840 = vmatpush1.bf16.msra.mxu0 0
        %2841 = vmatprep.subr.bf16.mxu0 0
        %2842 = vmatpush1.bf16.msra.mxu0 0
        %2843 = vmatprep.subr.bf16.mxu0 0
        %2844 = vmatpush1.bf16.msra.mxu0 0
        %2845 = vmatprep.subr.bf16.mxu0 0
        %2846 = vmatpush1.bf16.msra.mxu0 0
        %2847 = vmatprep.subr.bf16.mxu0 0
        %2848 = vmatpush1.bf16.msra.mxu0 0
        %2849 = vmatprep.subr.bf16.mxu0 0
        %2850 = vmatpush1.bf16.msra.mxu0 0
        %2851 = vmatprep.subr.bf16.mxu0 0
        %2852 = vmatpush1.bf16.msra.mxu0 0
        %2853 = vmatprep.mubr.bf16.mxu0 0
        %2854 = vmatmul.mubr.bf16.gmra.mrb[0].mxu0 %v2816
        %v2855 = vpop.f32.mrb[0].mxu0
        %v2856 = vadd.f32 %v2801, %v2855
        %v2857 = vpop.f32.mrb[0].mxu0
        %v2858 = vpop.f32.mrb[0].mxu0
        %v2859 = vadd.f32 %v2801, %v2858
        %v2860 = vpop.f32.mrb[0].mxu0
        %2861 = vmatprep.mubr.bf16.mxu0 0
        %2862 = vmatmul.mubr.bf16.gmra.mrb[0].mxu0 %v2819
        %v2863 = vpop.f32.mrb[0].mxu0
        %v2864 = vadd.f32 %v2801, %v2863
        %v2865 = vpop.f32.mrb[0].mxu0
        %v2866 = vpop.f32.mrb[0].mxu0
        %v2867 = vadd.f32 %v2801, %v2866
        %v2868 = vpop.f32.mrb[0].mxu0
        %2869 = vdwg.mxu0
        %v2870 = vmax.f32 %v2856, 0.0
        %v2871 = vmax.f32 %v2859, 0.0
        %v2872 = vmax.f32 %v2864, 0.0
        %v2873 = vmax.f32 %v2867, 0.0
        %v2874 = vpack.c.bf16 %v2871, %v2870
        %v2875 = vpack.c.bf16 %v2873, %v2872
        %v2876 = vld [vmem:[%s11] sm:$0xf]
        %v2877 = vld [vmem:[%s11 + $0x4] sm:$0xf]
        %v2878 = vld [vmem:[%s11 + $0x8] sm:$0xf]
        %v2879 = vld [vmem:[%s11 + $0xc] sm:$0xf]
        %v2880 = vld [vmem:[%s11 + $0x10] sm:$0xf]
        %v2881 = vld [vmem:[%s11 + $0x14] sm:$0xf]
        %v2882 = vld [vmem:[%s11 + $0x18] sm:$0xf]
        %v2883 = vld [vmem:[%s11 + $0x1c] sm:$0xf]
        %v2884 = vld [vmem:[%s12] sm:$0x1]
        %v2886 = vlaneseq
        %v2887 = vshrl.u32 %v2886, 7
        %v2888 = vsub.s32 0, %v2887
        %v2889 = vrot.slane %v2884, %v2888
        %v2899 = vunpack.c.l.b16 %v2876
        %v2900 = vunpack.c.l.b16 %v2877
        %v2901 = vunpack.c.l.b16 %v2878
        %v2902 = vunpack.c.l.b16 %v2879
        %v2903 = vunpack.c.l.b16 %v2880
        %v2904 = vunpack.c.l.b16 %v2881
        %v2905 = vunpack.c.l.b16 %v2882
        %v2906 = vunpack.c.l.b16 %v2883
        %v2907 = vpack.c.b16 %v2900, %v2899
        %v2908 = vpack.c.b16 %v2902, %v2901
        %v2909 = vpack.c.b16 %v2904, %v2903
        %v2910 = vpack.c.b16 %v2906, %v2905
        %vm2915 = vcmask 523264
        %v2917 = vsel %vm2915, %v2874, 0
        %v2920 = vsel %vm2915, %v2875, 0
        %2922 = vmatprep.subr.bf16.mxu0 0
        %2923 = vmatpush1.bf16.msra.mxu0 %v2907
        %2924 = vmatprep.subr.bf16.mxu0 0
        %2925 = vmatpush1.bf16.msra.mxu0 %v2908
        %2926 = vmatprep.subr.bf16.mxu0 0
        %2927 = vmatpush1.bf16.msra.mxu0 %v2909
        %2928 = vmatprep.subr.bf16.mxu0 0
        %2929 = vmatpush1.bf16.msra.mxu0 %v2910
        %2930 = vmatprep.subr.bf16.mxu0 0
        %2931 = vmatpush1.bf16.msra.mxu0 0
        %2932 = vmatprep.subr.bf16.mxu0 0
        %2933 = vmatpush1.bf16.msra.mxu0 0
        %2934 = vmatprep.subr.bf16.mxu0 0
        %2935 = vmatpush1.bf16.msra.mxu0 0
        %2936 = vmatprep.subr.bf16.mxu0 0
        %2937 = vmatpush1.bf16.msra.mxu0 0
        %2938 = vmatprep.subr.bf16.mxu0 0
        %2939 = vmatpush1.bf16.msra.mxu0 0
        %2940 = vmatprep.subr.bf16.mxu0 0
        %2941 = vmatpush1.bf16.msra.mxu0 0
        %2942 = vmatprep.subr.bf16.mxu0 0
        %2943 = vmatpush1.bf16.msra.mxu0 0
        %2944 = vmatprep.subr.bf16.mxu0 0
        %2945 = vmatpush1.bf16.msra.mxu0 0
        %2946 = vmatprep.subr.bf16.mxu0 0
        %2947 = vmatpush1.bf16.msra.mxu0 0
        %2948 = vmatprep.subr.bf16.mxu0 0
        %2949 = vmatpush1.bf16.msra.mxu0 0
        %2950 = vmatprep.subr.bf16.mxu0 0
        %2951 = vmatpush1.bf16.msra.mxu0 0
        %2952 = vmatprep.subr.bf16.mxu0 0
        %2953 = vmatpush1.bf16.msra.mxu0 0
        %2954 = vmatprep.mubr.bf16.mxu0 0
        %2955 = vmatmul.mubr.bf16.gmra.mrb[0].mxu0 %v2917
        %v2956 = vpop.f32.mrb[0].mxu0
        %v2957 = vadd.f32 %v2889, %v2956
        %v2958 = vpop.f32.mrb[0].mxu0
        %v2959 = vpop.f32.mrb[0].mxu0
        %v2960 = vadd.f32 %v2889, %v2959
        %v2961 = vpop.f32.mrb[0].mxu0
        %2962 = vmatprep.mubr.bf16.mxu0 0
        %2963 = vmatmul.mubr.bf16.gmra.mrb[0].mxu0 %v2920
        %v2964 = vpop.f32.mrb[0].mxu0
        %v2965 = vadd.f32 %v2889, %v2964
        %v2966 = vpop.f32.mrb[0].mxu0
        %v2967 = vpop.f32.mrb[0].mxu0
        %v2968 = vadd.f32 %v2889, %v2967
        %v2969 = vpop.f32.mrb[0].mxu0
        %2970 = vdwg.mxu0
        %v2971 = vadd.f32 %v2712, %v2957
        %v2972 = vadd.f32 %v2713, %v2960
        %v2973 = vadd.f32 %v2714, %v2965
        %v2974 = vadd.f32 %v2715, %v2968
        %2975 = vst.msk [vmem:[%s480] sm:$0xff] %vm490, %v2971
        %2976 = vst.msk [vmem:[%s480 + $0x8] sm:$0xff] %vm490, %v2972
        %2977 = vst.msk [vmem:[%s480 + $0x10] sm:$0xff] %vm490, %v2973
        %2978 = vst.msk [vmem:[%s480 + $0x18] sm:$0xff] %vm490, %v2974
        %v2979 = vadd.f32 %v1645, %v1649
        %v2980 = vadd.f32 %v1646, %v1650
        %v2981 = vadd.f32 %v1647, %v1651
        %v2982 = vadd.f32 %v1648, %v1652
        %v2983 = vadd.f32 %v2979, %v1653
        %v2984 = vadd.f32 %v2980, %v1654
        %v2985 = vadd.f32 %v2981, %v1655
        %v2986 = vadd.f32 %v2982, %v1656
        %v2987 = vadd.f32 %v2983, %v1657
        %v2988 = vadd.f32 %v2984, %v1658
        %v2989 = vadd.f32 %v2985, %v1659
        %v2990 = vadd.f32 %v2986, %v1660
        %v2991 = vmul.f32 %v2987, 0.25
        %v2992 = vmul.f32 %v2988, 0.25
        %v2993 = vmul.f32 %v2989, 0.25
        %v2994 = vmul.f32 %v2990, 0.25
        %2995 = vst.msk [vmem:[%s469] sm:$0xff] %vm703, %v2991
        %2996 = vst.msk [vmem:[%s469 + $0x8] sm:$0xff] %vm703, %v2992
        %2997 = vst.msk [vmem:[%s469 + $0x10] sm:$0xff] %vm703, %v2993
        %2998 = vst.msk [vmem:[%s469 + $0x18] sm:$0xff] %vm703, %v2994
        %s2999 = smul.u32 4, %s29
        %p3000 = scmp.lt.s32.totalorder %s2999, 7
        %s3001 = scalar_select %p3000, %s2999, 7
        %s3002 = smul.addr %s3001, 8
        %s3003 = scalar_lea.vmem %s13, %s3002
        %s3004 = sand.u32 %s341, 1
        %s3005 = scalar_lea.sflag [#allocation3], %s3004
        %s3006 = sand.u32 %s341, 1
        %s3007 = smul.addr %s3006, 32
        %s3008 = scalar_lea.vmem [#allocation2], %s3007
        // Predicated region
        $region73: #{tpu_custom_call.1} parent=71 // pred_check
          %p3009 = pneg %p325
        $region74: #{tpu_custom_call.1} parent=71 // pred_check_branch
          %3011 = sbr.rel (%p3009) target = $region76
        $region75: #{tpu_custom_call.1} parent=71 // pred_region
          %s3012 = smul.u32 4, %s29
        $region76: #{tpu_custom_call.1} parent=71 // pred_fallthru
          _
        // Predicated region
        $region77: #{tpu_custom_call.1} parent=71 // pred_check
          %p3013 = pneg %p351
        $region78: #{tpu_custom_call.1} parent=71 // pred_check_branch
          %3015 = sbr.rel (%p3013) target = $region80
        $region79: #{tpu_custom_call.1} parent=71 // pred_region
          %s3016 = smul.u32 4, %s29
          %s3018 = ssub.s32 512, 512
          %3019 = vsyncadd %s3005, %s3018
          %s3020 = smul.addr %s3016, 128
          %s3021 = scalar_lea.hbm %s14, %s3020
          %s3022 = sshll.u32 %s3008, 4
          %s3023 = int_to_ptr.vmem [resolvable:$true] %s3022
          %3028 = dma.vmem_to_hbm [thread:$0]  %s3023, 512, %s3021, %s3005, 128, 128, 8
        $region80: #{tpu_custom_call.1} parent=71 // pred_fallthru
          _
      $region72: #{tpu_custom_call.1} parent=5 // pred_fallthru
        _
      %p3029 = scmp.le.s32.totalorder 2, %s24
      // Predicated region
      $region81: #{tpu_custom_call.1} parent=5 // pred_check
        %p3030 = pneg %p3029
      $region82: #{tpu_custom_call.1} parent=5 // pred_check_branch
        %3032 = sbr.rel (%p3030) target = $region84
      $region83: #{tpu_custom_call.1} parent=5 // pred_region
        %s3033 = ssub.s32 %s24, 2
        // Predicated region
        $region85: #{tpu_custom_call.1} parent=83 // pred_check
          %p3034 = pneg %p331
        $region86: #{tpu_custom_call.1} parent=83 // pred_check_branch
          %3036 = sbr.rel (%p3034) target = $region88
        $region87: #{tpu_custom_call.1} parent=83 // pred_region
          %s3037 = smul.u32 4, %s30
          %p3038 = scmp.lt.s32.totalorder %s3037, 7
          %s3039 = scalar_select %p3038, %s3037, 7
          %s3040 = smul.addr %s3039, 8
          %s3041 = scalar_lea.vmem %s13, %s3040
        $region88: #{tpu_custom_call.1} parent=83 // pred_fallthru
          _
        // Predicated region
        $region89: #{tpu_custom_call.1} parent=83 // pred_check
          %p3042 = pneg %p357
        $region90: #{tpu_custom_call.1} parent=83 // pred_check_branch
          %3044 = sbr.rel (%p3042) target = $region92
        $region91: #{tpu_custom_call.1} parent=83 // pred_region
          %s3045 = sand.u32 %s342, 1
          %s3046 = scalar_lea.sflag [#allocation3], %s3045
          %s3047 = sand.u32 %s342, 1
          %s3048 = smul.addr %s3047, 32
          %s3049 = scalar_lea.vmem [#allocation2], %s3048
          %3050 = dma.done %s3046, 512
        $region92: #{tpu_custom_call.1} parent=83 // pred_fallthru
          _
      $region84: #{tpu_custom_call.1} parent=5 // pred_fallthru
        _
    $region6: #{tpu_custom_call.1} parent=1 // loop_footer
      %s28 = sadd.s32 1, %s24
    $region7: #{tpu_custom_call.1} parent=1 // loop_footer_branch
      %23 = sbr.rel target = $region3
    $region8: #{tpu_custom_call.1} parent=1 // loop_exit
      _
    %3051 = vsyncpa [#allocation3], 1
    %s3052 = scalar_lea.sflag [#allocation3], 1
    %3053 = vsyncpa %s3052, 1

</llo_original>
